<compile_context>
chip_gen: v7x
topology: tpu7x:2x2x1
jax: 0.10.0
libtpu: 0.0.40
codegen_flags: <defaults>
</compile_context>

<pallas_src>
import functools

import jax
import jax.numpy as jnp
from jax import lax
from jax.experimental import pallas as pl
from jax.experimental.pallas import tpu as pltpu


def _mamba_block_kernel(
    x_ref, w_in_ref, wdt_ref, dtb_ref, cw_ref, cb_ref,
    alog_ref, dval_ref, rmsw_ref, wout_ref, gamma_ref, beta_ref,
    o_ref,
    convbuf_ref, state_ref, yacc_ref,
    *, C, K, nheads, headdim, d_inner, d_state):
    f32 = jnp.float32
    bf16 = jnp.bfloat16
    d_xbc = d_inner + 2 * d_state
    PAD = 8                              # context rows kept for the causal conv
    cidx = pl.program_id(1)              # sequence-chunk index ('arbitrary')

    x = x_ref[0]                         # (C, D) f32

    # ---- init carried scratch at the first chunk of every batch row --------
    @pl.when(cidx == 0)
    def _():
        convbuf_ref[0:PAD, :] = jnp.zeros((PAD, d_xbc), f32)
        state_ref[...] = jnp.zeros_like(state_ref)

    # ---- fused in_proj: [z | x | B | C] in one bf16 MXU matmul (f32 accum) --
    zxbc = jnp.dot(x.astype(bf16), w_in_ref[...], preferred_element_type=f32)
    z = zxbc[:, :d_inner]                # (C, d_inner)
    xbc_pre = zxbc[:, d_inner:]          # (C, d_xbc)

    # dt path stays f32 (it feeds exp of cumulative sums).
    dt = jnp.dot(x, wdt_ref[...], preferred_element_type=f32) + dtb_ref[...]
    dt = jnp.where(dt > 20.0, dt, jnp.log1p(jnp.exp(jnp.minimum(dt, 20.0))))

    # ---- causal depthwise conv1d (kernel K) + SiLU: K shifted VPU FMAs ------
    # conv window scratch: rows [0:PAD] hold the previous chunk's last PAD
    # pre-activation rows (zeros at chunk 0), rows [PAD:PAD+C] this chunk.
    convbuf_ref[PAD:PAD + C, :] = xbc_pre
    acc = cb_ref[...]                    # (1, d_xbc) conv bias
    for k in range(K):
        s0 = PAD - (K - 1) + k
        acc = acc + convbuf_ref[s0:s0 + C, :] * cw_ref[k:k + 1, :]
    xbc = acc * jax.nn.sigmoid(acc)      # SiLU, (C, d_xbc)
    # save context (this chunk's last PAD pre-activation rows) for next chunk
    ctx = convbuf_ref[C:C + PAD, :]
    convbuf_ref[0:PAD, :] = ctx

    x_conv = xbc[:, :d_inner]                       # (C, d_inner)
    b_conv = xbc[:, d_inner:d_inner + d_state]      # (C, d_state)
    c_conv = xbc[:, d_inner + d_state:]             # (C, d_state)

    # ---- SSD: chunked scan with carried per-head state (f32 internals) -----
    A = -jnp.exp(alog_ref[...])                     # (1, nheads)
    dtA = dt * A                                    # (C, nheads)

    r = lax.broadcasted_iota(jnp.int32, (C, C), 0)
    c2 = lax.broadcasted_iota(jnp.int32, (C, C), 1)
    causal = r >= c2
    causal_f = causal.astype(f32)
    upper_f = (r <= c2).astype(f32)

    # all-heads inclusive cumulative sums from two small matmuls:
    #   cs[t, h]  = sum_{u <= t} dtA[u, h]
    #   cs_t[h,s] = cs[s, h]   (lane-major twin; no per-head L^3 matmuls)
    cs = jnp.dot(causal_f, dtA, preferred_element_type=f32)          # (C, nh)
    cs_t = lax.dot_general(dtA, upper_f, (((0,), (0,)), ((), ())),
                           preferred_element_type=f32)               # (nh, C)
    cs_end = jnp.sum(dtA, axis=0, keepdims=True)                     # (1, nh)

    # G[t, s] = C_t . B_s (ngroups=1: shared across heads)
    G = lax.dot_general(c_conv, b_conv, (((1,), (1,)), ((), ())),
                        preferred_element_type=f32)                  # (C, C)

    dval = dval_ref[...]                                             # (1, nh)
    for h in range(nheads):
        cs_h = cs[:, h:h + 1]                                        # (C, 1)
        decay = jnp.exp(jnp.where(causal, cs_h - cs_t[h:h + 1, :], -1e30))
        xh = x_conv[:, h * headdim:(h + 1) * headdim]                # (C, P)
        xdt = dt[:, h:h + 1] * xh                                    # (C, P)
        st = state_ref[h]                                            # (N, P)
        # intra-chunk + inter-chunk (carried state) + D skip
        yh = jnp.dot(G * decay, xdt, preferred_element_type=f32)
        yh = yh + jnp.exp(cs_h) * jnp.dot(c_conv, st,
                                          preferred_element_type=f32)
        yh = yh + dval[:, h:h + 1] * xh
        yacc_ref[:, h * headdim:(h + 1) * headdim] = yh
        # state update:  H <- exp(cs_end) H + sum_s exp(cs_end - cs_s) dt_s B_s x_s^T
        b_scaled = jnp.exp(cs_end[:, h:h + 1] - cs_h) * b_conv       # (C, N)
        state_ref[h] = (jnp.exp(cs_end[:, h:h + 1]) * st
                        + lax.dot_general(b_scaled, xdt,
                                          (((0,), (0,)), ((), ())),
                                          preferred_element_type=f32))

    y = yacc_ref[...]                                                # (C, d_inner)

    # ---- gated RMSNorm (RMSNormGated, norm_before_gate=False) --------------
    yg = y * (z * jax.nn.sigmoid(z))
    yn = yg * lax.rsqrt(jnp.mean(yg * yg, axis=-1, keepdims=True) + 1e-5)
    yn = yn * rmsw_ref[...]

    # ---- out_proj (bf16 MXU) + residual + LayerNorm -------------------------
    out = jnp.dot(yn.astype(bf16), wout_ref[...], preferred_element_type=f32)
    res = out + x
    mu = jnp.mean(res, axis=-1, keepdims=True)
    var = jnp.mean((res - mu) * (res - mu), axis=-1, keepdims=True)
    ln = (res - mu) * lax.rsqrt(var + 1e-5) * gamma_ref[...] + beta_ref[...]
    # TODO(synk): nn.Dropout is stochastic; implemented as eval-mode identity.
    o_ref[0] = ln.astype(o_ref.dtype)


def mamba_block_forward(x, params, dims, chunk=8):
    B, L, D = x.shape
    K = dims["d_conv"]
    nheads = dims["nheads"]
    headdim = dims["headdim"]
    d_inner = dims["d_inner"]
    d_state = dims["d_state"]
    d_xbc = d_inner + 2 * d_state

    assert d_inner == nheads * headdim
    assert L % chunk == 0, "seq_len must be a multiple of the chunk size"
    assert chunk >= 8 and chunk % 8 == 0, "chunk must be a multiple of 8"
    assert D % 128 == 0, "model_dim must be lane-dense (multiple of 128)"
    assert K - 1 <= 8
    n_chunks = L // chunk

    p = params
    bf16 = jnp.bfloat16
    # fused in_proj weight [z | x | B | C]; bf16 operands, f32 accumulation.
    w_in = jnp.concatenate([p["wz"], p["wx"], p["wb"], p["wc"]], axis=1).astype(bf16)
    cw = jnp.concatenate([p["cwx"], p["cwb"], p["cwc"]], axis=1)   # (K, d_xbc)
    cb = jnp.concatenate([p["cbx"], p["cbb"], p["cbc"]], axis=1)   # (1, d_xbc)
    wout = p["wout"].astype(bf16)

    param_list = [w_in, p["wdt"], p["dt_bias"], cw, cb,
                  p["a_log"], p["dval"], p["rms_w"], wout, p["gamma"], p["beta"]]

    kernel = functools.partial(
        _mamba_block_kernel, C=chunk, K=K, nheads=nheads, headdim=headdim,
        d_inner=d_inner, d_state=d_state)

    in_specs = [pl.BlockSpec((1, chunk, D), lambda b, c: (b, c, 0))]
    for w in param_list:
        # constant index_map -> Pallas keeps the weight resident (no re-DMA).
        in_specs.append(pl.BlockSpec(w.shape, lambda b, c: (0, 0)))

    return pl.pallas_call(
        kernel,
        out_shape=jax.ShapeDtypeStruct((B, L, D), x.dtype),
        grid=(B, n_chunks),
        in_specs=in_specs,
        out_specs=pl.BlockSpec((1, chunk, D), lambda b, c: (b, c, 0)),
        scratch_shapes=[
            pltpu.VMEM((8 + chunk, d_xbc), jnp.float32),              # conv window
            pltpu.VMEM((nheads, d_state, headdim), jnp.float32),      # SSM state
            pltpu.VMEM((chunk, d_inner), jnp.float32),                # per-chunk y
        ],
        compiler_params=pltpu.CompilerParams(
            dimension_semantics=("parallel", "arbitrary"),
            vmem_limit_bytes=48 * 1024 * 1024),
    )(x, *param_list)


def init_params(key, d_model):
    d_state, d_conv, expand, headdim, ngroups = 128, 4, 2, 64, 1
    d_inner = expand * d_model
    assert d_inner % headdim == 0
    nheads = d_inner // headdim
    ks = jax.random.split(key, 12)

    def n(k, shape, scale):
        return jax.random.normal(k, shape, jnp.float32) * scale

    params = dict(
        wz=n(ks[0], (d_model, d_inner), d_model ** -0.5),
        wx=n(ks[1], (d_model, d_inner), d_model ** -0.5),
        wb=n(ks[2], (d_model, ngroups * d_state), d_model ** -0.5),
        wc=n(ks[3], (d_model, ngroups * d_state), d_model ** -0.5),
        wdt=n(ks[4], (d_model, nheads), d_model ** -0.5),
        dt_bias=jnp.full((1, nheads), float(jnp.log(jnp.expm1(0.25))), jnp.float32),
        cwx=n(ks[5], (d_conv, d_inner), d_conv ** -0.5),
        cbx=n(ks[6], (1, d_inner), 0.1),
        cwb=n(ks[7], (d_conv, ngroups * d_state), d_conv ** -0.5),
        cbb=n(ks[8], (1, ngroups * d_state), 0.1),
        cwc=n(ks[9], (d_conv, ngroups * d_state), d_conv ** -0.5),
        cbc=n(ks[10], (1, ngroups * d_state), 0.1),
        a_log=jnp.log(jnp.arange(1, nheads + 1, dtype=jnp.float32)).reshape(1, nheads),
        dval=jnp.ones((1, nheads), jnp.float32),
        rms_w=jnp.ones((1, d_inner), jnp.float32),
        wout=n(ks[11], (d_inner, d_model), d_inner ** -0.5),
        gamma=jnp.ones((1, d_model), jnp.float32),
        beta=jnp.zeros((1, d_model), jnp.float32),
    )
    dims = dict(d_inner=d_inner, d_state=d_state, d_conv=d_conv,
                nheads=nheads, headdim=headdim)
    return params, dims


def ref_forward(x, p, dims):
    """Pure-JAX reference mirroring Mamba2 + residual + LayerNorm semantics.

    Uses the same mixed-precision policy as the kernel: bf16 operands + f32
    accumulation for in_proj / out_proj, f32 everywhere else.
    """
    L = x.shape[1]
    K, nheads, headdim = dims["d_conv"], dims["nheads"], dims["headdim"]
    f32, bf16 = jnp.float32, jnp.bfloat16

    def mm(a, w):
        return jnp.dot(a.astype(bf16), w.astype(bf16), preferred_element_type=f32)

    def one(xb):
        z = mm(xb, p["wz"])
        xp, Bp, Cp = mm(xb, p["wx"]), mm(xb, p["wb"]), mm(xb, p["wc"])
        dt = jax.nn.softplus(xb @ p["wdt"] + p["dt_bias"])

        def conv(pre, w, b):
            pad = jnp.concatenate([jnp.zeros((K - 1, pre.shape[1])), pre], axis=0)
            out = sum(pad[k:k + L] * w[k] for k in range(K)) + b
            return out * jax.nn.sigmoid(out)

        xc = conv(xp, p["cwx"], p["cbx"])
        Bc = conv(Bp, p["cwb"], p["cbb"])
        Cc = conv(Cp, p["cwc"], p["cbc"])
        A = -jnp.exp(p["a_log"])
        G = Cc @ Bc.T
        mask = jnp.tril(jnp.ones((L, L), bool))
        ys = []
        for h in range(nheads):
            dth = dt[:, h]
            cs = jnp.cumsum(dth * A[0, h])
            decay = jnp.exp(jnp.where(mask, cs[:, None] - cs[None, :], -1e30))
            xh = xc[:, h * headdim:(h + 1) * headdim]
            ys.append((G * decay) @ (dth[:, None] * xh) + p["dval"][0, h] * xh)
        y = jnp.concatenate(ys, axis=-1)
        yg = y * (z * jax.nn.sigmoid(z))
        yn = yg * lax.rsqrt(jnp.mean(yg * yg, -1, keepdims=True) + 1e-5) * p["rms_w"]
        res = mm(yn, p["wout"]) + xb
        mu = res.mean(-1, keepdims=True)
        var = ((res - mu) ** 2).mean(-1, keepdims=True)
        return (res - mu) * lax.rsqrt(var + 1e-5) * p["gamma"] + p["beta"]

    with jax.default_matmul_precision("highest"):
        return jnp.stack([one(x[b]) for b in range(x.shape[0])])


if __name__ == "__main__":
    batch, seq_len, model_dim = 2, 16, 128   # 2 chunks of 8 -> exercises the carry
    key = jax.random.PRNGKey(0)
    k_x, k_p = jax.random.split(key)
    x = jax.random.normal(k_x, (batch, seq_len, model_dim), jnp.float32)
    params, dims = init_params(k_p, model_dim)

    out = mamba_block_forward(x, params, dims, chunk=8)
    out = jax.block_until_ready(out)

    ref = ref_forward(x, params, dims)
    assert out.shape == (batch, seq_len, model_dim)
    assert bool(jnp.all(jnp.isfinite(out)))
    err = float(jnp.max(jnp.abs(out - ref)))
    assert bool(jnp.allclose(out, ref, rtol=2e-2, atol=2e-2)), f"mismatch {err}"
    print("KERNEL_OK")
</pallas_src>

<mosaic_0001>
module attributes {stable_mosaic.version = 11 : i64} {
  func.func @_mamba_block_kernel(%arg0: i32, %arg1: i32, %arg2: memref<1x8x128xf32, #tpu.memory_space<vmem>>, %arg3: memref<128x768xbf16, #tpu.memory_space<vmem>>, %arg4: memref<128x4xf32, #tpu.memory_space<vmem>>, %arg5: memref<1x4xf32, #tpu.memory_space<vmem>>, %arg6: memref<4x512xf32, #tpu.memory_space<vmem>>, %arg7: memref<1x512xf32, #tpu.memory_space<vmem>>, %arg8: memref<1x4xf32, #tpu.memory_space<vmem>>, %arg9: memref<1x4xf32, #tpu.memory_space<vmem>>, %arg10: memref<1x256xf32, #tpu.memory_space<vmem>>, %arg11: memref<256x128xbf16, #tpu.memory_space<vmem>>, %arg12: memref<1x128xf32, #tpu.memory_space<vmem>>, %arg13: memref<1x128xf32, #tpu.memory_space<vmem>>, %arg14: memref<1x8x128xf32, #tpu.memory_space<vmem>>, %arg15: memref<16x512xf32, #tpu.memory_space<vmem>>, %arg16: memref<4x128x64xf32, #tpu.memory_space<vmem>>, %arg17: memref<8x256xf32, #tpu.memory_space<vmem>>) attributes {dimension_semantics = [#tpu.dimension_semantics<parallel>, #tpu.dimension_semantics<arbitrary>], iteration_bounds = array<i64: 2, 2>, scalar_prefetch = 0 : i64, scratch_operands = 3 : i64, tpu.core_type = #tpu.core_type<tc>, window_params = [{transform_indices = @transform_0, window_bounds = array<i64: 1, 8, 128>}, {pipeline_mode = #tpu.pipeline_mode<synchronous>, transform_indices = @transform_1, window_bounds = array<i64: 128, 768>}, {pipeline_mode = #tpu.pipeline_mode<synchronous>, transform_indices = @transform_2, window_bounds = array<i64: 128, 4>}, {pipeline_mode = #tpu.pipeline_mode<synchronous>, transform_indices = @transform_3, window_bounds = array<i64: 1, 4>}, {pipeline_mode = #tpu.pipeline_mode<synchronous>, transform_indices = @transform_4, window_bounds = array<i64: 4, 512>}, {pipeline_mode = #tpu.pipeline_mode<synchronous>, transform_indices = @transform_5, window_bounds = array<i64: 1, 512>}, {pipeline_mode = #tpu.pipeline_mode<synchronous>, transform_indices = @transform_6, window_bounds = array<i64: 1, 4>}, {pipeline_mode = #tpu.pipeline_mode<synchronous>, transform_indices = @transform_7, window_bounds = array<i64: 1, 4>}, {pipeline_mode = #tpu.pipeline_mode<synchronous>, transform_indices = @transform_8, window_bounds = array<i64: 1, 256>}, {pipeline_mode = #tpu.pipeline_mode<synchronous>, transform_indices = @transform_9, window_bounds = array<i64: 256, 128>}, {pipeline_mode = #tpu.pipeline_mode<synchronous>, transform_indices = @transform_10, window_bounds = array<i64: 1, 128>}, {pipeline_mode = #tpu.pipeline_mode<synchronous>, transform_indices = @transform_11, window_bounds = array<i64: 1, 128>}, {transform_indices = @transform_12, window_bounds = array<i64: 1, 8, 128>}]} {
    %c0 = arith.constant 0 : index
    %c0_0 = arith.constant 0 : index
    %c0_1 = arith.constant 0 : index
    %0 = vector.load %arg2[%c0, %c0_0, %c0_1] : memref<1x8x128xf32, #tpu.memory_space<vmem>>, vector<1x8x128xf32>
    %1 = vector.shape_cast %0 : vector<1x8x128xf32> to vector<8x128xf32>
    %c0_i32 = arith.constant 0 : i32
    %2 = arith.cmpi eq, %arg1, %c0_i32 : i32
    %3 = arith.extui %2 : i1 to i32
    %c0_i32_2 = arith.constant 0 : i32
    %4 = arith.cmpi ne, %3, %c0_i32_2 : i32
    scf.if %4 {
      %cst_107 = arith.constant 0.000000e+00 : f32
      %294 = vector.broadcast %cst_107 : f32 to vector<8x512xf32>
      %c0_108 = arith.constant 0 : index
      %c0_109 = arith.constant 0 : index
      %295 = vector.load %arg15[%c0_108, %c0_109] : memref<16x512xf32, #tpu.memory_space<vmem>>, vector<8x512xf32>
      tpu.vector_store %arg15[%c0_108, %c0_109], %294 {strides = array<i32>} : memref<16x512xf32, #tpu.memory_space<vmem>>, vector<8x512xf32>,
      %cst_110 = arith.constant 0.000000e+00 : f32
      %296 = vector.broadcast %cst_110 : f32 to vector<4x128x64xf32>
      %c0_111 = arith.constant 0 : index
      %c0_112 = arith.constant 0 : index
      %c0_113 = arith.constant 0 : index
      %297 = vector.load %arg16[%c0_111, %c0_112, %c0_113] : memref<4x128x64xf32, #tpu.memory_space<vmem>>, vector<4x128x64xf32>
      tpu.vector_store %arg16[%c0_111, %c0_112, %c0_113], %296 {strides = array<i32>} : memref<4x128x64xf32, #tpu.memory_space<vmem>>, vector<4x128x64xf32>,
    } else {
    }
    %5 = arith.truncf %1 : vector<8x128xf32> to vector<8x128xbf16>
    %c0_3 = arith.constant 0 : index
    %c0_4 = arith.constant 0 : index
    %6 = vector.load %arg3[%c0_3, %c0_4] : memref<128x768xbf16, #tpu.memory_space<vmem>>, vector<128x768xbf16>
    %cst = arith.constant dense<0.000000e+00> : vector<8x768xf32>
    %7 = tpu.matmul %5, %6, %cst {dimension_numbers = #tpu.dot_dimension_numbers<[1], [0], [0], [1], [0, 0, 1, 1], [], []>} : vector<8x128xbf16>, vector<128x768xbf16>, vector<8x768xf32> -> vector<8x768xf32>
    %8 = vector.extract_strided_slice %7 {offsets = [0, 0], sizes = [8, 256], strides = [1, 1]} : vector<8x768xf32> to vector<8x256xf32>
    %9 = vector.extract_strided_slice %7 {offsets = [0, 256], sizes = [8, 512], strides = [1, 1]} : vector<8x768xf32> to vector<8x512xf32>
    %c0_5 = arith.constant 0 : index
    %c0_6 = arith.constant 0 : index
    %10 = vector.load %arg4[%c0_5, %c0_6] : memref<128x4xf32, #tpu.memory_space<vmem>>, vector<128x4xf32>
    %cst_7 = arith.constant dense<0.000000e+00> : vector<8x4xf32>
    %11 = tpu.matmul %1, %10, %cst_7 {dimension_numbers = #tpu.dot_dimension_numbers<[1], [0], [0], [1], [0, 0, 1, 1], [], []>} : vector<8x128xf32>, vector<128x4xf32>, vector<8x4xf32> -> vector<8x4xf32>
    %c0_8 = arith.constant 0 : index
    %c0_9 = arith.constant 0 : index
    %12 = vector.load %arg5[%c0_8, %c0_9] : memref<1x4xf32, #tpu.memory_space<vmem>>, vector<1x4xf32>
    %13 = vector.broadcast %12 : vector<1x4xf32> to vector<8x4xf32>
    %14 = arith.addf %11, %13 : vector<8x4xf32>
    %cst_10 = arith.constant 2.000000e+01 : f32
    %15 = vector.broadcast %cst_10 : f32 to vector<8x4xf32>
    %16 = arith.cmpf ogt, %14, %15 : vector<8x4xf32>
    %cst_11 = arith.constant 2.000000e+01 : f32
    %17 = vector.broadcast %cst_11 : f32 to vector<8x4xf32>
    %18 = arith.minimumf %14, %17 : vector<8x4xf32>
    %19 = math.exp %18 : vector<8x4xf32>
    %20 = math.log1p %19 : vector<8x4xf32>
    %21 = arith.select %16, %14, %20 : vector<8x4xi1>, vector<8x4xf32>
    %c8 = arith.constant 8 : index
    %c0_12 = arith.constant 0 : index
    %22 = vector.load %arg15[%c8, %c0_12] : memref<16x512xf32, #tpu.memory_space<vmem>>, vector<8x512xf32>
    tpu.vector_store %arg15[%c8, %c0_12], %9 {strides = array<i32>} : memref<16x512xf32, #tpu.memory_space<vmem>>, vector<8x512xf32>,
    %c0_13 = arith.constant 0 : index
    %c0_14 = arith.constant 0 : index
    %23 = vector.load %arg7[%c0_13, %c0_14] : memref<1x512xf32, #tpu.memory_space<vmem>>, vector<1x512xf32>
    %c5 = arith.constant 5 : index
    %c0_15 = arith.constant 0 : index
    %24 = vector.load %arg15[%c5, %c0_15] : memref<16x512xf32, #tpu.memory_space<vmem>>, vector<8x512xf32>
    %c0_16 = arith.constant 0 : index
    %c0_17 = arith.constant 0 : index
    %25 = vector.load %arg6[%c0_16, %c0_17] : memref<4x512xf32, #tpu.memory_space<vmem>>, vector<1x512xf32>
    %26 = vector.broadcast %25 : vector<1x512xf32> to vector<8x512xf32>
    %27 = arith.mulf %24, %26 : vector<8x512xf32>
    %28 = vector.broadcast %23 : vector<1x512xf32> to vector<8x512xf32>
    %29 = arith.addf %28, %27 : vector<8x512xf32>
    %c6 = arith.constant 6 : index
    %c0_18 = arith.constant 0 : index
    %30 = vector.load %arg15[%c6, %c0_18] : memref<16x512xf32, #tpu.memory_space<vmem>>, vector<8x512xf32>
    %c1 = arith.constant 1 : index
    %c0_19 = arith.constant 0 : index
    %31 = vector.load %arg6[%c1, %c0_19] : memref<4x512xf32, #tpu.memory_space<vmem>>, vector<1x512xf32>
    %32 = vector.broadcast %31 : vector<1x512xf32> to vector<8x512xf32>
    %33 = arith.mulf %30, %32 : vector<8x512xf32>
    %34 = arith.addf %29, %33 : vector<8x512xf32>
    %c7 = arith.constant 7 : index
    %c0_20 = arith.constant 0 : index
    %35 = vector.load %arg15[%c7, %c0_20] : memref<16x512xf32, #tpu.memory_space<vmem>>, vector<8x512xf32>
    %c2 = arith.constant 2 : index
    %c0_21 = arith.constant 0 : index
    %36 = vector.load %arg6[%c2, %c0_21] : memref<4x512xf32, #tpu.memory_space<vmem>>, vector<1x512xf32>
    %37 = vector.broadcast %36 : vector<1x512xf32> to vector<8x512xf32>
    %38 = arith.mulf %35, %37 : vector<8x512xf32>
    %39 = arith.addf %34, %38 : vector<8x512xf32>
    %c8_22 = arith.constant 8 : index
    %c0_23 = arith.constant 0 : index
    %40 = vector.load %arg15[%c8_22, %c0_23] : memref<16x512xf32, #tpu.memory_space<vmem>>, vector<8x512xf32>
    %c3 = arith.constant 3 : index
    %c0_24 = arith.constant 0 : index
    %41 = vector.load %arg6[%c3, %c0_24] : memref<4x512xf32, #tpu.memory_space<vmem>>, vector<1x512xf32>
    %42 = vector.broadcast %41 : vector<1x512xf32> to vector<8x512xf32>
    %43 = arith.mulf %40, %42 : vector<8x512xf32>
    %44 = arith.addf %39, %43 : vector<8x512xf32>
    %45 = arith.negf %44 : vector<8x512xf32>
    %46 = math.exp %45 : vector<8x512xf32>
    %cst_25 = arith.constant 1.000000e+00 : f32
    %47 = vector.broadcast %cst_25 : f32 to vector<8x512xf32>
    %48 = arith.addf %47, %46 : vector<8x512xf32>
    %49 = arith.divf %47, %48 : vector<8x512xf32>
    %50 = arith.mulf %44, %49 : vector<8x512xf32>
    %c8_26 = arith.constant 8 : index
    %c0_27 = arith.constant 0 : index
    %51 = vector.load %arg15[%c8_26, %c0_27] : memref<16x512xf32, #tpu.memory_space<vmem>>, vector<8x512xf32>
    %c0_28 = arith.constant 0 : index
    %c0_29 = arith.constant 0 : index
    %52 = vector.load %arg15[%c0_28, %c0_29] : memref<16x512xf32, #tpu.memory_space<vmem>>, vector<8x512xf32>
    tpu.vector_store %arg15[%c0_28, %c0_29], %51 {strides = array<i32>} : memref<16x512xf32, #tpu.memory_space<vmem>>, vector<8x512xf32>,
    %53 = vector.extract_strided_slice %50 {offsets = [0, 0], sizes = [8, 256], strides = [1, 1]} : vector<8x512xf32> to vector<8x256xf32>
    %54 = vector.extract_strided_slice %50 {offsets = [0, 256], sizes = [8, 128], strides = [1, 1]} : vector<8x512xf32> to vector<8x128xf32>
    %55 = vector.extract_strided_slice %50 {offsets = [0, 384], sizes = [8, 128], strides = [1, 1]} : vector<8x512xf32> to vector<8x128xf32>
    %c0_30 = arith.constant 0 : index
    %c0_31 = arith.constant 0 : index
    %56 = vector.load %arg8[%c0_30, %c0_31] : memref<1x4xf32, #tpu.memory_space<vmem>>, vector<1x4xf32>
    %57 = math.exp %56 : vector<1x4xf32>
    %cst_32 = arith.constant 0.000000e+00 : f32
    %58 = vector.broadcast %cst_32 : f32 to vector<1x4xf32>
    %59 = arith.subf %58, %57 : vector<1x4xf32>
    %60 = vector.broadcast %59 : vector<1x4xf32> to vector<8x4xf32>
    %61 = arith.mulf %21, %60 : vector<8x4xf32>
    %62 = tpu.iota {dimensions = array<i32: 0>} : vector<8x8xi32>
    %63 = tpu.iota {dimensions = array<i32: 1>} : vector<8x8xi32>
    %64 = arith.cmpi sge, %62, %63 : vector<8x8xi32>
    %65 = arith.extui %64 : vector<8x8xi1> to vector<8x8xi32>
    %66 = arith.sitofp %65 : vector<8x8xi32> to vector<8x8xf32>
    %67 = arith.cmpi sle, %62, %63 : vector<8x8xi32>
    %68 = arith.extui %67 : vector<8x8xi1> to vector<8x8xi32>
    %69 = arith.sitofp %68 : vector<8x8xi32> to vector<8x8xf32>
    %cst_33 = arith.constant dense<0.000000e+00> : vector<8x4xf32>
    %70 = tpu.matmul %66, %61, %cst_33 {dimension_numbers = #tpu.dot_dimension_numbers<[1], [0], [0], [1], [0, 0, 1, 1], [], []>} : vector<8x8xf32>, vector<8x4xf32>, vector<8x4xf32> -> vector<8x4xf32>
    %cst_34 = arith.constant dense<0.000000e+00> : vector<4x8xf32>
    %71 = tpu.matmul %61, %69, %cst_34 {dimension_numbers = #tpu.dot_dimension_numbers<[0], [0], [1], [1], [0, 1, 1, 1], [], []>} : vector<8x4xf32>, vector<8x8xf32>, vector<4x8xf32> -> vector<4x8xf32>
    %cst_35 = arith.constant dense<0.000000e+00> : vector<4xf32>
    %72 = vector.multi_reduction <add>, %61, %cst_35 [0] : vector<8x4xf32> to vector<4xf32>
    %73 = vector.shape_cast %72 : vector<4xf32> to vector<1x4xf32>
    %cst_36 = arith.constant dense<0.000000e+00> : vector<8x8xf32>
    %74 = tpu.matmul %55, %54, %cst_36 {dimension_numbers = #tpu.dot_dimension_numbers<[1], [1], [0], [0], [0, 0, 1, 0], [], []>} : vector<8x128xf32>, vector<8x128xf32>, vector<8x8xf32> -> vector<8x8xf32>
    %c0_37 = arith.constant 0 : index
    %c0_38 = arith.constant 0 : index
    %75 = vector.load %arg9[%c0_37, %c0_38] : memref<1x4xf32, #tpu.memory_space<vmem>>, vector<1x4xf32>
    %76 = vector.extract_strided_slice %70 {offsets = [0, 0], sizes = [8, 1], strides = [1, 1]} : vector<8x4xf32> to vector<8x1xf32>
    %77 = vector.extract_strided_slice %71 {offsets = [0, 0], sizes = [1, 8], strides = [1, 1]} : vector<4x8xf32> to vector<1x8xf32>
    %78 = vector.broadcast %76 : vector<8x1xf32> to vector<8x8xf32>
    %79 = vector.broadcast %77 : vector<1x8xf32> to vector<8x8xf32>
    %80 = arith.subf %78, %79 : vector<8x8xf32>
    %cst_39 = arith.constant -1.000000e+30 : f32
    %81 = vector.broadcast %cst_39 : f32 to vector<8x8xf32>
    %82 = arith.select %64, %80, %81 : vector<8x8xi1>, vector<8x8xf32>
    %83 = math.exp %82 : vector<8x8xf32>
    %84 = vector.extract_strided_slice %53 {offsets = [0, 0], sizes = [8, 64], strides = [1, 1]} : vector<8x256xf32> to vector<8x64xf32>
    %85 = vector.extract_strided_slice %21 {offsets = [0, 0], sizes = [8, 1], strides = [1, 1]} : vector<8x4xf32> to vector<8x1xf32>
    %86 = vector.broadcast %85 : vector<8x1xf32> to vector<8x64xf32>
    %87 = arith.mulf %86, %84 : vector<8x64xf32>
    %c0_40 = arith.constant 0 : index
    %c0_41 = arith.constant 0 : index
    %c0_42 = arith.constant 0 : index
    %88 = vector.load %arg16[%c0_40, %c0_41, %c0_42] : memref<4x128x64xf32, #tpu.memory_space<vmem>>, vector<1x128x64xf32>
    %89 = vector.shape_cast %88 : vector<1x128x64xf32> to vector<128x64xf32>
    %90 = arith.mulf %74, %83 : vector<8x8xf32>
    %cst_43 = arith.constant dense<0.000000e+00> : vector<8x64xf32>
    %91 = tpu.matmul %90, %87, %cst_43 {dimension_numbers = #tpu.dot_dimension_numbers<[1], [0], [0], [1], [0, 0, 1, 1], [], []>} : vector<8x8xf32>, vector<8x64xf32>, vector<8x64xf32> -> vector<8x64xf32>
    %92 = math.exp %76 : vector<8x1xf32>
    %cst_44 = arith.constant dense<0.000000e+00> : vector<8x64xf32>
    %93 = tpu.matmul %55, %89, %cst_44 {dimension_numbers = #tpu.dot_dimension_numbers<[1], [0], [0], [1], [0, 0, 1, 1], [], []>} : vector<8x128xf32>, vector<128x64xf32>, vector<8x64xf32> -> vector<8x64xf32>
    %94 = vector.broadcast %92 : vector<8x1xf32> to vector<8x64xf32>
    %95 = arith.mulf %94, %93 : vector<8x64xf32>
    %96 = arith.addf %91, %95 : vector<8x64xf32>
    %97 = vector.extract_strided_slice %75 {offsets = [0, 0], sizes = [1, 1], strides = [1, 1]} : vector<1x4xf32> to vector<1x1xf32>
    %98 = vector.broadcast %97 : vector<1x1xf32> to vector<8x64xf32>
    %99 = arith.mulf %98, %84 : vector<8x64xf32>
    %100 = arith.addf %96, %99 : vector<8x64xf32>
    %c0_45 = arith.constant 0 : index
    %c0_46 = arith.constant 0 : index
    %101 = vector.load %arg17[%c0_45, %c0_46] : memref<8x256xf32, #tpu.memory_space<vmem>>, vector<8x64xf32>
    tpu.vector_store %arg17[%c0_45, %c0_46], %100 {strides = array<i32>} : memref<8x256xf32, #tpu.memory_space<vmem>>, vector<8x64xf32>,
    %102 = vector.extract_strided_slice %73 {offsets = [0, 0], sizes = [1, 1], strides = [1, 1]} : vector<1x4xf32> to vector<1x1xf32>
    %103 = vector.broadcast %102 : vector<1x1xf32> to vector<8x1xf32>
    %104 = arith.subf %103, %76 : vector<8x1xf32>
    %105 = math.exp %104 : vector<8x1xf32>
    %106 = vector.broadcast %105 : vector<8x1xf32> to vector<8x128xf32>
    %107 = arith.mulf %106, %54 : vector<8x128xf32>
    %108 = vector.extract_strided_slice %73 {offsets = [0, 0], sizes = [1, 1], strides = [1, 1]} : vector<1x4xf32> to vector<1x1xf32>
    %109 = math.exp %108 : vector<1x1xf32>
    %110 = vector.broadcast %109 : vector<1x1xf32> to vector<128x64xf32>
    %111 = arith.mulf %110, %89 : vector<128x64xf32>
    %cst_47 = arith.constant dense<0.000000e+00> : vector<128x64xf32>
    %112 = tpu.matmul %107, %87, %cst_47 {dimension_numbers = #tpu.dot_dimension_numbers<[0], [0], [1], [1], [0, 1, 1, 1], [], []>} : vector<8x128xf32>, vector<8x64xf32>, vector<128x64xf32> -> vector<128x64xf32>
    %113 = arith.addf %111, %112 : vector<128x64xf32>
    %c0_48 = arith.constant 0 : index
    %c0_49 = arith.constant 0 : index
    %c0_50 = arith.constant 0 : index
    %114 = vector.load %arg16[%c0_48, %c0_49, %c0_50] : memref<4x128x64xf32, #tpu.memory_space<vmem>>, vector<1x128x64xf32>
    %115 = vector.shape_cast %114 : vector<1x128x64xf32> to vector<128x64xf32>
    %116 = vector.shape_cast %113 : vector<128x64xf32> to vector<1x128x64xf32>
    tpu.vector_store %arg16[%c0_48, %c0_49, %c0_50], %116 {strides = array<i32>} : memref<4x128x64xf32, #tpu.memory_space<vmem>>, vector<1x128x64xf32>,
    %117 = vector.extract_strided_slice %70 {offsets = [0, 1], sizes = [8, 1], strides = [1, 1]} : vector<8x4xf32> to vector<8x1xf32>
    %118 = vector.extract_strided_slice %71 {offsets = [1, 0], sizes = [1, 8], strides = [1, 1]} : vector<4x8xf32> to vector<1x8xf32>
    %119 = vector.broadcast %117 : vector<8x1xf32> to vector<8x8xf32>
    %120 = vector.broadcast %118 : vector<1x8xf32> to vector<8x8xf32>
    %121 = arith.subf %119, %120 : vector<8x8xf32>
    %cst_51 = arith.constant -1.000000e+30 : f32
    %122 = vector.broadcast %cst_51 : f32 to vector<8x8xf32>
    %123 = arith.select %64, %121, %122 : vector<8x8xi1>, vector<8x8xf32>
    %124 = math.exp %123 : vector<8x8xf32>
    %125 = vector.extract_strided_slice %53 {offsets = [0, 64], sizes = [8, 64], strides = [1, 1]} : vector<8x256xf32> to vector<8x64xf32>
    %126 = vector.extract_strided_slice %21 {offsets = [0, 1], sizes = [8, 1], strides = [1, 1]} : vector<8x4xf32> to vector<8x1xf32>
    %127 = vector.broadcast %126 : vector<8x1xf32> to vector<8x64xf32>
    %128 = arith.mulf %127, %125 : vector<8x64xf32>
    %c1_52 = arith.constant 1 : index
    %c0_53 = arith.constant 0 : index
    %c0_54 = arith.constant 0 : index
    %129 = vector.load %arg16[%c1_52, %c0_53, %c0_54] : memref<4x128x64xf32, #tpu.memory_space<vmem>>, vector<1x128x64xf32>
    %130 = vector.shape_cast %129 : vector<1x128x64xf32> to vector<128x64xf32>
    %131 = arith.mulf %74, %124 : vector<8x8xf32>
    %cst_55 = arith.constant dense<0.000000e+00> : vector<8x64xf32>
    %132 = tpu.matmul %131, %128, %cst_55 {dimension_numbers = #tpu.dot_dimension_numbers<[1], [0], [0], [1], [0, 0, 1, 1], [], []>} : vector<8x8xf32>, vector<8x64xf32>, vector<8x64xf32> -> vector<8x64xf32>
    %133 = math.exp %117 : vector<8x1xf32>
    %cst_56 = arith.constant dense<0.000000e+00> : vector<8x64xf32>
    %134 = tpu.matmul %55, %130, %cst_56 {dimension_numbers = #tpu.dot_dimension_numbers<[1], [0], [0], [1], [0, 0, 1, 1], [], []>} : vector<8x128xf32>, vector<128x64xf32>, vector<8x64xf32> -> vector<8x64xf32>
    %135 = vector.broadcast %133 : vector<8x1xf32> to vector<8x64xf32>
    %136 = arith.mulf %135, %134 : vector<8x64xf32>
    %137 = arith.addf %132, %136 : vector<8x64xf32>
    %138 = vector.extract_strided_slice %75 {offsets = [0, 1], sizes = [1, 1], strides = [1, 1]} : vector<1x4xf32> to vector<1x1xf32>
    %139 = vector.broadcast %138 : vector<1x1xf32> to vector<8x64xf32>
    %140 = arith.mulf %139, %125 : vector<8x64xf32>
    %141 = arith.addf %137, %140 : vector<8x64xf32>
    %c0_57 = arith.constant 0 : index
    %c64 = arith.constant 64 : index
    %142 = vector.load %arg17[%c0_57, %c64] : memref<8x256xf32, #tpu.memory_space<vmem>>, vector<8x64xf32>
    tpu.vector_store %arg17[%c0_57, %c64], %141 {strides = array<i32>} : memref<8x256xf32, #tpu.memory_space<vmem>>, vector<8x64xf32>,
    %143 = vector.extract_strided_slice %73 {offsets = [0, 1], sizes = [1, 1], strides = [1, 1]} : vector<1x4xf32> to vector<1x1xf32>
    %144 = vector.broadcast %143 : vector<1x1xf32> to vector<8x1xf32>
    %145 = arith.subf %144, %117 : vector<8x1xf32>
    %146 = math.exp %145 : vector<8x1xf32>
    %147 = vector.broadcast %146 : vector<8x1xf32> to vector<8x128xf32>
    %148 = arith.mulf %147, %54 : vector<8x128xf32>
    %149 = vector.extract_strided_slice %73 {offsets = [0, 1], sizes = [1, 1], strides = [1, 1]} : vector<1x4xf32> to vector<1x1xf32>
    %150 = math.exp %149 : vector<1x1xf32>
    %151 = vector.broadcast %150 : vector<1x1xf32> to vector<128x64xf32>
    %152 = arith.mulf %151, %130 : vector<128x64xf32>
    %cst_58 = arith.constant dense<0.000000e+00> : vector<128x64xf32>
    %153 = tpu.matmul %148, %128, %cst_58 {dimension_numbers = #tpu.dot_dimension_numbers<[0], [0], [1], [1], [0, 1, 1, 1], [], []>} : vector<8x128xf32>, vector<8x64xf32>, vector<128x64xf32> -> vector<128x64xf32>
    %154 = arith.addf %152, %153 : vector<128x64xf32>
    %c1_59 = arith.constant 1 : index
    %c0_60 = arith.constant 0 : index
    %c0_61 = arith.constant 0 : index
    %155 = vector.load %arg16[%c1_59, %c0_60, %c0_61] : memref<4x128x64xf32, #tpu.memory_space<vmem>>, vector<1x128x64xf32>
    %156 = vector.shape_cast %155 : vector<1x128x64xf32> to vector<128x64xf32>
    %157 = vector.shape_cast %154 : vector<128x64xf32> to vector<1x128x64xf32>
    tpu.vector_store %arg16[%c1_59, %c0_60, %c0_61], %157 {strides = array<i32>} : memref<4x128x64xf32, #tpu.memory_space<vmem>>, vector<1x128x64xf32>,
    %158 = vector.extract_strided_slice %70 {offsets = [0, 2], sizes = [8, 1], strides = [1, 1]} : vector<8x4xf32> to vector<8x1xf32>
    %159 = vector.extract_strided_slice %71 {offsets = [2, 0], sizes = [1, 8], strides = [1, 1]} : vector<4x8xf32> to vector<1x8xf32>
    %160 = vector.broadcast %158 : vector<8x1xf32> to vector<8x8xf32>
    %161 = vector.broadcast %159 : vector<1x8xf32> to vector<8x8xf32>
    %162 = arith.subf %160, %161 : vector<8x8xf32>
    %cst_62 = arith.constant -1.000000e+30 : f32
    %163 = vector.broadcast %cst_62 : f32 to vector<8x8xf32>
    %164 = arith.select %64, %162, %163 : vector<8x8xi1>, vector<8x8xf32>
    %165 = math.exp %164 : vector<8x8xf32>
    %166 = vector.extract_strided_slice %53 {offsets = [0, 128], sizes = [8, 64], strides = [1, 1]} : vector<8x256xf32> to vector<8x64xf32>
    %167 = vector.extract_strided_slice %21 {offsets = [0, 2], sizes = [8, 1], strides = [1, 1]} : vector<8x4xf32> to vector<8x1xf32>
    %168 = vector.broadcast %167 : vector<8x1xf32> to vector<8x64xf32>
    %169 = arith.mulf %168, %166 : vector<8x64xf32>
    %c2_63 = arith.constant 2 : index
    %c0_64 = arith.constant 0 : index
    %c0_65 = arith.constant 0 : index
    %170 = vector.load %arg16[%c2_63, %c0_64, %c0_65] : memref<4x128x64xf32, #tpu.memory_space<vmem>>, vector<1x128x64xf32>
    %171 = vector.shape_cast %170 : vector<1x128x64xf32> to vector<128x64xf32>
    %172 = arith.mulf %74, %165 : vector<8x8xf32>
    %cst_66 = arith.constant dense<0.000000e+00> : vector<8x64xf32>
    %173 = tpu.matmul %172, %169, %cst_66 {dimension_numbers = #tpu.dot_dimension_numbers<[1], [0], [0], [1], [0, 0, 1, 1], [], []>} : vector<8x8xf32>, vector<8x64xf32>, vector<8x64xf32> -> vector<8x64xf32>
    %174 = math.exp %158 : vector<8x1xf32>
    %cst_67 = arith.constant dense<0.000000e+00> : vector<8x64xf32>
    %175 = tpu.matmul %55, %171, %cst_67 {dimension_numbers = #tpu.dot_dimension_numbers<[1], [0], [0], [1], [0, 0, 1, 1], [], []>} : vector<8x128xf32>, vector<128x64xf32>, vector<8x64xf32> -> vector<8x64xf32>
    %176 = vector.broadcast %174 : vector<8x1xf32> to vector<8x64xf32>
    %177 = arith.mulf %176, %175 : vector<8x64xf32>
    %178 = arith.addf %173, %177 : vector<8x64xf32>
    %179 = vector.extract_strided_slice %75 {offsets = [0, 2], sizes = [1, 1], strides = [1, 1]} : vector<1x4xf32> to vector<1x1xf32>
    %180 = vector.broadcast %179 : vector<1x1xf32> to vector<8x64xf32>
    %181 = arith.mulf %180, %166 : vector<8x64xf32>
    %182 = arith.addf %178, %181 : vector<8x64xf32>
    %c0_68 = arith.constant 0 : index
    %c128 = arith.constant 128 : index
    %183 = vector.load %arg17[%c0_68, %c128] : memref<8x256xf32, #tpu.memory_space<vmem>>, vector<8x64xf32>
    tpu.vector_store %arg17[%c0_68, %c128], %182 {strides = array<i32>} : memref<8x256xf32, #tpu.memory_space<vmem>>, vector<8x64xf32>,
    %184 = vector.extract_strided_slice %73 {offsets = [0, 2], sizes = [1, 1], strides = [1, 1]} : vector<1x4xf32> to vector<1x1xf32>
    %185 = vector.broadcast %184 : vector<1x1xf32> to vector<8x1xf32>
    %186 = arith.subf %185, %158 : vector<8x1xf32>
    %187 = math.exp %186 : vector<8x1xf32>
    %188 = vector.broadcast %187 : vector<8x1xf32> to vector<8x128xf32>
    %189 = arith.mulf %188, %54 : vector<8x128xf32>
    %190 = vector.extract_strided_slice %73 {offsets = [0, 2], sizes = [1, 1], strides = [1, 1]} : vector<1x4xf32> to vector<1x1xf32>
    %191 = math.exp %190 : vector<1x1xf32>
    %192 = vector.broadcast %191 : vector<1x1xf32> to vector<128x64xf32>
    %193 = arith.mulf %192, %171 : vector<128x64xf32>
    %cst_69 = arith.constant dense<0.000000e+00> : vector<128x64xf32>
    %194 = tpu.matmul %189, %169, %cst_69 {dimension_numbers = #tpu.dot_dimension_numbers<[0], [0], [1], [1], [0, 1, 1, 1], [], []>} : vector<8x128xf32>, vector<8x64xf32>, vector<128x64xf32> -> vector<128x64xf32>
    %195 = arith.addf %193, %194 : vector<128x64xf32>
    %c2_70 = arith.constant 2 : index
    %c0_71 = arith.constant 0 : index
    %c0_72 = arith.constant 0 : index
    %196 = vector.load %arg16[%c2_70, %c0_71, %c0_72] : memref<4x128x64xf32, #tpu.memory_space<vmem>>, vector<1x128x64xf32>
    %197 = vector.shape_cast %196 : vector<1x128x64xf32> to vector<128x64xf32>
    %198 = vector.shape_cast %195 : vector<128x64xf32> to vector<1x128x64xf32>
    tpu.vector_store %arg16[%c2_70, %c0_71, %c0_72], %198 {strides = array<i32>} : memref<4x128x64xf32, #tpu.memory_space<vmem>>, vector<1x128x64xf32>,
    %199 = vector.extract_strided_slice %70 {offsets = [0, 3], sizes = [8, 1], strides = [1, 1]} : vector<8x4xf32> to vector<8x1xf32>
    %200 = vector.extract_strided_slice %71 {offsets = [3, 0], sizes = [1, 8], strides = [1, 1]} : vector<4x8xf32> to vector<1x8xf32>
    %201 = vector.broadcast %199 : vector<8x1xf32> to vector<8x8xf32>
    %202 = vector.broadcast %200 : vector<1x8xf32> to vector<8x8xf32>
    %203 = arith.subf %201, %202 : vector<8x8xf32>
    %cst_73 = arith.constant -1.000000e+30 : f32
    %204 = vector.broadcast %cst_73 : f32 to vector<8x8xf32>
    %205 = arith.select %64, %203, %204 : vector<8x8xi1>, vector<8x8xf32>
    %206 = math.exp %205 : vector<8x8xf32>
    %207 = vector.extract_strided_slice %53 {offsets = [0, 192], sizes = [8, 64], strides = [1, 1]} : vector<8x256xf32> to vector<8x64xf32>
    %208 = vector.extract_strided_slice %21 {offsets = [0, 3], sizes = [8, 1], strides = [1, 1]} : vector<8x4xf32> to vector<8x1xf32>
    %209 = vector.broadcast %208 : vector<8x1xf32> to vector<8x64xf32>
    %210 = arith.mulf %209, %207 : vector<8x64xf32>
    %c3_74 = arith.constant 3 : index
    %c0_75 = arith.constant 0 : index
    %c0_76 = arith.constant 0 : index
    %211 = vector.load %arg16[%c3_74, %c0_75, %c0_76] : memref<4x128x64xf32, #tpu.memory_space<vmem>>, vector<1x128x64xf32>
    %212 = vector.shape_cast %211 : vector<1x128x64xf32> to vector<128x64xf32>
    %213 = arith.mulf %74, %206 : vector<8x8xf32>
    %cst_77 = arith.constant dense<0.000000e+00> : vector<8x64xf32>
    %214 = tpu.matmul %213, %210, %cst_77 {dimension_numbers = #tpu.dot_dimension_numbers<[1], [0], [0], [1], [0, 0, 1, 1], [], []>} : vector<8x8xf32>, vector<8x64xf32>, vector<8x64xf32> -> vector<8x64xf32>
    %215 = math.exp %199 : vector<8x1xf32>
    %cst_78 = arith.constant dense<0.000000e+00> : vector<8x64xf32>
    %216 = tpu.matmul %55, %212, %cst_78 {dimension_numbers = #tpu.dot_dimension_numbers<[1], [0], [0], [1], [0, 0, 1, 1], [], []>} : vector<8x128xf32>, vector<128x64xf32>, vector<8x64xf32> -> vector<8x64xf32>
    %217 = vector.broadcast %215 : vector<8x1xf32> to vector<8x64xf32>
    %218 = arith.mulf %217, %216 : vector<8x64xf32>
    %219 = arith.addf %214, %218 : vector<8x64xf32>
    %220 = vector.extract_strided_slice %75 {offsets = [0, 3], sizes = [1, 1], strides = [1, 1]} : vector<1x4xf32> to vector<1x1xf32>
    %221 = vector.broadcast %220 : vector<1x1xf32> to vector<8x64xf32>
    %222 = arith.mulf %221, %207 : vector<8x64xf32>
    %223 = arith.addf %219, %222 : vector<8x64xf32>
    %c0_79 = arith.constant 0 : index
    %c192 = arith.constant 192 : index
    %224 = vector.load %arg17[%c0_79, %c192] : memref<8x256xf32, #tpu.memory_space<vmem>>, vector<8x64xf32>
    tpu.vector_store %arg17[%c0_79, %c192], %223 {strides = array<i32>} : memref<8x256xf32, #tpu.memory_space<vmem>>, vector<8x64xf32>,
    %225 = vector.extract_strided_slice %73 {offsets = [0, 3], sizes = [1, 1], strides = [1, 1]} : vector<1x4xf32> to vector<1x1xf32>
    %226 = vector.broadcast %225 : vector<1x1xf32> to vector<8x1xf32>
    %227 = arith.subf %226, %199 : vector<8x1xf32>
    %228 = math.exp %227 : vector<8x1xf32>
    %229 = vector.broadcast %228 : vector<8x1xf32> to vector<8x128xf32>
    %230 = arith.mulf %229, %54 : vector<8x128xf32>
    %231 = vector.extract_strided_slice %73 {offsets = [0, 3], sizes = [1, 1], strides = [1, 1]} : vector<1x4xf32> to vector<1x1xf32>
    %232 = math.exp %231 : vector<1x1xf32>
    %233 = vector.broadcast %232 : vector<1x1xf32> to vector<128x64xf32>
    %234 = arith.mulf %233, %212 : vector<128x64xf32>
    %cst_80 = arith.constant dense<0.000000e+00> : vector<128x64xf32>
    %235 = tpu.matmul %230, %210, %cst_80 {dimension_numbers = #tpu.dot_dimension_numbers<[0], [0], [1], [1], [0, 1, 1, 1], [], []>} : vector<8x128xf32>, vector<8x64xf32>, vector<128x64xf32> -> vector<128x64xf32>
    %236 = arith.addf %234, %235 : vector<128x64xf32>
    %c3_81 = arith.constant 3 : index
    %c0_82 = arith.constant 0 : index
    %c0_83 = arith.constant 0 : index
    %237 = vector.load %arg16[%c3_81, %c0_82, %c0_83] : memref<4x128x64xf32, #tpu.memory_space<vmem>>, vector<1x128x64xf32>
    %238 = vector.shape_cast %237 : vector<1x128x64xf32> to vector<128x64xf32>
    %239 = vector.shape_cast %236 : vector<128x64xf32> to vector<1x128x64xf32>
    tpu.vector_store %arg16[%c3_81, %c0_82, %c0_83], %239 {strides = array<i32>} : memref<4x128x64xf32, #tpu.memory_space<vmem>>, vector<1x128x64xf32>,
    %c0_84 = arith.constant 0 : index
    %c0_85 = arith.constant 0 : index
    %240 = vector.load %arg17[%c0_84, %c0_85] : memref<8x256xf32, #tpu.memory_space<vmem>>, vector<8x256xf32>
    %241 = arith.negf %8 : vector<8x256xf32>
    %242 = math.exp %241 : vector<8x256xf32>
    %cst_86 = arith.constant 1.000000e+00 : f32
    %243 = vector.broadcast %cst_86 : f32 to vector<8x256xf32>
    %244 = arith.addf %243, %242 : vector<8x256xf32>
    %245 = arith.divf %243, %244 : vector<8x256xf32>
    %246 = arith.mulf %8, %245 : vector<8x256xf32>
    %247 = arith.mulf %240, %246 : vector<8x256xf32>
    %248 = arith.mulf %247, %247 : vector<8x256xf32>
    %cst_87 = arith.constant dense<0.000000e+00> : vector<8xf32>
    %249 = vector.multi_reduction <add>, %248, %cst_87 [1] : vector<8x256xf32> to vector<8xf32>
    %250 = vector.shape_cast %249 : vector<8xf32> to vector<8x1xf32>
    %cst_88 = arith.constant 2.560000e+02 : f32
    %251 = vector.broadcast %cst_88 : f32 to vector<8x1xf32>
    %252 = arith.divf %250, %251 : vector<8x1xf32>
    %cst_89 = arith.constant 9.99999974E-6 : f32
    %253 = vector.broadcast %cst_89 : f32 to vector<8x1xf32>
    %254 = arith.addf %252, %253 : vector<8x1xf32>
    %255 = math.rsqrt %254 : vector<8x1xf32>
    %256 = vector.broadcast %255 : vector<8x1xf32> to vector<8x256xf32>
    %257 = arith.mulf %247, %256 : vector<8x256xf32>
    %c0_90 = arith.constant 0 : index
    %c0_91 = arith.constant 0 : index
    %258 = vector.load %arg10[%c0_90, %c0_91] : memref<1x256xf32, #tpu.memory_space<vmem>>, vector<1x256xf32>
    %259 = vector.broadcast %258 : vector<1x256xf32> to vector<8x256xf32>
    %260 = arith.mulf %257, %259 : vector<8x256xf32>
    %261 = arith.truncf %260 : vector<8x256xf32> to vector<8x256xbf16>
    %c0_92 = arith.constant 0 : index
    %c0_93 = arith.constant 0 : index
    %262 = vector.load %arg11[%c0_92, %c0_93] : memref<256x128xbf16, #tpu.memory_space<vmem>>, vector<256x128xbf16>
    %cst_94 = arith.constant dense<0.000000e+00> : vector<8x128xf32>
    %263 = tpu.matmul %261, %262, %cst_94 {dimension_numbers = #tpu.dot_dimension_numbers<[1], [0], [0], [1], [0, 0, 1, 1], [], []>} : vector<8x256xbf16>, vector<256x128xbf16>, vector<8x128xf32> -> vector<8x128xf32>
    %264 = arith.addf %263, %1 : vector<8x128xf32>
    %cst_95 = arith.constant dense<0.000000e+00> : vector<8xf32>
    %265 = vector.multi_reduction <add>, %264, %cst_95 [1] : vector<8x128xf32> to vector<8xf32>
    %266 = vector.shape_cast %265 : vector<8xf32> to vector<8x1xf32>
    %cst_96 = arith.constant 1.280000e+02 : f32
    %267 = vector.broadcast %cst_96 : f32 to vector<8x1xf32>
    %268 = arith.divf %266, %267 : vector<8x1xf32>
    %269 = vector.broadcast %268 : vector<8x1xf32> to vector<8x128xf32>
    %270 = arith.subf %264, %269 : vector<8x128xf32>
    %271 = vector.broadcast %268 : vector<8x1xf32> to vector<8x128xf32>
    %272 = arith.subf %264, %271 : vector<8x128xf32>
    %273 = arith.mulf %270, %272 : vector<8x128xf32>
    %cst_97 = arith.constant dense<0.000000e+00> : vector<8xf32>
    %274 = vector.multi_reduction <add>, %273, %cst_97 [1] : vector<8x128xf32> to vector<8xf32>
    %275 = vector.shape_cast %274 : vector<8xf32> to vector<8x1xf32>
    %cst_98 = arith.constant 1.280000e+02 : f32
    %276 = vector.broadcast %cst_98 : f32 to vector<8x1xf32>
    %277 = arith.divf %275, %276 : vector<8x1xf32>
    %278 = vector.broadcast %268 : vector<8x1xf32> to vector<8x128xf32>
    %279 = arith.subf %264, %278 : vector<8x128xf32>
    %cst_99 = arith.constant 9.99999974E-6 : f32
    %280 = vector.broadcast %cst_99 : f32 to vector<8x1xf32>
    %281 = arith.addf %277, %280 : vector<8x1xf32>
    %282 = math.rsqrt %281 : vector<8x1xf32>
    %283 = vector.broadcast %282 : vector<8x1xf32> to vector<8x128xf32>
    %284 = arith.mulf %279, %283 : vector<8x128xf32>
    %c0_100 = arith.constant 0 : index
    %c0_101 = arith.constant 0 : index
    %285 = vector.load %arg12[%c0_100, %c0_101] : memref<1x128xf32, #tpu.memory_space<vmem>>, vector<1x128xf32>
    %286 = vector.broadcast %285 : vector<1x128xf32> to vector<8x128xf32>
    %287 = arith.mulf %284, %286 : vector<8x128xf32>
    %c0_102 = arith.constant 0 : index
    %c0_103 = arith.constant 0 : index
    %288 = vector.load %arg13[%c0_102, %c0_103] : memref<1x128xf32, #tpu.memory_space<vmem>>, vector<1x128xf32>
    %289 = vector.broadcast %288 : vector<1x128xf32> to vector<8x128xf32>
    %290 = arith.addf %287, %289 : vector<8x128xf32>
    %c0_104 = arith.constant 0 : index
    %c0_105 = arith.constant 0 : index
    %c0_106 = arith.constant 0 : index
    %291 = vector.load %arg14[%c0_104, %c0_105, %c0_106] : memref<1x8x128xf32, #tpu.memory_space<vmem>>, vector<1x8x128xf32>
    %292 = vector.shape_cast %291 : vector<1x8x128xf32> to vector<8x128xf32>
    %293 = vector.shape_cast %290 : vector<8x128xf32> to vector<1x8x128xf32>
    tpu.vector_store %arg14[%c0_104, %c0_105, %c0_106], %293 {strides = array<i32>} : memref<1x8x128xf32, #tpu.memory_space<vmem>>, vector<1x8x128xf32>,
    return
  }
  func.func @transform_0(%arg0: i32, %arg1: i32) -> (i32, i32, i32) {
    %c0_i32 = arith.constant 0 : i32
    %c0_i32_0 = arith.constant 0 : i32
    return %arg0, %arg1, %c0_i32 : i32, i32, i32
  }
  func.func @transform_1(%arg0: i32, %arg1: i32) -> (i32, i32) {
    %c0_i32 = arith.constant 0 : i32
    %c0_i32_0 = arith.constant 0 : i32
    %c0_i32_1 = arith.constant 0 : i32
    return %c0_i32, %c0_i32_0 : i32, i32
  }
  func.func @transform_2(%arg0: i32, %arg1: i32) -> (i32, i32) {
    %c0_i32 = arith.constant 0 : i32
    %c0_i32_0 = arith.constant 0 : i32
    %c0_i32_1 = arith.constant 0 : i32
    return %c0_i32, %c0_i32_0 : i32, i32
  }
  func.func @transform_3(%arg0: i32, %arg1: i32) -> (i32, i32) {
    %c0_i32 = arith.constant 0 : i32
    %c0_i32_0 = arith.constant 0 : i32
    %c0_i32_1 = arith.constant 0 : i32
    return %c0_i32, %c0_i32_0 : i32, i32
  }
  func.func @transform_4(%arg0: i32, %arg1: i32) -> (i32, i32) {
    %c0_i32 = arith.constant 0 : i32
    %c0_i32_0 = arith.constant 0 : i32
    %c0_i32_1 = arith.constant 0 : i32
    return %c0_i32, %c0_i32_0 : i32, i32
  }
  func.func @transform_5(%arg0: i32, %arg1: i32) -> (i32, i32) {
    %c0_i32 = arith.constant 0 : i32
    %c0_i32_0 = arith.constant 0 : i32
    %c0_i32_1 = arith.constant 0 : i32
    return %c0_i32, %c0_i32_0 : i32, i32
  }
  func.func @transform_6(%arg0: i32, %arg1: i32) -> (i32, i32) {
    %c0_i32 = arith.constant 0 : i32
    %c0_i32_0 = arith.constant 0 : i32
    %c0_i32_1 = arith.constant 0 : i32
    return %c0_i32, %c0_i32_0 : i32, i32
  }
  func.func @transform_7(%arg0: i32, %arg1: i32) -> (i32, i32) {
    %c0_i32 = arith.constant 0 : i32
    %c0_i32_0 = arith.constant 0 : i32
    %c0_i32_1 = arith.constant 0 : i32
    return %c0_i32, %c0_i32_0 : i32, i32
  }
  func.func @transform_8(%arg0: i32, %arg1: i32) -> (i32, i32) {
    %c0_i32 = arith.constant 0 : i32
    %c0_i32_0 = arith.constant 0 : i32
    %c0_i32_1 = arith.constant 0 : i32
    return %c0_i32, %c0_i32_0 : i32, i32
  }
  func.func @transform_9(%arg0: i32, %arg1: i32) -> (i32, i32) {
    %c0_i32 = arith.constant 0 : i32
    %c0_i32_0 = arith.constant 0 : i32
    %c0_i32_1 = arith.constant 0 : i32
    return %c0_i32, %c0_i32_0 : i32, i32
  }
  func.func @transform_10(%arg0: i32, %arg1: i32) -> (i32, i32) {
    %c0_i32 = arith.constant 0 : i32
    %c0_i32_0 = arith.constant 0 : i32
    %c0_i32_1 = arith.constant 0 : i32
    return %c0_i32, %c0_i32_0 : i32, i32
  }
  func.func @transform_11(%arg0: i32, %arg1: i32) -> (i32, i32) {
    %c0_i32 = arith.constant 0 : i32
    %c0_i32_0 = arith.constant 0 : i32
    %c0_i32_1 = arith.constant 0 : i32
    return %c0_i32, %c0_i32_0 : i32, i32
  }
  func.func @transform_12(%arg0: i32, %arg1: i32) -> (i32, i32, i32) {
    %c0_i32 = arith.constant 0 : i32
    %c0_i32_0 = arith.constant 0 : i32
    return %arg0, %arg1, %c0_i32 : i32, i32, i32
  }
}

</mosaic_0001>

<llo_original>
// kernel: tpu_custom_call.1
$region0: #{tpu_custom_call.1}
  #allocation0 [shape = 'u32[]', space=smem, size = 0x4, offset = 0x4, fixed_abs, tag = 'smem constant byte address 0x4 - core index']
  #allocation1 [shape = 'u32[144,128]{1,0:T(1,128)}', space=vmem, size = 0x12000, scoped, tag = 'internal scratch']
  #allocation2 [shape = 'f32[16,512]{1,0:T(8,128)}', space=vmem, size = 0x8000, scoped, tag = 'scratch operand']
  #allocation3 [shape = 'f32[4,128,64]{2,1,0:T(8,128)}', space=vmem, size = 0x40000, scoped, tag = 'scratch operand']
  #allocation4 [shape = 'f32[8,256]{1,0:T(8,128)}', space=vmem, size = 0x2000, scoped, tag = 'scratch operand']
  %s0 = inlined_call_operand.vmem [shape: f32[2,16,128], index: 0, kind: input, shape index: {}]
  %s1 = inlined_call_operand.hbm [shape: bf16[128,768], index: 1, kind: input, shape index: {}]
  %s2 = inlined_call_operand.vmem [shape: f32[128,4], index: 2, kind: input, shape index: {}]
  %s3 = inlined_call_operand.hbm [shape: f32[1,4], index: 3, kind: input, shape index: {}]
  %s4 = inlined_call_operand.hbm [shape: f32[4,512], index: 4, kind: input, shape index: {}]
  %s5 = inlined_call_operand.vmem [shape: f32[1,512], index: 5, kind: input, shape index: {}]
  %s6 = inlined_call_operand.hbm [shape: f32[1,4], index: 6, kind: input, shape index: {}]
  %s7 = inlined_call_operand.hbm [shape: f32[1,4], index: 7, kind: input, shape index: {}]
  %s8 = inlined_call_operand.vmem [shape: f32[1,256], index: 8, kind: input, shape index: {}]
  %s9 = inlined_call_operand.vmem [shape: bf16[256,128], index: 9, kind: input, shape index: {}]
  %s10 = inlined_call_operand.vmem [shape: f32[1,128], index: 10, kind: input, shape index: {}]
  %s11 = inlined_call_operand.vmem [shape: f32[1,128], index: 11, kind: input, shape index: {}]
  %s12 = inlined_call_operand.hbm [shape: f32[2,16,128], index: 12, kind: output, shape index: {}]
  %s13 = sld [smem:[#allocation0]]
  $region105: #{tpu_custom_call.1} parent=0
    _
  %s15 = ssub.s32 1, %s13
  %s16 = scalar_select 0, %s15, %s13
  $region1: #{tpu_custom_call.1} parent=0
    #allocation5 [shape = 'u8[196608]{0}', space=vmem, size = 0x30000, scoped, tag = 'input window, operand 1, single buffered']
    #allocation6 [shape = 's32[2]{0}', space=sflag, size = 0x8, scoped, tag = 'scoped memory for tpu_custom_call.1']
    #allocation7 [shape = 's32[2]{0}', space=sflag, size = 0x8, scoped, tag = 'scoped memory for tpu_custom_call.1']
    #allocation8 [shape = 'u8[512]{0}', space=vmem, size = 0x400, scoped, tag = 'input window, operand 3, single buffered']
    #allocation9 [shape = 's32[1]{0}', space=sflag, size = 0x4, scoped, tag = 'scoped memory for tpu_custom_call.1']
    #allocation10 [shape = 'u8[8192]{0}', space=vmem, size = 0x2000, scoped, tag = 'input window, operand 4, single buffered']
    #allocation11 [shape = 'u8[512]{0}', space=vmem, size = 0x400, scoped, tag = 'input window, operand 6, single buffered']
    #allocation12 [shape = 's32[1]{0}', space=sflag, size = 0x4, scoped, tag = 'scoped memory for tpu_custom_call.1']
    #allocation13 [shape = 'u8[512]{0}', space=vmem, size = 0x400, scoped, tag = 'input window, operand 7, single buffered']
    #allocation14 [shape = 'u8[8192]{0}', space=vmem, size = 0x2000, scoped, tag = 'output window, operand 0']
    %17 = vsyncpa [#allocation6], 0
    %18 = vsyncpa [#allocation9], 0
    %19 = vsyncpa [#allocation12], 0
    %20 = vsyncpa [#allocation7], 0
    %s21 = scalar_lea.sflag [#allocation7], 1
    %22 = vsyncpa %s21, 0
    loop: start=0, step=1, limit=6
    $region2: #{tpu_custom_call.1} parent=1 // loop_pre_header
      _
    $region3: #{tpu_custom_call.1} parent=1 // loop_header
      %s24 = sphi 0, %s28
      %p25 = scmp.ge.s32.totalorder %s24, 6
      %s31 = sphi 0, %s43
      %s32 = sphi 0, %s39
      %s33 = sphi 0, %s31
      %s34 = sphi 0, %s32
      %s35 = sphi 0, %s33
      %s36 = sphi 0, %s34
      %s48 = sphi 0, %s50
      %s51 = sphi 0, %s48
      %s52 = sphi 0, %s51
      %s68 = sphi 0, %s52
      %s72 = sphi 0, %s72
      %s74 = sphi 0, %s72
      %s75 = sphi 0, %s74
      %s89 = sphi 0, %s75
      %s93 = sphi 0, %s93
      %s95 = sphi 0, %s93
      %s96 = sphi 0, %s95
      %s110 = sphi 0, %s96
      %s114 = sphi 0, %s114
      %s116 = sphi 0, %s114
      %s117 = sphi 0, %s116
      %s131 = sphi 0, %s117
      %s135 = sphi 0, %s135
      %s137 = sphi 0, %s135
      %s138 = sphi 0, %s137
      %s152 = sphi 0, %s138
      %s156 = sphi 0, %s156
      %s158 = sphi 0, %s156
      %s159 = sphi 0, %s158
      %s173 = sphi 0, %s159
      %s177 = sphi 0, %s177
      %s179 = sphi 0, %s177
      %s180 = sphi 0, %s179
      %s194 = sphi 0, %s180
      %s198 = sphi 0, %s198
      %s200 = sphi 0, %s198
      %s201 = sphi 0, %s200
      %s215 = sphi 0, %s201
      %s219 = sphi 0, %s219
      %s221 = sphi 0, %s219
      %s222 = sphi 0, %s221
      %s236 = sphi 0, %s222
      %s240 = sphi 0, %s240
      %s242 = sphi 0, %s240
      %s243 = sphi 0, %s242
      %s257 = sphi 0, %s243
      %s261 = sphi 0, %s261
      %s263 = sphi 0, %s261
      %s264 = sphi 0, %s263
      %s278 = sphi 0, %s264
      %s282 = sphi 0, %s282
      %s284 = sphi 0, %s282
      %s285 = sphi 0, %s284
      %s299 = sphi 0, %s285
      %s307 = sphi 0, %s309
      %s310 = sphi 0, %s307
      %s311 = sphi 0, %s310
      %s327 = sphi 0, %s311
    $region4: #{tpu_custom_call.1} parent=1 // loop_header_branch
      %27 = sbr.rel (%p25) target = $region8
    $region5: #{tpu_custom_call.1} parent=1 // loop_body
      %s29 = ssub.s32 %s24, 1
      %s30 = ssub.s32 %s24, 2
      %s37 = sadd.s32 1, %s32
      %p38 = scmp.ge.s32.totalorder %s37, 2
      %s39 = scalar_select %p38, 0, %s37
      %s40 = sadd.s32 1, %s31
      %s41 = scalar_select %p38, %s40, %s31
      %p42 = scmp.ge.s32.totalorder %s41, 2
      %s43 = scalar_select %p42, 0, %s41
      %s44 = ssub.s32 %s31, %s43
      %s45 = ssub.s32 %s32, %s39
      %s46 = sor.u32 %s44, %s45
      %p47 = scmp.eq.s32.totalorder %s46, 0
      %s49 = sadd.s32 %s48, 1
      %s50 = scalar_select %p47, %s48, %s49
      %p53 = pneg %p47
      %p54 = scmp.eq.s32.totalorder %s24, 3
      %p55 = por %p53, %p54
      %p56 = scmp.ne.s32.totalorder %s48, %s51
      %p57 = scmp.eq.s32.totalorder %s24, 0
      %p58 = por %p56, %p57
      %p59 = scmp.ne.s32.totalorder %s48, %s51
      %p60 = scmp.eq.s32.totalorder %s29, 3
      %p61 = por %p59, %p60
      %p62 = scmp.ne.s32.totalorder %s51, %s52
      %p63 = scmp.eq.s32.totalorder %s29, 0
      %p64 = por %p62, %p63
      %p65 = scmp.ne.s32.totalorder %s51, %s52
      %p66 = scmp.eq.s32.totalorder %s30, 3
      %p67 = por %p65, %p66
      %p69 = scmp.ne.s32.totalorder %s52, %s68
      %p70 = scmp.eq.s32.totalorder %s30, 0
      %p71 = por %p69, %p70
      %s73 = sadd.s32 %s72, 1
      %p76 = scmp.eq.s32.totalorder %s24, 3
      %p77 = scmp.ne.s32.totalorder %s72, %s74
      %p78 = scmp.eq.s32.totalorder %s24, 0
      %p79 = por %p77, %p78
      %p80 = scmp.ne.s32.totalorder %s72, %s74
      %p81 = scmp.eq.s32.totalorder %s29, 3
      %p82 = por %p80, %p81
      %p83 = scmp.ne.s32.totalorder %s74, %s75
      %p84 = scmp.eq.s32.totalorder %s29, 0
      %p85 = por %p83, %p84
      %p86 = scmp.ne.s32.totalorder %s74, %s75
      %p87 = scmp.eq.s32.totalorder %s30, 3
      %p88 = por %p86, %p87
      %p90 = scmp.ne.s32.totalorder %s75, %s89
      %p91 = scmp.eq.s32.totalorder %s30, 0
      %p92 = por %p90, %p91
      %s94 = sadd.s32 %s93, 1
      %p97 = scmp.eq.s32.totalorder %s24, 3
      %p98 = scmp.ne.s32.totalorder %s93, %s95
      %p99 = scmp.eq.s32.totalorder %s24, 0
      %p100 = por %p98, %p99
      %p101 = scmp.ne.s32.totalorder %s93, %s95
      %p102 = scmp.eq.s32.totalorder %s29, 3
      %p103 = por %p101, %p102
      %p104 = scmp.ne.s32.totalorder %s95, %s96
      %p105 = scmp.eq.s32.totalorder %s29, 0
      %p106 = por %p104, %p105
      %p107 = scmp.ne.s32.totalorder %s95, %s96
      %p108 = scmp.eq.s32.totalorder %s30, 3
      %p109 = por %p107, %p108
      %p111 = scmp.ne.s32.totalorder %s96, %s110
      %p112 = scmp.eq.s32.totalorder %s30, 0
      %p113 = por %p111, %p112
      %s115 = sadd.s32 %s114, 1
      %p118 = scmp.eq.s32.totalorder %s24, 3
      %p119 = scmp.ne.s32.totalorder %s114, %s116
      %p120 = scmp.eq.s32.totalorder %s24, 0
      %p121 = por %p119, %p120
      %p122 = scmp.ne.s32.totalorder %s114, %s116
      %p123 = scmp.eq.s32.totalorder %s29, 3
      %p124 = por %p122, %p123
      %p125 = scmp.ne.s32.totalorder %s116, %s117
      %p126 = scmp.eq.s32.totalorder %s29, 0
      %p127 = por %p125, %p126
      %p128 = scmp.ne.s32.totalorder %s116, %s117
      %p129 = scmp.eq.s32.totalorder %s30, 3
      %p130 = por %p128, %p129
      %p132 = scmp.ne.s32.totalorder %s117, %s131
      %p133 = scmp.eq.s32.totalorder %s30, 0
      %p134 = por %p132, %p133
      %s136 = sadd.s32 %s135, 1
      %p139 = scmp.eq.s32.totalorder %s24, 3
      %p140 = scmp.ne.s32.totalorder %s135, %s137
      %p141 = scmp.eq.s32.totalorder %s24, 0
      %p142 = por %p140, %p141
      %p143 = scmp.ne.s32.totalorder %s135, %s137
      %p144 = scmp.eq.s32.totalorder %s29, 3
      %p145 = por %p143, %p144
      %p146 = scmp.ne.s32.totalorder %s137, %s138
      %p147 = scmp.eq.s32.totalorder %s29, 0
      %p148 = por %p146, %p147
      %p149 = scmp.ne.s32.totalorder %s137, %s138
      %p150 = scmp.eq.s32.totalorder %s30, 3
      %p151 = por %p149, %p150
      %p153 = scmp.ne.s32.totalorder %s138, %s152
      %p154 = scmp.eq.s32.totalorder %s30, 0
      %p155 = por %p153, %p154
      %s157 = sadd.s32 %s156, 1
      %p160 = scmp.eq.s32.totalorder %s24, 3
      %p161 = scmp.ne.s32.totalorder %s156, %s158
      %p162 = scmp.eq.s32.totalorder %s24, 0
      %p163 = por %p161, %p162
      %p164 = scmp.ne.s32.totalorder %s156, %s158
      %p165 = scmp.eq.s32.totalorder %s29, 3
      %p166 = por %p164, %p165
      %p167 = scmp.ne.s32.totalorder %s158, %s159
      %p168 = scmp.eq.s32.totalorder %s29, 0
      %p169 = por %p167, %p168
      %p170 = scmp.ne.s32.totalorder %s158, %s159
      %p171 = scmp.eq.s32.totalorder %s30, 3
      %p172 = por %p170, %p171
      %p174 = scmp.ne.s32.totalorder %s159, %s173
      %p175 = scmp.eq.s32.totalorder %s30, 0
      %p176 = por %p174, %p175
      %s178 = sadd.s32 %s177, 1
      %p181 = scmp.eq.s32.totalorder %s24, 3
      %p182 = scmp.ne.s32.totalorder %s177, %s179
      %p183 = scmp.eq.s32.totalorder %s24, 0
      %p184 = por %p182, %p183
      %p185 = scmp.ne.s32.totalorder %s177, %s179
      %p186 = scmp.eq.s32.totalorder %s29, 3
      %p187 = por %p185, %p186
      %p188 = scmp.ne.s32.totalorder %s179, %s180
      %p189 = scmp.eq.s32.totalorder %s29, 0
      %p190 = por %p188, %p189
      %p191 = scmp.ne.s32.totalorder %s179, %s180
      %p192 = scmp.eq.s32.totalorder %s30, 3
      %p193 = por %p191, %p192
      %p195 = scmp.ne.s32.totalorder %s180, %s194
      %p196 = scmp.eq.s32.totalorder %s30, 0
      %p197 = por %p195, %p196
      %s199 = sadd.s32 %s198, 1
      %p202 = scmp.eq.s32.totalorder %s24, 3
      %p203 = scmp.ne.s32.totalorder %s198, %s200
      %p204 = scmp.eq.s32.totalorder %s24, 0
      %p205 = por %p203, %p204
      %p206 = scmp.ne.s32.totalorder %s198, %s200
      %p207 = scmp.eq.s32.totalorder %s29, 3
      %p208 = por %p206, %p207
      %p209 = scmp.ne.s32.totalorder %s200, %s201
      %p210 = scmp.eq.s32.totalorder %s29, 0
      %p211 = por %p209, %p210
      %p212 = scmp.ne.s32.totalorder %s200, %s201
      %p213 = scmp.eq.s32.totalorder %s30, 3
      %p214 = por %p212, %p213
      %p216 = scmp.ne.s32.totalorder %s201, %s215
      %p217 = scmp.eq.s32.totalorder %s30, 0
      %p218 = por %p216, %p217
      %s220 = sadd.s32 %s219, 1
      %p223 = scmp.eq.s32.totalorder %s24, 3
      %p224 = scmp.ne.s32.totalorder %s219, %s221
      %p225 = scmp.eq.s32.totalorder %s24, 0
      %p226 = por %p224, %p225
      %p227 = scmp.ne.s32.totalorder %s219, %s221
      %p228 = scmp.eq.s32.totalorder %s29, 3
      %p229 = por %p227, %p228
      %p230 = scmp.ne.s32.totalorder %s221, %s222
      %p231 = scmp.eq.s32.totalorder %s29, 0
      %p232 = por %p230, %p231
      %p233 = scmp.ne.s32.totalorder %s221, %s222
      %p234 = scmp.eq.s32.totalorder %s30, 3
      %p235 = por %p233, %p234
      %p237 = scmp.ne.s32.totalorder %s222, %s236
      %p238 = scmp.eq.s32.totalorder %s30, 0
      %p239 = por %p237, %p238
      %s241 = sadd.s32 %s240, 1
      %p244 = scmp.eq.s32.totalorder %s24, 3
      %p245 = scmp.ne.s32.totalorder %s240, %s242
      %p246 = scmp.eq.s32.totalorder %s24, 0
      %p247 = por %p245, %p246
      %p248 = scmp.ne.s32.totalorder %s240, %s242
      %p249 = scmp.eq.s32.totalorder %s29, 3
      %p250 = por %p248, %p249
      %p251 = scmp.ne.s32.totalorder %s242, %s243
      %p252 = scmp.eq.s32.totalorder %s29, 0
      %p253 = por %p251, %p252
      %p254 = scmp.ne.s32.totalorder %s242, %s243
      %p255 = scmp.eq.s32.totalorder %s30, 3
      %p256 = por %p254, %p255
      %p258 = scmp.ne.s32.totalorder %s243, %s257
      %p259 = scmp.eq.s32.totalorder %s30, 0
      %p260 = por %p258, %p259
      %s262 = sadd.s32 %s261, 1
      %p265 = scmp.eq.s32.totalorder %s24, 3
      %p266 = scmp.ne.s32.totalorder %s261, %s263
      %p267 = scmp.eq.s32.totalorder %s24, 0
      %p268 = por %p266, %p267
      %p269 = scmp.ne.s32.totalorder %s261, %s263
      %p270 = scmp.eq.s32.totalorder %s29, 3
      %p271 = por %p269, %p270
      %p272 = scmp.ne.s32.totalorder %s263, %s264
      %p273 = scmp.eq.s32.totalorder %s29, 0
      %p274 = por %p272, %p273
      %p275 = scmp.ne.s32.totalorder %s263, %s264
      %p276 = scmp.eq.s32.totalorder %s30, 3
      %p277 = por %p275, %p276
      %p279 = scmp.ne.s32.totalorder %s264, %s278
      %p280 = scmp.eq.s32.totalorder %s30, 0
      %p281 = por %p279, %p280
      %s283 = sadd.s32 %s282, 1
      %p286 = scmp.eq.s32.totalorder %s24, 3
      %p287 = scmp.ne.s32.totalorder %s282, %s284
      %p288 = scmp.eq.s32.totalorder %s24, 0
      %p289 = por %p287, %p288
      %p290 = scmp.ne.s32.totalorder %s282, %s284
      %p291 = scmp.eq.s32.totalorder %s29, 3
      %p292 = por %p290, %p291
      %p293 = scmp.ne.s32.totalorder %s284, %s285
      %p294 = scmp.eq.s32.totalorder %s29, 0
      %p295 = por %p293, %p294
      %p296 = scmp.ne.s32.totalorder %s284, %s285
      %p297 = scmp.eq.s32.totalorder %s30, 3
      %p298 = por %p296, %p297
      %p300 = scmp.ne.s32.totalorder %s285, %s299
      %p301 = scmp.eq.s32.totalorder %s30, 0
      %p302 = por %p300, %p301
      %s303 = ssub.s32 %s31, %s43
      %s304 = ssub.s32 %s32, %s39
      %s305 = sor.u32 %s303, %s304
      %p306 = scmp.eq.s32.totalorder %s305, 0
      %s308 = sadd.s32 %s307, 1
      %s309 = scalar_select %p306, %s307, %s308
      %p312 = pneg %p306
      %p313 = scmp.eq.s32.totalorder %s24, 3
      %p314 = por %p312, %p313
      %p315 = scmp.ne.s32.totalorder %s307, %s310
      %p316 = scmp.eq.s32.totalorder %s24, 0
      %p317 = por %p315, %p316
      %p318 = scmp.ne.s32.totalorder %s307, %s310
      %p319 = scmp.eq.s32.totalorder %s29, 3
      %p320 = por %p318, %p319
      %p321 = scmp.ne.s32.totalorder %s310, %s311
      %p322 = scmp.eq.s32.totalorder %s29, 0
      %p323 = por %p321, %p322
      %p324 = scmp.ne.s32.totalorder %s310, %s311
      %p325 = scmp.eq.s32.totalorder %s30, 3
      %p326 = por %p324, %p325
      %p328 = scmp.ne.s32.totalorder %s311, %s327
      %p329 = scmp.eq.s32.totalorder %s30, 0
      %p330 = por %p328, %p329
      %p331 = scmp.le.s32.totalorder 1, %s24
      %p332 = scmp.lt.s32.totalorder %s24, 5
      %p333 = pnand %p331, %p332
      %p334 = pneg %p333
      // Predicated region
      $region9: #{tpu_custom_call.1} parent=5 // pred_check
        _
      $region10: #{tpu_custom_call.1} parent=5 // pred_check_branch
        %336 = sbr.rel (%p333) target = $region12
      $region11: #{tpu_custom_call.1} parent=5 // pred_region
        %s337 = ssub.s32 %s24, 1
        // Predicated region
        $region13: #{tpu_custom_call.1} parent=11 // pred_check
          %p338 = pneg %p85
        $region14: #{tpu_custom_call.1} parent=11 // pred_check_branch
          %340 = sbr.rel (%p338) target = $region16
        $region15: #{tpu_custom_call.1} parent=11 // pred_region
          %s342 = ssub.s32 6144, 6144
          %343 = vsyncadd [#allocation6], %s342
          %s344 = sshll.u32 [#allocation5], 4
          %s345 = int_to_ptr.vmem [resolvable:$true] %s344
          %350 = dma.hbm_to_vmem [thread:$0]  %s1, 6144, %s345, [#allocation6], 384, 384, 24
        $region16: #{tpu_custom_call.1} parent=11 // pred_fallthru
          _
        // Predicated region
        $region17: #{tpu_custom_call.1} parent=11 // pred_check
          %p351 = pneg %p106
        $region18: #{tpu_custom_call.1} parent=11 // pred_check_branch
          %353 = sbr.rel (%p351) target = $region20
        $region19: #{tpu_custom_call.1} parent=11 // pred_region
          _
        $region20: #{tpu_custom_call.1} parent=11 // pred_fallthru
          _
        // Predicated region
        $region21: #{tpu_custom_call.1} parent=11 // pred_check
          %p354 = pneg %p127
        $region22: #{tpu_custom_call.1} parent=11 // pred_check_branch
          %356 = sbr.rel (%p354) target = $region24
        $region23: #{tpu_custom_call.1} parent=11 // pred_region
          %s358 = ssub.s32 16, 16
          %359 = vsyncadd [#allocation9], %s358
          %s361 = sshll.u32 [#allocation8], 4
          %s362 = int_to_ptr.vmem [resolvable:$true] %s361
          %364 = dma.hbm_to_vmem [thread:$0]  %s3, 16, %s362, [#allocation9]
        $region24: #{tpu_custom_call.1} parent=11 // pred_fallthru
          _
        // Predicated region
        $region25: #{tpu_custom_call.1} parent=11 // pred_check
          %p365 = pneg %p148
        $region26: #{tpu_custom_call.1} parent=11 // pred_check_branch
          %367 = sbr.rel (%p365) target = $region28
        $region27: #{tpu_custom_call.1} parent=11 // pred_region
          %s369 = ssub.s32 256, 256
          %370 = vsyncadd [#allocation9], %s369
          %s372 = sshll.u32 [#allocation10], 4
          %s373 = int_to_ptr.vmem [resolvable:$true] %s372
          %375 = dma.hbm_to_vmem [thread:$0]  %s4, 256, %s373, [#allocation9]
        $region28: #{tpu_custom_call.1} parent=11 // pred_fallthru
          _
        // Predicated region
        $region29: #{tpu_custom_call.1} parent=11 // pred_check
          %p376 = pneg %p169
        $region30: #{tpu_custom_call.1} parent=11 // pred_check_branch
          %378 = sbr.rel (%p376) target = $region32
        $region31: #{tpu_custom_call.1} parent=11 // pred_region
          _
        $region32: #{tpu_custom_call.1} parent=11 // pred_fallthru
          _
        // Predicated region
        $region33: #{tpu_custom_call.1} parent=11 // pred_check
          %p379 = pneg %p190
        $region34: #{tpu_custom_call.1} parent=11 // pred_check_branch
          %381 = sbr.rel (%p379) target = $region36
        $region35: #{tpu_custom_call.1} parent=11 // pred_region
          %s383 = ssub.s32 16, 16
          %384 = vsyncadd [#allocation12], %s383
          %s386 = sshll.u32 [#allocation11], 4
          %s387 = int_to_ptr.vmem [resolvable:$true] %s386
          %389 = dma.hbm_to_vmem [thread:$0]  %s6, 16, %s387, [#allocation12]
        $region36: #{tpu_custom_call.1} parent=11 // pred_fallthru
          _
        // Predicated region
        $region37: #{tpu_custom_call.1} parent=11 // pred_check
          %p390 = pneg %p211
        $region38: #{tpu_custom_call.1} parent=11 // pred_check_branch
          %392 = sbr.rel (%p390) target = $region40
        $region39: #{tpu_custom_call.1} parent=11 // pred_region
          %s394 = ssub.s32 16, 16
          %395 = vsyncadd [#allocation12], %s394
          %s397 = sshll.u32 [#allocation13], 4
          %s398 = int_to_ptr.vmem [resolvable:$true] %s397
          %400 = dma.hbm_to_vmem [thread:$0]  %s7, 16, %s398, [#allocation12]
        $region40: #{tpu_custom_call.1} parent=11 // pred_fallthru
          _
        // Predicated region
        $region41: #{tpu_custom_call.1} parent=11 // pred_check
          %p401 = pneg %p232
        $region42: #{tpu_custom_call.1} parent=11 // pred_check_branch
          %403 = sbr.rel (%p401) target = $region44
        $region43: #{tpu_custom_call.1} parent=11 // pred_region
          _
        $region44: #{tpu_custom_call.1} parent=11 // pred_fallthru
          _
        // Predicated region
        $region45: #{tpu_custom_call.1} parent=11 // pred_check
          %p404 = pneg %p253
        $region46: #{tpu_custom_call.1} parent=11 // pred_check_branch
          %406 = sbr.rel (%p404) target = $region48
        $region47: #{tpu_custom_call.1} parent=11 // pred_region
          _
        $region48: #{tpu_custom_call.1} parent=11 // pred_fallthru
          _
        // Predicated region
        $region49: #{tpu_custom_call.1} parent=11 // pred_check
          %p407 = pneg %p274
        $region50: #{tpu_custom_call.1} parent=11 // pred_check_branch
          %409 = sbr.rel (%p407) target = $region52
        $region51: #{tpu_custom_call.1} parent=11 // pred_region
          _
        $region52: #{tpu_custom_call.1} parent=11 // pred_fallthru
          _
        // Predicated region
        $region53: #{tpu_custom_call.1} parent=11 // pred_check
          %p410 = pneg %p295
        $region54: #{tpu_custom_call.1} parent=11 // pred_check_branch
          %412 = sbr.rel (%p410) target = $region56
        $region55: #{tpu_custom_call.1} parent=11 // pred_region
          _
        $region56: #{tpu_custom_call.1} parent=11 // pred_fallthru
          _
      $region12: #{tpu_custom_call.1} parent=5 // pred_fallthru
        _
      %p413 = scmp.lt.s32.totalorder %s24, 4
      // Predicated region
      $region57: #{tpu_custom_call.1} parent=5 // pred_check
        %p414 = pneg %p413
      $region58: #{tpu_custom_call.1} parent=5 // pred_check_branch
        %416 = sbr.rel (%p414) target = $region60
      $region59: #{tpu_custom_call.1} parent=5 // pred_region
        // Predicated region
        $region61: #{tpu_custom_call.1} parent=59 // pred_check
          %p417 = pneg %p58
        $region62: #{tpu_custom_call.1} parent=59 // pred_check_branch
          %419 = sbr.rel (%p417) target = $region64
        $region63: #{tpu_custom_call.1} parent=59 // pred_region
          %p420 = scmp.lt.s32.totalorder %s31, 1
          %s421 = scalar_select %p420, %s31, 1
          %p422 = scmp.lt.s32.totalorder %s32, 1
          %s423 = scalar_select %p422, %s32, 1
          %s424 = smul.addr %s421, 2
          %s425 = sadd.s32 %s423, %s424
          %s426 = smul.addr %s425, 8
          %s427 = scalar_lea.vmem %s0, %s426
        $region64: #{tpu_custom_call.1} parent=59 // pred_fallthru
          _
      $region60: #{tpu_custom_call.1} parent=5 // pred_fallthru
        _
      %p428 = scmp.le.s32.totalorder 1, %s24
      %p429 = scmp.lt.s32.totalorder %s24, 5
      %p430 = pnand %p428, %p429
      %p431 = pneg %p430
      // Predicated region
      $region65: #{tpu_custom_call.1} parent=5 // pred_check
        _
      $region66: #{tpu_custom_call.1} parent=5 // pred_check_branch
        %433 = sbr.rel (%p430) target = $region68
      $region67: #{tpu_custom_call.1} parent=5 // pred_region
        %s434 = ssub.s32 %s24, 1
        // Predicated region
        $region69: #{tpu_custom_call.1} parent=67 // pred_check
          %p435 = pneg %p85
        $region70: #{tpu_custom_call.1} parent=67 // pred_check_branch
          %437 = sbr.rel (%p435) target = $region72
        $region71: #{tpu_custom_call.1} parent=67 // pred_region
          %438 = dma.done [#allocation6], 6144
        $region72: #{tpu_custom_call.1} parent=67 // pred_fallthru
          _
        // Predicated region
        $region73: #{tpu_custom_call.1} parent=67 // pred_check
          %p439 = pneg %p127
        $region74: #{tpu_custom_call.1} parent=67 // pred_check_branch
          %441 = sbr.rel (%p439) target = $region76
        $region75: #{tpu_custom_call.1} parent=67 // pred_region
          %442 = dma.done [#allocation9], 16
        $region76: #{tpu_custom_call.1} parent=67 // pred_fallthru
          _
        // Predicated region
        $region77: #{tpu_custom_call.1} parent=67 // pred_check
          %p443 = pneg %p148
        $region78: #{tpu_custom_call.1} parent=67 // pred_check_branch
          %445 = sbr.rel (%p443) target = $region80
        $region79: #{tpu_custom_call.1} parent=67 // pred_region
          %446 = dma.done [#allocation9], 256
        $region80: #{tpu_custom_call.1} parent=67 // pred_fallthru
          _
        // Predicated region
        $region81: #{tpu_custom_call.1} parent=67 // pred_check
          %p447 = pneg %p190
        $region82: #{tpu_custom_call.1} parent=67 // pred_check_branch
          %449 = sbr.rel (%p447) target = $region84
        $region83: #{tpu_custom_call.1} parent=67 // pred_region
          %450 = dma.done [#allocation12], 16
        $region84: #{tpu_custom_call.1} parent=67 // pred_fallthru
          _
        // Predicated region
        $region85: #{tpu_custom_call.1} parent=67 // pred_check
          %p451 = pneg %p211
        $region86: #{tpu_custom_call.1} parent=67 // pred_check_branch
          %453 = sbr.rel (%p451) target = $region88
        $region87: #{tpu_custom_call.1} parent=67 // pred_region
          %454 = dma.done [#allocation12], 16
        $region88: #{tpu_custom_call.1} parent=67 // pred_fallthru
          _
        %p455 = scmp.lt.s32.totalorder %s33, 1
        %s456 = scalar_select %p455, %s33, 1
        %p457 = scmp.lt.s32.totalorder %s34, 1
        %s458 = scalar_select %p457, %s34, 1
        %s459 = smul.addr %s456, 2
        %s460 = sadd.s32 %s458, %s459
        %s461 = smul.addr %s460, 8
        %s462 = scalar_lea.vmem %s0, %s461
        %p463 = pneg %p64
        %p464 = pneg %p61
        %p465 = pneg %p85
        %p466 = pneg %p82
        %p467 = pneg %p106
        %p468 = pneg %p103
        %p469 = pneg %p127
        %p470 = pneg %p124
        %p471 = pneg %p148
        %p472 = pneg %p145
        %p473 = pneg %p169
        %p474 = pneg %p166
        %p475 = pneg %p190
        %p476 = pneg %p187
        %p477 = pneg %p211
        %p478 = pneg %p208
        %p479 = pneg %p232
        %p480 = pneg %p229
        %p481 = pneg %p253
        %p482 = pneg %p250
        %p483 = pneg %p274
        %p484 = pneg %p271
        %p485 = pneg %p295
        %p486 = pneg %p292
        %p487 = pneg %p323
        %p488 = pneg %p320
        %s489 = sand.u32 %s310, 1
        %s490 = scalar_lea.sflag [#allocation7], %s489
        %s491 = sand.u32 %s310, 1
        %s492 = smul.addr %s491, 8
        %s493 = scalar_lea.vmem [#allocation14], %s492
        %p494 = scmp.lt.s32.totalorder %s33, 1
        %s495 = scalar_select %p494, %s33, 1
        %p496 = scmp.lt.s32.totalorder %s34, 1
        %s497 = scalar_select %p496, %s34, 1
        %s498 = smul.addr %s495, 2
        %s499 = sadd.s32 %s497, %s498
        %s500 = smul.addr %s499, 8
        %s501 = scalar_lea.vmem %s0, %s500
        %v503 = vld [vmem:[%s501] sm:$0xff]
        %p504 = scmp.eq.s32.totalorder %s34, 0
        // Predicated region
        $region89: #{tpu_custom_call.1} parent=67 // pred_check
          %p505 = pneg %p504
        $region90: #{tpu_custom_call.1} parent=67 // pred_check_branch
          %507 = sbr.rel (%p505) target = $region92
        $region91: #{tpu_custom_call.1} parent=67 // pred_region
          %508 = vst [vmem:[#allocation2] sm:$0xff] 0.0
          %509 = vst [vmem:[#allocation2 + $0x8] sm:$0xff] 0.0
          %510 = vst [vmem:[#allocation2 + $0x10] sm:$0xff] 0.0
          %511 = vst [vmem:[#allocation2 + $0x18] sm:$0xff] 0.0
          %vm512 = vcmask 523264
          %513 = vst.msk [vmem:[#allocation3] sm:$0xff] %vm512, 0.0
          %514 = vst.msk [vmem:[#allocation3 + $0x8] sm:$0xff] %vm512, 0.0
          %515 = vst.msk [vmem:[#allocation3 + $0x10] sm:$0xff] %vm512, 0.0
          %516 = vst.msk [vmem:[#allocation3 + $0x18] sm:$0xff] %vm512, 0.0
          %517 = vst.msk [vmem:[#allocation3 + $0x20] sm:$0xff] %vm512, 0.0
          %518 = vst.msk [vmem:[#allocation3 + $0x28] sm:$0xff] %vm512, 0.0
          %519 = vst.msk [vmem:[#allocation3 + $0x30] sm:$0xff] %vm512, 0.0
          %520 = vst.msk [vmem:[#allocation3 + $0x38] sm:$0xff] %vm512, 0.0
          %521 = vst.msk [vmem:[#allocation3 + $0x40] sm:$0xff] %vm512, 0.0
          %522 = vst.msk [vmem:[#allocation3 + $0x48] sm:$0xff] %vm512, 0.0
          %523 = vst.msk [vmem:[#allocation3 + $0x50] sm:$0xff] %vm512, 0.0
          %524 = vst.msk [vmem:[#allocation3 + $0x58] sm:$0xff] %vm512, 0.0
          %525 = vst.msk [vmem:[#allocation3 + $0x60] sm:$0xff] %vm512, 0.0
          %526 = vst.msk [vmem:[#allocation3 + $0x68] sm:$0xff] %vm512, 0.0
          %527 = vst.msk [vmem:[#allocation3 + $0x70] sm:$0xff] %vm512, 0.0
          %528 = vst.msk [vmem:[#allocation3 + $0x78] sm:$0xff] %vm512, 0.0
          %529 = vst.msk [vmem:[#allocation3 + $0x80] sm:$0xff] %vm512, 0.0
          %530 = vst.msk [vmem:[#allocation3 + $0x88] sm:$0xff] %vm512, 0.0
          %531 = vst.msk [vmem:[#allocation3 + $0x90] sm:$0xff] %vm512, 0.0
          %532 = vst.msk [vmem:[#allocation3 + $0x98] sm:$0xff] %vm512, 0.0
          %533 = vst.msk [vmem:[#allocation3 + $0xa0] sm:$0xff] %vm512, 0.0
          %534 = vst.msk [vmem:[#allocation3 + $0xa8] sm:$0xff] %vm512, 0.0
          %535 = vst.msk [vmem:[#allocation3 + $0xb0] sm:$0xff] %vm512, 0.0
          %536 = vst.msk [vmem:[#allocation3 + $0xb8] sm:$0xff] %vm512, 0.0
          %537 = vst.msk [vmem:[#allocation3 + $0xc0] sm:$0xff] %vm512, 0.0
          %538 = vst.msk [vmem:[#allocation3 + $0xc8] sm:$0xff] %vm512, 0.0
          %539 = vst.msk [vmem:[#allocation3 + $0xd0] sm:$0xff] %vm512, 0.0
          %540 = vst.msk [vmem:[#allocation3 + $0xd8] sm:$0xff] %vm512, 0.0
          %541 = vst.msk [vmem:[#allocation3 + $0xe0] sm:$0xff] %vm512, 0.0
          %542 = vst.msk [vmem:[#allocation3 + $0xe8] sm:$0xff] %vm512, 0.0
          %543 = vst.msk [vmem:[#allocation3 + $0xf0] sm:$0xff] %vm512, 0.0
          %544 = vst.msk [vmem:[#allocation3 + $0xf8] sm:$0xff] %vm512, 0.0
          %545 = vst.msk [vmem:[#allocation3 + $0x100] sm:$0xff] %vm512, 0.0
          %546 = vst.msk [vmem:[#allocation3 + $0x108] sm:$0xff] %vm512, 0.0
          %547 = vst.msk [vmem:[#allocation3 + $0x110] sm:$0xff] %vm512, 0.0
          %548 = vst.msk [vmem:[#allocation3 + $0x118] sm:$0xff] %vm512, 0.0
          %549 = vst.msk [vmem:[#allocation3 + $0x120] sm:$0xff] %vm512, 0.0
          %550 = vst.msk [vmem:[#allocation3 + $0x128] sm:$0xff] %vm512, 0.0
          %551 = vst.msk [vmem:[#allocation3 + $0x130] sm:$0xff] %vm512, 0.0
          %552 = vst.msk [vmem:[#allocation3 + $0x138] sm:$0xff] %vm512, 0.0
          %553 = vst.msk [vmem:[#allocation3 + $0x140] sm:$0xff] %vm512, 0.0
          %554 = vst.msk [vmem:[#allocation3 + $0x148] sm:$0xff] %vm512, 0.0
          %555 = vst.msk [vmem:[#allocation3 + $0x150] sm:$0xff] %vm512, 0.0
          %556 = vst.msk [vmem:[#allocation3 + $0x158] sm:$0xff] %vm512, 0.0
          %557 = vst.msk [vmem:[#allocation3 + $0x160] sm:$0xff] %vm512, 0.0
          %558 = vst.msk [vmem:[#allocation3 + $0x168] sm:$0xff] %vm512, 0.0
          %559 = vst.msk [vmem:[#allocation3 + $0x170] sm:$0xff] %vm512, 0.0
          %560 = vst.msk [vmem:[#allocation3 + $0x178] sm:$0xff] %vm512, 0.0
          %561 = vst.msk [vmem:[#allocation3 + $0x180] sm:$0xff] %vm512, 0.0
          %562 = vst.msk [vmem:[#allocation3 + $0x188] sm:$0xff] %vm512, 0.0
          %563 = vst.msk [vmem:[#allocation3 + $0x190] sm:$0xff] %vm512, 0.0
          %564 = vst.msk [vmem:[#allocation3 + $0x198] sm:$0xff] %vm512, 0.0
          %565 = vst.msk [vmem:[#allocation3 + $0x1a0] sm:$0xff] %vm512, 0.0
          %566 = vst.msk [vmem:[#allocation3 + $0x1a8] sm:$0xff] %vm512, 0.0
          %567 = vst.msk [vmem:[#allocation3 + $0x1b0] sm:$0xff] %vm512, 0.0
          %568 = vst.msk [vmem:[#allocation3 + $0x1b8] sm:$0xff] %vm512, 0.0
          %569 = vst.msk [vmem:[#allocation3 + $0x1c0] sm:$0xff] %vm512, 0.0
          %570 = vst.msk [vmem:[#allocation3 + $0x1c8] sm:$0xff] %vm512, 0.0
          %571 = vst.msk [vmem:[#allocation3 + $0x1d0] sm:$0xff] %vm512, 0.0
          %572 = vst.msk [vmem:[#allocation3 + $0x1d8] sm:$0xff] %vm512, 0.0
          %573 = vst.msk [vmem:[#allocation3 + $0x1e0] sm:$0xff] %vm512, 0.0
          %574 = vst.msk [vmem:[#allocation3 + $0x1e8] sm:$0xff] %vm512, 0.0
          %575 = vst.msk [vmem:[#allocation3 + $0x1f0] sm:$0xff] %vm512, 0.0
          %576 = vst.msk [vmem:[#allocation3 + $0x1f8] sm:$0xff] %vm512, 0.0
        $region92: #{tpu_custom_call.1} parent=67 // pred_fallthru
          _
        %v577 = vpack.c.bf16 %v503, %v503
        %v578 = vld [vmem:[#allocation5] sm:$0xff]
        %v579 = vld [vmem:[#allocation5 + $0x8] sm:$0xff]
        %v580 = vld [vmem:[#allocation5 + $0x10] sm:$0xff]
        %v581 = vld [vmem:[#allocation5 + $0x18] sm:$0xff]
        %v582 = vld [vmem:[#allocation5 + $0x20] sm:$0xff]
        %v583 = vld [vmem:[#allocation5 + $0x28] sm:$0xff]
        %v584 = vld [vmem:[#allocation5 + $0x30] sm:$0xff]
        %v585 = vld [vmem:[#allocation5 + $0x38] sm:$0xff]
        %v586 = vld [vmem:[#allocation5 + $0x40] sm:$0xff]
        %v587 = vld [vmem:[#allocation5 + $0x48] sm:$0xff]
        %v588 = vld [vmem:[#allocation5 + $0x50] sm:$0xff]
        %v589 = vld [vmem:[#allocation5 + $0x58] sm:$0xff]
        %v590 = vld [vmem:[#allocation5 + $0x60] sm:$0xff]
        %v591 = vld [vmem:[#allocation5 + $0x68] sm:$0xff]
        %v592 = vld [vmem:[#allocation5 + $0x70] sm:$0xff]
        %v593 = vld [vmem:[#allocation5 + $0x78] sm:$0xff]
        %v594 = vld [vmem:[#allocation5 + $0x80] sm:$0xff]
        %v595 = vld [vmem:[#allocation5 + $0x88] sm:$0xff]
        %v596 = vld [vmem:[#allocation5 + $0x90] sm:$0xff]
        %v597 = vld [vmem:[#allocation5 + $0x98] sm:$0xff]
        %v598 = vld [vmem:[#allocation5 + $0xa0] sm:$0xff]
        %v599 = vld [vmem:[#allocation5 + $0xa8] sm:$0xff]
        %v600 = vld [vmem:[#allocation5 + $0xb0] sm:$0xff]
        %v601 = vld [vmem:[#allocation5 + $0xb8] sm:$0xff]
        %v602 = vld [vmem:[#allocation5 + $0xc0] sm:$0xff]
        %v603 = vld [vmem:[#allocation5 + $0xc8] sm:$0xff]
        %v604 = vld [vmem:[#allocation5 + $0xd0] sm:$0xff]
        %v605 = vld [vmem:[#allocation5 + $0xd8] sm:$0xff]
        %v606 = vld [vmem:[#allocation5 + $0xe0] sm:$0xff]
        %v607 = vld [vmem:[#allocation5 + $0xe8] sm:$0xff]
        %v608 = vld [vmem:[#allocation5 + $0xf0] sm:$0xff]
        %v609 = vld [vmem:[#allocation5 + $0xf8] sm:$0xff]
        %v610 = vld [vmem:[#allocation5 + $0x100] sm:$0xff]
        %v611 = vld [vmem:[#allocation5 + $0x108] sm:$0xff]
        %v612 = vld [vmem:[#allocation5 + $0x110] sm:$0xff]
        %v613 = vld [vmem:[#allocation5 + $0x118] sm:$0xff]
        %v614 = vld [vmem:[#allocation5 + $0x120] sm:$0xff]
        %v615 = vld [vmem:[#allocation5 + $0x128] sm:$0xff]
        %v616 = vld [vmem:[#allocation5 + $0x130] sm:$0xff]
        %v617 = vld [vmem:[#allocation5 + $0x138] sm:$0xff]
        %v618 = vld [vmem:[#allocation5 + $0x140] sm:$0xff]
        %v619 = vld [vmem:[#allocation5 + $0x148] sm:$0xff]
        %v620 = vld [vmem:[#allocation5 + $0x150] sm:$0xff]
        %v621 = vld [vmem:[#allocation5 + $0x158] sm:$0xff]
        %v622 = vld [vmem:[#allocation5 + $0x160] sm:$0xff]
        %v623 = vld [vmem:[#allocation5 + $0x168] sm:$0xff]
        %v624 = vld [vmem:[#allocation5 + $0x170] sm:$0xff]
        %v625 = vld [vmem:[#allocation5 + $0x178] sm:$0xff]
        %v674 = vunpack.c.l.b16 %v578
        %v675 = vunpack.c.h.b16 %v578
        %v676 = vunpack.c.l.b16 %v579
        %v677 = vunpack.c.h.b16 %v579
        %v678 = vunpack.c.l.b16 %v580
        %v679 = vunpack.c.h.b16 %v580
        %v680 = vunpack.c.l.b16 %v581
        %v681 = vunpack.c.h.b16 %v581
        %v682 = vunpack.c.l.b16 %v582
        %v683 = vunpack.c.h.b16 %v582
        %v684 = vunpack.c.l.b16 %v583
        %v685 = vunpack.c.h.b16 %v583
        %v686 = vunpack.c.l.b16 %v584
        %v687 = vunpack.c.h.b16 %v584
        %v688 = vunpack.c.l.b16 %v585
        %v689 = vunpack.c.h.b16 %v585
        %v690 = vunpack.c.l.b16 %v586
        %v691 = vunpack.c.h.b16 %v586
        %v692 = vunpack.c.l.b16 %v587
        %v693 = vunpack.c.h.b16 %v587
        %v694 = vunpack.c.l.b16 %v588
        %v695 = vunpack.c.h.b16 %v588
        %v696 = vunpack.c.l.b16 %v589
        %v697 = vunpack.c.h.b16 %v589
        %v698 = vunpack.c.l.b16 %v590
        %v699 = vunpack.c.h.b16 %v590
        %v700 = vunpack.c.l.b16 %v591
        %v701 = vunpack.c.h.b16 %v591
        %v702 = vunpack.c.l.b16 %v592
        %v703 = vunpack.c.h.b16 %v592
        %v704 = vunpack.c.l.b16 %v593
        %v705 = vunpack.c.h.b16 %v593
        %v706 = vunpack.c.l.b16 %v594
        %v707 = vunpack.c.h.b16 %v594
        %v708 = vunpack.c.l.b16 %v595
        %v709 = vunpack.c.h.b16 %v595
        %v710 = vunpack.c.l.b16 %v596
        %v711 = vunpack.c.h.b16 %v596
        %v712 = vunpack.c.l.b16 %v597
        %v713 = vunpack.c.h.b16 %v597
        %v714 = vunpack.c.l.b16 %v598
        %v715 = vunpack.c.h.b16 %v598
        %v716 = vunpack.c.l.b16 %v599
        %v717 = vunpack.c.h.b16 %v599
        %v718 = vunpack.c.l.b16 %v600
        %v719 = vunpack.c.h.b16 %v600
        %v720 = vunpack.c.l.b16 %v601
        %v721 = vunpack.c.h.b16 %v601
        %v722 = vunpack.c.l.b16 %v602
        %v723 = vunpack.c.h.b16 %v602
        %v724 = vunpack.c.l.b16 %v603
        %v725 = vunpack.c.h.b16 %v603
        %v726 = vunpack.c.l.b16 %v604
        %v727 = vunpack.c.h.b16 %v604
        %v728 = vunpack.c.l.b16 %v605
        %v729 = vunpack.c.h.b16 %v605
        %v730 = vunpack.c.l.b16 %v606
        %v731 = vunpack.c.h.b16 %v606
        %v732 = vunpack.c.l.b16 %v607
        %v733 = vunpack.c.h.b16 %v607
        %v734 = vunpack.c.l.b16 %v608
        %v735 = vunpack.c.h.b16 %v608
        %v736 = vunpack.c.l.b16 %v609
        %v737 = vunpack.c.h.b16 %v609
        %v738 = vunpack.c.l.b16 %v610
        %v739 = vunpack.c.h.b16 %v610
        %v740 = vunpack.c.l.b16 %v611
        %v741 = vunpack.c.h.b16 %v611
        %v742 = vunpack.c.l.b16 %v612
        %v743 = vunpack.c.h.b16 %v612
        %v744 = vunpack.c.l.b16 %v613
        %v745 = vunpack.c.h.b16 %v613
        %v746 = vunpack.c.l.b16 %v614
        %v747 = vunpack.c.h.b16 %v614
        %v748 = vunpack.c.l.b16 %v615
        %v749 = vunpack.c.h.b16 %v615
        %v750 = vunpack.c.l.b16 %v616
        %v751 = vunpack.c.h.b16 %v616
        %v752 = vunpack.c.l.b16 %v617
        %v753 = vunpack.c.h.b16 %v617
        %v754 = vunpack.c.l.b16 %v618
        %v755 = vunpack.c.h.b16 %v618
        %v756 = vunpack.c.l.b16 %v619
        %v757 = vunpack.c.h.b16 %v619
        %v758 = vunpack.c.l.b16 %v620
        %v759 = vunpack.c.h.b16 %v620
        %v760 = vunpack.c.l.b16 %v621
        %v761 = vunpack.c.h.b16 %v621
        %v762 = vunpack.c.l.b16 %v622
        %v763 = vunpack.c.h.b16 %v622
        %v764 = vunpack.c.l.b16 %v623
        %v765 = vunpack.c.h.b16 %v623
        %v766 = vunpack.c.l.b16 %v624
        %v767 = vunpack.c.h.b16 %v624
        %v768 = vunpack.c.l.b16 %v625
        %v769 = vunpack.c.h.b16 %v625
        %v770 = vpack.c.b16 %v680, %v674
        %v771 = vpack.c.b16 %v681, %v675
        %v772 = vpack.c.b16 %v682, %v676
        %v773 = vpack.c.b16 %v683, %v677
        %v774 = vpack.c.b16 %v684, %v678
        %v775 = vpack.c.b16 %v685, %v679
        %v776 = vpack.c.b16 %v692, %v686
        %v777 = vpack.c.b16 %v693, %v687
        %v778 = vpack.c.b16 %v694, %v688
        %v779 = vpack.c.b16 %v695, %v689
        %v780 = vpack.c.b16 %v696, %v690
        %v781 = vpack.c.b16 %v697, %v691
        %v782 = vpack.c.b16 %v704, %v698
        %v783 = vpack.c.b16 %v705, %v699
        %v784 = vpack.c.b16 %v706, %v700
        %v785 = vpack.c.b16 %v707, %v701
        %v786 = vpack.c.b16 %v708, %v702
        %v787 = vpack.c.b16 %v709, %v703
        %v788 = vpack.c.b16 %v716, %v710
        %v789 = vpack.c.b16 %v717, %v711
        %v790 = vpack.c.b16 %v718, %v712
        %v791 = vpack.c.b16 %v719, %v713
        %v792 = vpack.c.b16 %v720, %v714
        %v793 = vpack.c.b16 %v721, %v715
        %v794 = vpack.c.b16 %v728, %v722
        %v795 = vpack.c.b16 %v729, %v723
        %v796 = vpack.c.b16 %v730, %v724
        %v797 = vpack.c.b16 %v731, %v725
        %v798 = vpack.c.b16 %v732, %v726
        %v799 = vpack.c.b16 %v733, %v727
        %v800 = vpack.c.b16 %v740, %v734
        %v801 = vpack.c.b16 %v741, %v735
        %v802 = vpack.c.b16 %v742, %v736
        %v803 = vpack.c.b16 %v743, %v737
        %v804 = vpack.c.b16 %v744, %v738
        %v805 = vpack.c.b16 %v745, %v739
        %v806 = vpack.c.b16 %v752, %v746
        %v807 = vpack.c.b16 %v753, %v747
        %v808 = vpack.c.b16 %v754, %v748
        %v809 = vpack.c.b16 %v755, %v749
        %v810 = vpack.c.b16 %v756, %v750
        %v811 = vpack.c.b16 %v757, %v751
        %v812 = vpack.c.b16 %v764, %v758
        %v813 = vpack.c.b16 %v765, %v759
        %v814 = vpack.c.b16 %v766, %v760
        %v815 = vpack.c.b16 %v767, %v761
        %v816 = vpack.c.b16 %v768, %v762
        %v817 = vpack.c.b16 %v769, %v763
        %866 = vmatprep.subr.bf16.mxu0 %v771
        %867 = vmatpush1.bf16.msra.mxu0 %v770
        %868 = vmatprep.subr.bf16.mxu0 %v777
        %869 = vmatpush1.bf16.msra.mxu0 %v776
        %870 = vmatprep.subr.bf16.mxu0 %v783
        %871 = vmatpush1.bf16.msra.mxu0 %v782
        %872 = vmatprep.subr.bf16.mxu0 %v789
        %873 = vmatpush1.bf16.msra.mxu0 %v788
        %874 = vmatprep.subr.bf16.mxu0 %v795
        %875 = vmatpush1.bf16.msra.mxu0 %v794
        %876 = vmatprep.subr.bf16.mxu0 %v801
        %877 = vmatpush1.bf16.msra.mxu0 %v800
        %878 = vmatprep.subr.bf16.mxu0 %v807
        %879 = vmatpush1.bf16.msra.mxu0 %v806
        %880 = vmatprep.subr.bf16.mxu0 %v813
        %881 = vmatpush1.bf16.msra.mxu0 %v812
        %882 = vmatprep.subr.bf16.mxu0 0
        %883 = vmatpush1.bf16.msra.mxu0 0
        %884 = vmatprep.subr.bf16.mxu0 0
        %885 = vmatpush1.bf16.msra.mxu0 0
        %886 = vmatprep.subr.bf16.mxu0 0
        %887 = vmatpush1.bf16.msra.mxu0 0
        %888 = vmatprep.subr.bf16.mxu0 0
        %889 = vmatpush1.bf16.msra.mxu0 0
        %890 = vmatprep.subr.bf16.mxu0 0
        %891 = vmatpush1.bf16.msra.mxu0 0
        %892 = vmatprep.subr.bf16.mxu0 0
        %893 = vmatpush1.bf16.msra.mxu0 0
        %894 = vmatprep.subr.bf16.mxu0 0
        %895 = vmatpush1.bf16.msra.mxu0 0
        %896 = vmatprep.subr.bf16.mxu0 0
        %897 = vmatpush1.bf16.msra.mxu0 0
        %898 = vmatprep.mubr.bf16.mxu0 0
        %899 = vmatmul.mubr.bf16.gmra.mrb[0].mxu0 %v577
        %v900 = vpop.f32.mrb[0].mxu0
        %v901 = vadd.f32 0.0, %v900
        %v902 = vpop.f32.mrb[0].mxu0
        %v903 = vadd.f32 0.0, %v902
        %v904 = vpop.f32.mrb[0].mxu0
        %v905 = vpop.f32.mrb[0].mxu0
        %906 = vdwg.mxu0
        %907 = vmatprep.subr.bf16.mxu0 %v773
        %908 = vmatpush1.bf16.msra.mxu0 %v772
        %909 = vmatprep.subr.bf16.mxu0 %v779
        %910 = vmatpush1.bf16.msra.mxu0 %v778
        %911 = vmatprep.subr.bf16.mxu0 %v785
        %912 = vmatpush1.bf16.msra.mxu0 %v784
        %913 = vmatprep.subr.bf16.mxu0 %v791
        %914 = vmatpush1.bf16.msra.mxu0 %v790
        %915 = vmatprep.subr.bf16.mxu0 %v797
        %916 = vmatpush1.bf16.msra.mxu0 %v796
        %917 = vmatprep.subr.bf16.mxu0 %v803
        %918 = vmatpush1.bf16.msra.mxu0 %v802
        %919 = vmatprep.subr.bf16.mxu0 %v809
        %920 = vmatpush1.bf16.msra.mxu0 %v808
        %921 = vmatprep.subr.bf16.mxu0 %v815
        %922 = vmatpush1.bf16.msra.mxu0 %v814
        %923 = vmatprep.subr.bf16.mxu0 0
        %924 = vmatpush1.bf16.msra.mxu0 0
        %925 = vmatprep.subr.bf16.mxu0 0
        %926 = vmatpush1.bf16.msra.mxu0 0
        %927 = vmatprep.subr.bf16.mxu0 0
        %928 = vmatpush1.bf16.msra.mxu0 0
        %929 = vmatprep.subr.bf16.mxu0 0
        %930 = vmatpush1.bf16.msra.mxu0 0
        %931 = vmatprep.subr.bf16.mxu0 0
        %932 = vmatpush1.bf16.msra.mxu0 0
        %933 = vmatprep.subr.bf16.mxu0 0
        %934 = vmatpush1.bf16.msra.mxu0 0
        %935 = vmatprep.subr.bf16.mxu0 0
        %936 = vmatpush1.bf16.msra.mxu0 0
        %937 = vmatprep.subr.bf16.mxu0 0
        %938 = vmatpush1.bf16.msra.mxu0 0
        %939 = vmatprep.mubr.bf16.mxu0 0
        %940 = vmatmul.mubr.bf16.gmra.mrb[0].mxu0 %v577
        %v941 = vpop.f32.mrb[0].mxu0
        %v942 = vadd.f32 0.0, %v941
        %v943 = vpop.f32.mrb[0].mxu0
        %v944 = vadd.f32 0.0, %v943
        %v945 = vpop.f32.mrb[0].mxu0
        %v946 = vpop.f32.mrb[0].mxu0
        %947 = vdwg.mxu0
        %948 = vmatprep.subr.bf16.mxu0 %v775
        %949 = vmatpush1.bf16.msra.mxu0 %v774
        %950 = vmatprep.subr.bf16.mxu0 %v781
        %951 = vmatpush1.bf16.msra.mxu0 %v780
        %952 = vmatprep.subr.bf16.mxu0 %v787
        %953 = vmatpush1.bf16.msra.mxu0 %v786
        %954 = vmatprep.subr.bf16.mxu0 %v793
        %955 = vmatpush1.bf16.msra.mxu0 %v792
        %956 = vmatprep.subr.bf16.mxu0 %v799
        %957 = vmatpush1.bf16.msra.mxu0 %v798
        %958 = vmatprep.subr.bf16.mxu0 %v805
        %959 = vmatpush1.bf16.msra.mxu0 %v804
        %960 = vmatprep.subr.bf16.mxu0 %v811
        %961 = vmatpush1.bf16.msra.mxu0 %v810
        %962 = vmatprep.subr.bf16.mxu0 %v817
        %963 = vmatpush1.bf16.msra.mxu0 %v816
        %964 = vmatprep.subr.bf16.mxu0 0
        %965 = vmatpush1.bf16.msra.mxu0 0
        %966 = vmatprep.subr.bf16.mxu0 0
        %967 = vmatpush1.bf16.msra.mxu0 0
        %968 = vmatprep.subr.bf16.mxu0 0
        %969 = vmatpush1.bf16.msra.mxu0 0
        %970 = vmatprep.subr.bf16.mxu0 0
        %971 = vmatpush1.bf16.msra.mxu0 0
        %972 = vmatprep.subr.bf16.mxu0 0
        %973 = vmatpush1.bf16.msra.mxu0 0
        %974 = vmatprep.subr.bf16.mxu0 0
        %975 = vmatpush1.bf16.msra.mxu0 0
        %976 = vmatprep.subr.bf16.mxu0 0
        %977 = vmatpush1.bf16.msra.mxu0 0
        %978 = vmatprep.subr.bf16.mxu0 0
        %979 = vmatpush1.bf16.msra.mxu0 0
        %980 = vmatprep.mubr.bf16.mxu0 0
        %981 = vmatmul.mubr.bf16.gmra.mrb[0].mxu0 %v577
        %v982 = vpop.f32.mrb[0].mxu0
        %v983 = vadd.f32 0.0, %v982
        %v984 = vpop.f32.mrb[0].mxu0
        %v985 = vadd.f32 0.0, %v984
        %v986 = vpop.f32.mrb[0].mxu0
        %v987 = vpop.f32.mrb[0].mxu0
        %988 = vdwg.mxu0
        %v989 = vld [vmem:[%s2] sm:$0xff]
        %v990 = vld [vmem:[%s2 + $0x8] sm:$0xff]
        %v991 = vld [vmem:[%s2 + $0x10] sm:$0xff]
        %v992 = vld [vmem:[%s2 + $0x18] sm:$0xff]
        %v993 = vld [vmem:[%s2 + $0x20] sm:$0xff]
        %v994 = vld [vmem:[%s2 + $0x28] sm:$0xff]
        %v995 = vld [vmem:[%s2 + $0x30] sm:$0xff]
        %v996 = vld [vmem:[%s2 + $0x38] sm:$0xff]
        %v997 = vld [vmem:[%s2 + $0x40] sm:$0xff]
        %v998 = vld [vmem:[%s2 + $0x48] sm:$0xff]
        %v999 = vld [vmem:[%s2 + $0x50] sm:$0xff]
        %v1000 = vld [vmem:[%s2 + $0x58] sm:$0xff]
        %v1001 = vld [vmem:[%s2 + $0x60] sm:$0xff]
        %v1002 = vld [vmem:[%s2 + $0x68] sm:$0xff]
        %v1003 = vld [vmem:[%s2 + $0x70] sm:$0xff]
        %v1004 = vld [vmem:[%s2 + $0x78] sm:$0xff]
        %v1005 = vld [vmem:[#allocation8] sm:$0x1]
        %v1007 = vlaneseq
        %v1008 = vshrl.u32 %v1007, 7
        %v1009 = vsub.s32 0, %v1008
        %v1010 = vrot.slane %v1005, %v1009
        %1012 = vmatprep.subr.mxu0 0.0
        %1013 = vmatpush1.msra.mxu0 %v989
        %1014 = vmatprep.subr.mxu0 0.0
        %1015 = vmatpush1.msra.mxu0 %v990
        %1016 = vmatprep.subr.mxu0 0.0
        %1017 = vmatpush1.msra.mxu0 %v991
        %1018 = vmatprep.subr.mxu0 0.0
        %1019 = vmatpush1.msra.mxu0 %v992
        %1020 = vmatprep.subr.mxu0 0.0
        %1021 = vmatpush1.msra.mxu0 %v993
        %1022 = vmatprep.subr.mxu0 0.0
        %1023 = vmatpush1.msra.mxu0 %v994
        %1024 = vmatprep.subr.mxu0 0.0
        %1025 = vmatpush1.msra.mxu0 %v995
        %1026 = vmatprep.subr.mxu0 0.0
        %1027 = vmatpush1.msra.mxu0 %v996
        %1028 = vmatprep.subr.mxu0 0.0
        %1029 = vmatpush1.msra.mxu0 %v997
        %1030 = vmatprep.subr.mxu0 0.0
        %1031 = vmatpush1.msra.mxu0 %v998
        %1032 = vmatprep.subr.mxu0 0.0
        %1033 = vmatpush1.msra.mxu0 %v999
        %1034 = vmatprep.subr.mxu0 0.0
        %1035 = vmatpush1.msra.mxu0 %v1000
        %1036 = vmatprep.subr.mxu0 0.0
        %1037 = vmatpush1.msra.mxu0 %v1001
        %1038 = vmatprep.subr.mxu0 0.0
        %1039 = vmatpush1.msra.mxu0 %v1002
        %1040 = vmatprep.subr.mxu0 0.0
        %1041 = vmatpush1.msra.mxu0 %v1003
        %1042 = vmatprep.subr.mxu0 0.0
        %1043 = vmatpush1.msra.mxu0 %v1004
        %1044 = vmatprep.subr.mxu0 0.0
        %1045 = vmatpush1.msra.mxu0 0.0
        %1046 = vmatprep.subr.mxu0 0.0
        %1047 = vmatpush1.msra.mxu0 0.0
        %1048 = vmatprep.subr.mxu0 0.0
        %1049 = vmatpush1.msra.mxu0 0.0
        %1050 = vmatprep.subr.mxu0 0.0
        %1051 = vmatpush1.msra.mxu0 0.0
        %1052 = vmatprep.subr.mxu0 0.0
        %1053 = vmatpush1.msra.mxu0 0.0
        %1054 = vmatprep.subr.mxu0 0.0
        %1055 = vmatpush1.msra.mxu0 0.0
        %1056 = vmatprep.subr.mxu0 0.0
        %1057 = vmatpush1.msra.mxu0 0.0
        %1058 = vmatprep.subr.mxu0 0.0
        %1059 = vmatpush1.msra.mxu0 0.0
        %1060 = vmatprep.subr.mxu0 0.0
        %1061 = vmatpush1.msra.mxu0 0.0
        %1062 = vmatprep.subr.mxu0 0.0
        %1063 = vmatpush1.msra.mxu0 0.0
        %1064 = vmatprep.subr.mxu0 0.0
        %1065 = vmatpush1.msra.mxu0 0.0
        %1066 = vmatprep.subr.mxu0 0.0
        %1067 = vmatpush1.msra.mxu0 0.0
        %1068 = vmatprep.subr.mxu0 0.0
        %1069 = vmatpush1.msra.mxu0 0.0
        %1070 = vmatprep.subr.mxu0 0.0
        %1071 = vmatpush1.msra.mxu0 0.0
        %1072 = vmatprep.subr.mxu0 0.0
        %1073 = vmatpush1.msra.mxu0 0.0
        %1074 = vmatprep.subr.mxu0 0.0
        %1075 = vmatpush1.msra.mxu0 0.0
        %1076 = vmatprep.mubr.f32.mxu0 0.0
        %1077 = vmatmul.mubr.f32.gmra.mrb[0].mxu0 %v503
        %v1078 = vpop.f32.mrb[0].mxu0
        %v1079 = vadd.f32 %v1010, %v1078
        %v1080 = vpop.f32.mrb[0].mxu0
        %1081 = vdwg.mxu0
        %vm1082 = vcmp.gt.f32.partialorder %v1079, 20.0
        %v1083 = vmin.f32 %v1079, 20.0
        %v1084 = vmul.f32 %v1083, 1.442695
        %v1085 = vpow.pop %v1084
        %v1086 = vadd.f32 %v1085, 1.0
        %v1087 = vlog2.pop %v1086
        %v1088 = vmul.f32 %v1087, 0.6931472
        %v1089 = vmul.f32 -0.5, %v1085
        %v1090 = vadd.f32 %v1089, 1.0
        %v1091 = vmul.f32 %v1090, %v1085
        %v1092 = vand.u32 2147483647, %v1085
        %vm1093 = vcmp.lt.f32.partialorder %v1092, 0.0004427343
        %v1094 = vsel %vm1093, %v1091, %v1088
        %v1095 = vsel %vm1082, %v1079, %v1094
        %1096 = vst [vmem:[#allocation2 + $0x20] sm:$0xff] %v942
        %1097 = vst [vmem:[#allocation2 + $0x28] sm:$0xff] %v944
        %1098 = vst [vmem:[#allocation2 + $0x30] sm:$0xff] %v983
        %1099 = vst [vmem:[#allocation2 + $0x38] sm:$0xff] %v985
        %v1100 = vld [vmem:[%s5] sm:$0xf]
        %v1101 = vld [vmem:[#allocation2] sm:$0xe0]
        %v1102 = vld [vmem:[#allocation2 + $0x8] sm:$0xe0]
        %v1103 = vld [vmem:[#allocation2 + $0x10] sm:$0xe0]
        %v1104 = vld [vmem:[#allocation2 + $0x18] sm:$0xe0]
        %v1105 = vld [vmem:[#allocation2 + $0x20] sm:$0x1f]
        %v1106 = vld [vmem:[#allocation2 + $0x28] sm:$0x1f]
        %v1107 = vld [vmem:[#allocation2 + $0x30] sm:$0x1f]
        %v1108 = vld [vmem:[#allocation2 + $0x38] sm:$0x1f]
        %v1109 = vld [vmem:[#allocation10] ss:$4 sm:$0xf]
        %v1111 = vlaneseq
        %v1112 = vshrl.u32 %v1111, 7
        %v1113 = vsub.s32 0, %v1112
        %v1114 = vrot.slane %v1109, %v1113
        %v1115 = vlaneseq
        %v1116 = vshrl.u32 %v1115, 7
        %v1117 = vsub.s32 1, %v1116
        %v1118 = vrot.slane %v1109, %v1117
        %v1119 = vlaneseq
        %v1120 = vshrl.u32 %v1119, 7
        %v1121 = vsub.s32 2, %v1120
        %v1122 = vrot.slane %v1109, %v1121
        %v1123 = vlaneseq
        %v1124 = vshrl.u32 %v1123, 7
        %v1125 = vsub.s32 3, %v1124
        %v1126 = vrot.slane %v1109, %v1125
        %v1131 = vmul.f32 %v1101, %v1114
        %v1132 = vmul.f32 %v1102, %v1118
        %v1133 = vmul.f32 %v1103, %v1122
        %v1134 = vmul.f32 %v1104, %v1126
        %v1135 = vmul.f32 %v1105, %v1114
        %v1136 = vmul.f32 %v1106, %v1118
        %v1137 = vmul.f32 %v1107, %v1122
        %v1138 = vmul.f32 %v1108, %v1126
        %v1140 = vlaneseq
        %v1141 = vshrl.u32 %v1140, 7
        %v1142 = vsub.s32 0, %v1141
        %v1143 = vrot.slane %v1100, %v1142
        %v1144 = vlaneseq
        %v1145 = vshrl.u32 %v1144, 7
        %v1146 = vsub.s32 1, %v1145
        %v1147 = vrot.slane %v1100, %v1146
        %v1148 = vlaneseq
        %v1149 = vshrl.u32 %v1148, 7
        %v1150 = vsub.s32 2, %v1149
        %v1151 = vrot.slane %v1100, %v1150
        %v1152 = vlaneseq
        %v1153 = vshrl.u32 %v1152, 7
        %v1154 = vsub.s32 3, %v1153
        %v1155 = vrot.slane %v1100, %v1154
        %v1160 = vadd.f32 %v1143, %v1131
        %v1161 = vadd.f32 %v1147, %v1132
        %v1162 = vadd.f32 %v1151, %v1133
        %v1163 = vadd.f32 %v1155, %v1134
        %v1164 = vadd.f32 %v1143, %v1135
        %v1165 = vadd.f32 %v1147, %v1136
        %v1166 = vadd.f32 %v1151, %v1137
        %v1167 = vadd.f32 %v1155, %v1138
        %v1168 = vld [vmem:[#allocation2] sm:$0xc0]
        %v1169 = vld [vmem:[#allocation2 + $0x8] sm:$0xc0]
        %v1170 = vld [vmem:[#allocation2 + $0x10] sm:$0xc0]
        %v1171 = vld [vmem:[#allocation2 + $0x18] sm:$0xc0]
        %v1172 = vld [vmem:[#allocation2 + $0x20] sm:$0x3f]
        %v1173 = vld [vmem:[#allocation2 + $0x28] sm:$0x3f]
        %v1174 = vld [vmem:[#allocation2 + $0x30] sm:$0x3f]
        %v1175 = vld [vmem:[#allocation2 + $0x38] sm:$0x3f]
        %s1176 = scalar_lea.vmem [#allocation10], 1
        %v1177 = vld [vmem:[%s1176] ss:$4 sm:$0xf]
        %v1179 = vlaneseq
        %v1180 = vshrl.u32 %v1179, 7
        %v1181 = vsub.s32 0, %v1180
        %v1182 = vrot.slane %v1177, %v1181
        %v1183 = vlaneseq
        %v1184 = vshrl.u32 %v1183, 7
        %v1185 = vsub.s32 1, %v1184
        %v1186 = vrot.slane %v1177, %v1185
        %v1187 = vlaneseq
        %v1188 = vshrl.u32 %v1187, 7
        %v1189 = vsub.s32 2, %v1188
        %v1190 = vrot.slane %v1177, %v1189
        %v1191 = vlaneseq
        %v1192 = vshrl.u32 %v1191, 7
        %v1193 = vsub.s32 3, %v1192
        %v1194 = vrot.slane %v1177, %v1193
        %v1199 = vmul.f32 %v1168, %v1182
        %v1200 = vmul.f32 %v1169, %v1186
        %v1201 = vmul.f32 %v1170, %v1190
        %v1202 = vmul.f32 %v1171, %v1194
        %v1203 = vmul.f32 %v1172, %v1182
        %v1204 = vmul.f32 %v1173, %v1186
        %v1205 = vmul.f32 %v1174, %v1190
        %v1206 = vmul.f32 %v1175, %v1194
        %vm1215 = vcmask 1046528
        %v1216 = vrot.slane %v1199, 1
        %v1217 = vrot.slane %v1203, 1
        %v1218 = vsel %vm1215, %v1216, %v1217
        %v1219 = vrot.slane %v1200, 1
        %v1220 = vrot.slane %v1204, 1
        %v1221 = vsel %vm1215, %v1219, %v1220
        %v1222 = vrot.slane %v1201, 1
        %v1223 = vrot.slane %v1205, 1
        %v1224 = vsel %vm1215, %v1222, %v1223
        %v1225 = vrot.slane %v1202, 1
        %v1226 = vrot.slane %v1206, 1
        %v1227 = vsel %vm1215, %v1225, %v1226
        %v1236 = vadd.f32 %v1160, %v1218
        %v1237 = vadd.f32 %v1161, %v1221
        %v1238 = vadd.f32 %v1162, %v1224
        %v1239 = vadd.f32 %v1163, %v1227
        %v1240 = vadd.f32 %v1164, %v1217
        %v1241 = vadd.f32 %v1165, %v1220
        %v1242 = vadd.f32 %v1166, %v1223
        %v1243 = vadd.f32 %v1167, %v1226
        %v1244 = vld [vmem:[#allocation2] sm:$0x80]
        %v1245 = vld [vmem:[#allocation2 + $0x8] sm:$0x80]
        %v1246 = vld [vmem:[#allocation2 + $0x10] sm:$0x80]
        %v1247 = vld [vmem:[#allocation2 + $0x18] sm:$0x80]
        %v1248 = vld [vmem:[#allocation2 + $0x20] sm:$0x7f]
        %v1249 = vld [vmem:[#allocation2 + $0x28] sm:$0x7f]
        %v1250 = vld [vmem:[#allocation2 + $0x30] sm:$0x7f]
        %v1251 = vld [vmem:[#allocation2 + $0x38] sm:$0x7f]
        %s1252 = scalar_lea.vmem [#allocation10], 2
        %v1253 = vld [vmem:[%s1252] ss:$4 sm:$0xf]
        %v1255 = vlaneseq
        %v1256 = vshrl.u32 %v1255, 7
        %v1257 = vsub.s32 0, %v1256
        %v1258 = vrot.slane %v1253, %v1257
        %v1259 = vlaneseq
        %v1260 = vshrl.u32 %v1259, 7
        %v1261 = vsub.s32 1, %v1260
        %v1262 = vrot.slane %v1253, %v1261
        %v1263 = vlaneseq
        %v1264 = vshrl.u32 %v1263, 7
        %v1265 = vsub.s32 2, %v1264
        %v1266 = vrot.slane %v1253, %v1265
        %v1267 = vlaneseq
        %v1268 = vshrl.u32 %v1267, 7
        %v1269 = vsub.s32 3, %v1268
        %v1270 = vrot.slane %v1253, %v1269
        %v1275 = vmul.f32 %v1244, %v1258
        %v1276 = vmul.f32 %v1245, %v1262
        %v1277 = vmul.f32 %v1246, %v1266
        %v1278 = vmul.f32 %v1247, %v1270
        %v1279 = vmul.f32 %v1248, %v1258
        %v1280 = vmul.f32 %v1249, %v1262
        %v1281 = vmul.f32 %v1250, %v1266
        %v1282 = vmul.f32 %v1251, %v1270
        %vm1291 = vcmask 1045504
        %v1292 = vrot.slane %v1275, 2
        %v1293 = vrot.slane %v1279, 2
        %v1294 = vsel %vm1291, %v1292, %v1293
        %v1295 = vrot.slane %v1276, 2
        %v1296 = vrot.slane %v1280, 2
        %v1297 = vsel %vm1291, %v1295, %v1296
        %v1298 = vrot.slane %v1277, 2
        %v1299 = vrot.slane %v1281, 2
        %v1300 = vsel %vm1291, %v1298, %v1299
        %v1301 = vrot.slane %v1278, 2
        %v1302 = vrot.slane %v1282, 2
        %v1303 = vsel %vm1291, %v1301, %v1302
        %v1312 = vadd.f32 %v1236, %v1294
        %v1313 = vadd.f32 %v1237, %v1297
        %v1314 = vadd.f32 %v1238, %v1300
        %v1315 = vadd.f32 %v1239, %v1303
        %v1316 = vadd.f32 %v1240, %v1293
        %v1317 = vadd.f32 %v1241, %v1296
        %v1318 = vadd.f32 %v1242, %v1299
        %v1319 = vadd.f32 %v1243, %v1302
        %v1320 = vld [vmem:[#allocation2 + $0x20] sm:$0xff]
        %v1321 = vld [vmem:[#allocation2 + $0x28] sm:$0xff]
        %v1322 = vld [vmem:[#allocation2 + $0x30] sm:$0xff]
        %v1323 = vld [vmem:[#allocation2 + $0x38] sm:$0xff]
        %s1324 = scalar_lea.vmem [#allocation10], 3
        %v1325 = vld [vmem:[%s1324] ss:$4 sm:$0xf]
        %v1327 = vlaneseq
        %v1328 = vshrl.u32 %v1327, 7
        %v1329 = vsub.s32 0, %v1328
        %v1330 = vrot.slane %v1325, %v1329
        %v1331 = vlaneseq
        %v1332 = vshrl.u32 %v1331, 7
        %v1333 = vsub.s32 1, %v1332
        %v1334 = vrot.slane %v1325, %v1333
        %v1335 = vlaneseq
        %v1336 = vshrl.u32 %v1335, 7
        %v1337 = vsub.s32 2, %v1336
        %v1338 = vrot.slane %v1325, %v1337
        %v1339 = vlaneseq
        %v1340 = vshrl.u32 %v1339, 7
        %v1341 = vsub.s32 3, %v1340
        %v1342 = vrot.slane %v1325, %v1341
        %v1347 = vmul.f32 %v1320, %v1330
        %v1348 = vmul.f32 %v1321, %v1334
        %v1349 = vmul.f32 %v1322, %v1338
        %v1350 = vmul.f32 %v1323, %v1342
        %v1355 = vrot.slane %v1347, 3
        %v1356 = vrot.slane %v1348, 3
        %v1357 = vrot.slane %v1349, 3
        %v1358 = vrot.slane %v1350, 3
        %v1363 = vadd.f32 %v1312, %v1355
        %v1364 = vadd.f32 %v1313, %v1356
        %v1365 = vadd.f32 %v1314, %v1357
        %v1366 = vadd.f32 %v1315, %v1358
        %v1367 = vadd.f32 %v1316, %v1355
        %v1368 = vadd.f32 %v1317, %v1356
        %v1369 = vadd.f32 %v1318, %v1357
        %v1370 = vadd.f32 %v1319, %v1358
        %v1371 = vxor.u32 %v1363, 2147483648
        %v1372 = vxor.u32 %v1364, 2147483648
        %v1373 = vxor.u32 %v1365, 2147483648
        %v1374 = vxor.u32 %v1366, 2147483648
        %v1375 = vxor.u32 %v1367, 2147483648
        %v1376 = vxor.u32 %v1368, 2147483648
        %v1377 = vxor.u32 %v1369, 2147483648
        %v1378 = vxor.u32 %v1370, 2147483648
        %v1379 = vmul.f32 %v1371, 1.442695
        %v1380 = vpow.pop %v1379
        %v1381 = vmul.f32 %v1372, 1.442695
        %v1382 = vpow.pop %v1381
        %v1383 = vmul.f32 %v1373, 1.442695
        %v1384 = vpow.pop %v1383
        %v1385 = vmul.f32 %v1374, 1.442695
        %v1386 = vpow.pop %v1385
        %v1387 = vmul.f32 %v1375, 1.442695
        %v1388 = vpow.pop %v1387
        %v1389 = vmul.f32 %v1376, 1.442695
        %v1390 = vpow.pop %v1389
        %v1391 = vmul.f32 %v1377, 1.442695
        %v1392 = vpow.pop %v1391
        %v1393 = vmul.f32 %v1378, 1.442695
        %v1394 = vpow.pop %v1393
        %v1395 = vadd.f32 %v1380, 1.0
        %v1396 = vadd.f32 %v1382, 1.0
        %v1397 = vadd.f32 %v1384, 1.0
        %v1398 = vadd.f32 %v1386, 1.0
        %v1399 = vadd.f32 %v1388, 1.0
        %v1400 = vadd.f32 %v1390, 1.0
        %v1401 = vadd.f32 %v1392, 1.0
        %v1402 = vadd.f32 %v1394, 1.0
        %v1403 = vrcp.pop %v1395
        %v1404 = vmul.f32 1.0, %v1403
        %v1405 = vrcp.pop %v1396
        %v1406 = vmul.f32 1.0, %v1405
        %v1407 = vrcp.pop %v1397
        %v1408 = vmul.f32 1.0, %v1407
        %v1409 = vrcp.pop %v1398
        %v1410 = vmul.f32 1.0, %v1409
        %v1411 = vrcp.pop %v1399
        %v1412 = vmul.f32 1.0, %v1411
        %v1413 = vrcp.pop %v1400
        %v1414 = vmul.f32 1.0, %v1413
        %v1415 = vrcp.pop %v1401
        %v1416 = vmul.f32 1.0, %v1415
        %v1417 = vrcp.pop %v1402
        %v1418 = vmul.f32 1.0, %v1417
        %v1419 = vmul.f32 %v1363, %v1404
        %v1420 = vmul.f32 %v1364, %v1406
        %v1421 = vmul.f32 %v1365, %v1408
        %v1422 = vmul.f32 %v1366, %v1410
        %v1423 = vmul.f32 %v1367, %v1412
        %v1424 = vmul.f32 %v1368, %v1414
        %v1425 = vmul.f32 %v1369, %v1416
        %v1426 = vmul.f32 %v1370, %v1418
        %1427 = vst [vmem:[#allocation2] sm:$0xff] %v1320
        %1428 = vst [vmem:[#allocation2 + $0x8] sm:$0xff] %v1321
        %1429 = vst [vmem:[#allocation2 + $0x10] sm:$0xff] %v1322
        %1430 = vst [vmem:[#allocation2 + $0x18] sm:$0xff] %v1323
        %v1431 = vld [vmem:[#allocation11] sm:$0x1]
        %v1432 = vmul.f32 %v1431, 1.442695
        %v1433 = vpow.pop %v1432
        %v1434 = vsub.f32 0.0, %v1433
        %v1436 = vlaneseq
        %v1437 = vshrl.u32 %v1436, 7
        %v1438 = vsub.s32 0, %v1437
        %v1439 = vrot.slane %v1434, %v1438
        %v1441 = vmul.f32 %v1095, %v1439
        %v1442 = vlaneseq
        %v1443 = vshrl.u32 %v1442, 7
        %v1444 = vlaneseq
        %v1445 = vand.u32 %v1444, 127
        %vm1446 = vcmp.ge.s32.totalorder %v1443, %v1445
        %v1447 = vsel %vm1446, 1, 0
        %v1448 = vcvt.s32.f32 %v1447
        %vm1449 = vcmp.le.s32.totalorder %v1443, %v1445
        %v1450 = vsel %vm1449, 1, 0
        %v1451 = vcvt.s32.f32 %v1450
        %vm1452 = vcmask 64512
        %v1454 = vsel %vm1452, %v1448, 0
        %1456 = vmatprep.subr.mxu0 0.0
        %1457 = vmatpush1.msra.mxu0 %v1441
        %1458 = vmatprep.subr.mxu0 0.0
        %1459 = vmatpush1.msra.mxu0 0.0
        %1460 = vmatprep.subr.mxu0 0.0
        %1461 = vmatpush1.msra.mxu0 0.0
        %1462 = vmatprep.subr.mxu0 0.0
        %1463 = vmatpush1.msra.mxu0 0.0
        %1464 = vmatprep.subr.mxu0 0.0
        %1465 = vmatpush1.msra.mxu0 0.0
        %1466 = vmatprep.subr.mxu0 0.0
        %1467 = vmatpush1.msra.mxu0 0.0
        %1468 = vmatprep.subr.mxu0 0.0
        %1469 = vmatpush1.msra.mxu0 0.0
        %1470 = vmatprep.subr.mxu0 0.0
        %1471 = vmatpush1.msra.mxu0 0.0
        %1472 = vmatprep.subr.mxu0 0.0
        %1473 = vmatpush1.msra.mxu0 0.0
        %1474 = vmatprep.subr.mxu0 0.0
        %1475 = vmatpush1.msra.mxu0 0.0
        %1476 = vmatprep.subr.mxu0 0.0
        %1477 = vmatpush1.msra.mxu0 0.0
        %1478 = vmatprep.subr.mxu0 0.0
        %1479 = vmatpush1.msra.mxu0 0.0
        %1480 = vmatprep.subr.mxu0 0.0
        %1481 = vmatpush1.msra.mxu0 0.0
        %1482 = vmatprep.subr.mxu0 0.0
        %1483 = vmatpush1.msra.mxu0 0.0
        %1484 = vmatprep.subr.mxu0 0.0
        %1485 = vmatpush1.msra.mxu0 0.0
        %1486 = vmatprep.subr.mxu0 0.0
        %1487 = vmatpush1.msra.mxu0 0.0
        %1488 = vmatprep.subr.mxu0 0.0
        %1489 = vmatpush1.msra.mxu0 0.0
        %1490 = vmatprep.subr.mxu0 0.0
        %1491 = vmatpush1.msra.mxu0 0.0
        %1492 = vmatprep.subr.mxu0 0.0
        %1493 = vmatpush1.msra.mxu0 0.0
        %1494 = vmatprep.subr.mxu0 0.0
        %1495 = vmatpush1.msra.mxu0 0.0
        %1496 = vmatprep.subr.mxu0 0.0
        %1497 = vmatpush1.msra.mxu0 0.0
        %1498 = vmatprep.subr.mxu0 0.0
        %1499 = vmatpush1.msra.mxu0 0.0
        %1500 = vmatprep.subr.mxu0 0.0
        %1501 = vmatpush1.msra.mxu0 0.0
        %1502 = vmatprep.subr.mxu0 0.0
        %1503 = vmatpush1.msra.mxu0 0.0
        %1504 = vmatprep.subr.mxu0 0.0
        %1505 = vmatpush1.msra.mxu0 0.0
        %1506 = vmatprep.subr.mxu0 0.0
        %1507 = vmatpush1.msra.mxu0 0.0
        %1508 = vmatprep.subr.mxu0 0.0
        %1509 = vmatpush1.msra.mxu0 0.0
        %1510 = vmatprep.subr.mxu0 0.0
        %1511 = vmatpush1.msra.mxu0 0.0
        %1512 = vmatprep.subr.mxu0 0.0
        %1513 = vmatpush1.msra.mxu0 0.0
        %1514 = vmatprep.subr.mxu0 0.0
        %1515 = vmatpush1.msra.mxu0 0.0
        %1516 = vmatprep.subr.mxu0 0.0
        %1517 = vmatpush1.msra.mxu0 0.0
        %1518 = vmatprep.subr.mxu0 0.0
        %1519 = vmatpush1.msra.mxu0 0.0
        %1520 = vmatprep.mubr.f32.mxu0 0.0
        %1521 = vmatmul.mubr.f32.gmra.mrb[0].mxu0 %v1454
        %v1522 = vpop.f32.mrb[0].mxu0
        %v1523 = vadd.f32 0.0, %v1522
        %v1524 = vpop.f32.mrb[0].mxu0
        %1525 = vdwg.mxu0
        %1526 = vxpose.xlu0.b32.start [1/16] %v1441, 128
        %1527 = vxpose.xlu0.b32.cont [2/16] 0.0, 128
        %1528 = vxpose.xlu0.b32.cont [3/16] 0.0, 128
        %1529 = vxpose.xlu0.b32.cont [4/16] 0.0, 128
        %1530 = vxpose.xlu0.b32.cont [5/16] 0.0, 128
        %1531 = vxpose.xlu0.b32.cont [6/16] 0.0, 128
        %1532 = vxpose.xlu0.b32.cont [7/16] 0.0, 128
        %1533 = vxpose.xlu0.b32.cont [8/16] 0.0, 128
        %1534 = vxpose.xlu0.b32.cont [9/16] 0.0, 128
        %1535 = vxpose.xlu0.b32.cont [10/16] 0.0, 128
        %1536 = vxpose.xlu0.b32.cont [11/16] 0.0, 128
        %1537 = vxpose.xlu0.b32.cont [12/16] 0.0, 128
        %1538 = vxpose.xlu0.b32.cont [13/16] 0.0, 128
        %1539 = vxpose.xlu0.b32.cont [14/16] 0.0, 128
        %1540 = vxpose.xlu0.b32.cont [15/16] 0.0, 128
        %1541 = vxpose.xlu0.b32.end [16/16] 0.0, 128
        %v1542 = vpop.trf.xlu0
        %v1543 = vpop.trf.xlu0
        %v1544 = vpop.trf.xlu0
        %v1545 = vpop.trf.xlu0
        %v1546 = vpop.trf.xlu0
        %v1547 = vpop.trf.xlu0
        %v1548 = vpop.trf.xlu0
        %v1549 = vpop.trf.xlu0
        %v1550 = vpop.trf.xlu0
        %v1551 = vpop.trf.xlu0
        %v1552 = vpop.trf.xlu0
        %v1553 = vpop.trf.xlu0
        %v1554 = vpop.trf.xlu0
        %v1555 = vpop.trf.xlu0
        %v1556 = vpop.trf.xlu0
        %v1557 = vpop.trf.xlu0
        %v1559 = vsel %vm1452, %v1542, 0
        %1561 = vmatprep.subr.mxu0 0.0
        %1562 = vmatpush1.msra.mxu0 %v1451
        %1563 = vmatprep.subr.mxu0 0.0
        %1564 = vmatpush1.msra.mxu0 0.0
        %1565 = vmatprep.subr.mxu0 0.0
        %1566 = vmatpush1.msra.mxu0 0.0
        %1567 = vmatprep.subr.mxu0 0.0
        %1568 = vmatpush1.msra.mxu0 0.0
        %1569 = vmatprep.subr.mxu0 0.0
        %1570 = vmatpush1.msra.mxu0 0.0
        %1571 = vmatprep.subr.mxu0 0.0
        %1572 = vmatpush1.msra.mxu0 0.0
        %1573 = vmatprep.subr.mxu0 0.0
        %1574 = vmatpush1.msra.mxu0 0.0
        %1575 = vmatprep.subr.mxu0 0.0
        %1576 = vmatpush1.msra.mxu0 0.0
        %1577 = vmatprep.subr.mxu0 0.0
        %1578 = vmatpush1.msra.mxu0 0.0
        %1579 = vmatprep.subr.mxu0 0.0
        %1580 = vmatpush1.msra.mxu0 0.0
        %1581 = vmatprep.subr.mxu0 0.0
        %1582 = vmatpush1.msra.mxu0 0.0
        %1583 = vmatprep.subr.mxu0 0.0
        %1584 = vmatpush1.msra.mxu0 0.0
        %1585 = vmatprep.subr.mxu0 0.0
        %1586 = vmatpush1.msra.mxu0 0.0
        %1587 = vmatprep.subr.mxu0 0.0
        %1588 = vmatpush1.msra.mxu0 0.0
        %1589 = vmatprep.subr.mxu0 0.0
        %1590 = vmatpush1.msra.mxu0 0.0
        %1591 = vmatprep.subr.mxu0 0.0
        %1592 = vmatpush1.msra.mxu0 0.0
        %1593 = vmatprep.subr.mxu0 0.0
        %1594 = vmatpush1.msra.mxu0 0.0
        %1595 = vmatprep.subr.mxu0 0.0
        %1596 = vmatpush1.msra.mxu0 0.0
        %1597 = vmatprep.subr.mxu0 0.0
        %1598 = vmatpush1.msra.mxu0 0.0
        %1599 = vmatprep.subr.mxu0 0.0
        %1600 = vmatpush1.msra.mxu0 0.0
        %1601 = vmatprep.subr.mxu0 0.0
        %1602 = vmatpush1.msra.mxu0 0.0
        %1603 = vmatprep.subr.mxu0 0.0
        %1604 = vmatpush1.msra.mxu0 0.0
        %1605 = vmatprep.subr.mxu0 0.0
        %1606 = vmatpush1.msra.mxu0 0.0
        %1607 = vmatprep.subr.mxu0 0.0
        %1608 = vmatpush1.msra.mxu0 0.0
        %1609 = vmatprep.subr.mxu0 0.0
        %1610 = vmatpush1.msra.mxu0 0.0
        %1611 = vmatprep.subr.mxu0 0.0
        %1612 = vmatpush1.msra.mxu0 0.0
        %1613 = vmatprep.subr.mxu0 0.0
        %1614 = vmatpush1.msra.mxu0 0.0
        %1615 = vmatprep.subr.mxu0 0.0
        %1616 = vmatpush1.msra.mxu0 0.0
        %1617 = vmatprep.subr.mxu0 0.0
        %1618 = vmatpush1.msra.mxu0 0.0
        %1619 = vmatprep.subr.mxu0 0.0
        %1620 = vmatpush1.msra.mxu0 0.0
        %1621 = vmatprep.subr.mxu0 0.0
        %1622 = vmatpush1.msra.mxu0 0.0
        %1623 = vmatprep.subr.mxu0 0.0
        %1624 = vmatpush1.msra.mxu0 0.0
        %1625 = vmatprep.mubr.f32.mxu0 0.0
        %1626 = vmatmul.mubr.f32.gmra.mrb[0].mxu0 %v1559
        %v1627 = vpop.f32.mrb[0].mxu0
        %v1628 = vadd.f32 0.0, %v1627
        %v1629 = vpop.f32.mrb[0].mxu0
        %1630 = vdwg.mxu0
        %vm1631 = vcmask 31744
        %v1632 = vsel %vm1631, %v1441, 0.0
        %v1633 = vrot.slane %v1632, 4
        %v1634 = vadd.f32 %v1632, %v1633
        %v1635 = vrot.slane %v1634, 2
        %v1636 = vadd.f32 %v1634, %v1635
        %v1637 = vrot.slane %v1636, 1
        %v1638 = vadd.f32 %v1636, %v1637
        %vm1641 = vcmask 1042432
        %v1642 = vrot.slane %v1422, 5
        %v1643 = vrot.slane %v1426, 5
        %v1644 = vsel %vm1641, %v1642, %v1643
        %v1648 = vrot.slane %v1421, 5
        %v1649 = vrot.slane %v1425, 5
        %v1650 = vsel %vm1641, %v1648, %v1649
        %1652 = vmatprep.subr.mxu0 0.0
        %1653 = vmatpush1.xpose.msra.mxu0 %v1650
        %1654 = vmatprep.subr.mxu0 0.0
        %1655 = vmatpush1.xpose.msra.mxu0 0.0
        %1656 = vmatprep.subr.mxu0 0.0
        %1657 = vmatpush1.xpose.msra.mxu0 0.0
        %1658 = vmatprep.subr.mxu0 0.0
        %1659 = vmatpush1.xpose.msra.mxu0 0.0
        %1660 = vmatprep.subr.mxu0 0.0
        %1661 = vmatpush1.xpose.msra.mxu0 0.0
        %1662 = vmatprep.subr.mxu0 0.0
        %1663 = vmatpush1.xpose.msra.mxu0 0.0
        %1664 = vmatprep.subr.mxu0 0.0
        %1665 = vmatpush1.xpose.msra.mxu0 0.0
        %1666 = vmatprep.subr.mxu0 0.0
        %1667 = vmatpush1.xpose.msra.mxu0 0.0
        %1668 = vmatprep.subr.mxu0 0.0
        %1669 = vmatpush1.xpose.msra.mxu0 0.0
        %1670 = vmatprep.subr.mxu0 0.0
        %1671 = vmatpush1.xpose.msra.mxu0 0.0
        %1672 = vmatprep.subr.mxu0 0.0
        %1673 = vmatpush1.xpose.msra.mxu0 0.0
        %1674 = vmatprep.subr.mxu0 0.0
        %1675 = vmatpush1.xpose.msra.mxu0 0.0
        %1676 = vmatprep.subr.mxu0 0.0
        %1677 = vmatpush1.xpose.msra.mxu0 0.0
        %1678 = vmatprep.subr.mxu0 0.0
        %1679 = vmatpush1.xpose.msra.mxu0 0.0
        %1680 = vmatprep.subr.mxu0 0.0
        %1681 = vmatpush1.xpose.msra.mxu0 0.0
        %1682 = vmatprep.subr.mxu0 0.0
        %1683 = vmatpush1.xpose.msra.mxu0 0.0
        %1684 = vmatprep.subr.mxu0 0.0
        %1685 = vmatpush1.xpose.msra.mxu0 0.0
        %1686 = vmatprep.subr.mxu0 0.0
        %1687 = vmatpush1.xpose.msra.mxu0 0.0
        %1688 = vmatprep.subr.mxu0 0.0
        %1689 = vmatpush1.xpose.msra.mxu0 0.0
        %1690 = vmatprep.subr.mxu0 0.0
        %1691 = vmatpush1.xpose.msra.mxu0 0.0
        %1692 = vmatprep.subr.mxu0 0.0
        %1693 = vmatpush1.xpose.msra.mxu0 0.0
        %1694 = vmatprep.subr.mxu0 0.0
        %1695 = vmatpush1.xpose.msra.mxu0 0.0
        %1696 = vmatprep.subr.mxu0 0.0
        %1697 = vmatpush1.xpose.msra.mxu0 0.0
        %1698 = vmatprep.subr.mxu0 0.0
        %1699 = vmatpush1.xpose.msra.mxu0 0.0
        %1700 = vmatprep.subr.mxu0 0.0
        %1701 = vmatpush1.xpose.msra.mxu0 0.0
        %1702 = vmatprep.subr.mxu0 0.0
        %1703 = vmatpush1.xpose.msra.mxu0 0.0
        %1704 = vmatprep.subr.mxu0 0.0
        %1705 = vmatpush1.xpose.msra.mxu0 0.0
        %1706 = vmatprep.subr.mxu0 0.0
        %1707 = vmatpush1.xpose.msra.mxu0 0.0
        %1708 = vmatprep.subr.mxu0 0.0
        %1709 = vmatpush1.xpose.msra.mxu0 0.0
        %1710 = vmatprep.subr.mxu0 0.0
        %1711 = vmatpush1.xpose.msra.mxu0 0.0
        %1712 = vmatprep.subr.mxu0 0.0
        %1713 = vmatpush1.xpose.msra.mxu0 0.0
        %1714 = vmatprep.subr.mxu0 0.0
        %1715 = vmatpush1.xpose.msra.mxu0 0.0
        %1716 = vmatprep.mubr.f32.mxu0 0.0
        %1717 = vmatmul.mubr.f32.gmra.mrb[0].mxu0 %v1644
        %v1718 = vpop.f32.mrb[0].mxu0
        %v1719 = vadd.f32 0.0, %v1718
        %v1720 = vpop.f32.mrb[0].mxu0
        %1721 = vdwg.mxu0
        %v1722 = vld [vmem:[#allocation13] sm:$0x1]
        %1724 = vset.pattern.permute.xlu0 0
        %1725 = vperm.xlu0 %1724, %v1523
        %v1726 = vpop.permute.xlu0 %1725
        %v1728 = vlaneseq
        %v1729 = vshrl.u32 %v1728, 7
        %v1730 = vsub.s32 0, %v1729
        %v1731 = vrot.slane %v1628, %v1730
        %v1732 = vsub.f32 %v1726, %v1731
        %v1733 = vsel %vm1446, %v1732, -1e+30
        %v1734 = vmul.f32 %v1733, 1.442695
        %v1735 = vpow.pop %v1734
        %1737 = vset.pattern.permute.xlu0 0
        %1738 = vperm.xlu0 %1737, %v1095
        %v1739 = vpop.permute.xlu0 %1738
        %v1743 = vrot.slane %v1419, 5
        %v1744 = vrot.slane %v1423, 5
        %v1745 = vsel %vm1641, %v1743, %v1744
        %v1747 = vmul.f32 %v1739, %v1745
        %v1748 = vld [vmem:[#allocation3] sm:$0xff]
        %v1749 = vld [vmem:[#allocation3 + $0x8] sm:$0xff]
        %v1750 = vld [vmem:[#allocation3 + $0x10] sm:$0xff]
        %v1751 = vld [vmem:[#allocation3 + $0x18] sm:$0xff]
        %v1752 = vld [vmem:[#allocation3 + $0x20] sm:$0xff]
        %v1753 = vld [vmem:[#allocation3 + $0x28] sm:$0xff]
        %v1754 = vld [vmem:[#allocation3 + $0x30] sm:$0xff]
        %v1755 = vld [vmem:[#allocation3 + $0x38] sm:$0xff]
        %v1756 = vld [vmem:[#allocation3 + $0x40] sm:$0xff]
        %v1757 = vld [vmem:[#allocation3 + $0x48] sm:$0xff]
        %v1758 = vld [vmem:[#allocation3 + $0x50] sm:$0xff]
        %v1759 = vld [vmem:[#allocation3 + $0x58] sm:$0xff]
        %v1760 = vld [vmem:[#allocation3 + $0x60] sm:$0xff]
        %v1761 = vld [vmem:[#allocation3 + $0x68] sm:$0xff]
        %v1762 = vld [vmem:[#allocation3 + $0x70] sm:$0xff]
        %v1763 = vld [vmem:[#allocation3 + $0x78] sm:$0xff]
        %v1764 = vmul.f32 %v1719, %v1735
        %v1765 = vmul.f32 %v1523, 1.442695
        %v1766 = vpow.pop %v1765
        %1767 = vmatprep.subr.mxu0 0.0
        %1768 = vmatpush1.msra.mxu0 %v1748
        %1769 = vmatprep.subr.mxu0 0.0
        %1770 = vmatpush1.msra.mxu0 %v1749
        %1771 = vmatprep.subr.mxu0 0.0
        %1772 = vmatpush1.msra.mxu0 %v1750
        %1773 = vmatprep.subr.mxu0 0.0
        %1774 = vmatpush1.msra.mxu0 %v1751
        %1775 = vmatprep.subr.mxu0 0.0
        %1776 = vmatpush1.msra.mxu0 %v1752
        %1777 = vmatprep.subr.mxu0 0.0
        %1778 = vmatpush1.msra.mxu0 %v1753
        %1779 = vmatprep.subr.mxu0 0.0
        %1780 = vmatpush1.msra.mxu0 %v1754
        %1781 = vmatprep.subr.mxu0 0.0
        %1782 = vmatpush1.msra.mxu0 %v1755
        %1783 = vmatprep.subr.mxu0 0.0
        %1784 = vmatpush1.msra.mxu0 %v1756
        %1785 = vmatprep.subr.mxu0 0.0
        %1786 = vmatpush1.msra.mxu0 %v1757
        %1787 = vmatprep.subr.mxu0 0.0
        %1788 = vmatpush1.msra.mxu0 %v1758
        %1789 = vmatprep.subr.mxu0 0.0
        %1790 = vmatpush1.msra.mxu0 %v1759
        %1791 = vmatprep.subr.mxu0 0.0
        %1792 = vmatpush1.msra.mxu0 %v1760
        %1793 = vmatprep.subr.mxu0 0.0
        %1794 = vmatpush1.msra.mxu0 %v1761
        %1795 = vmatprep.subr.mxu0 0.0
        %1796 = vmatpush1.msra.mxu0 %v1762
        %1797 = vmatprep.subr.mxu0 0.0
        %1798 = vmatpush1.msra.mxu0 %v1763
        %1799 = vmatprep.subr.mxu0 0.0
        %1800 = vmatpush1.msra.mxu0 0.0
        %1801 = vmatprep.subr.mxu0 0.0
        %1802 = vmatpush1.msra.mxu0 0.0
        %1803 = vmatprep.subr.mxu0 0.0
        %1804 = vmatpush1.msra.mxu0 0.0
        %1805 = vmatprep.subr.mxu0 0.0
        %1806 = vmatpush1.msra.mxu0 0.0
        %1807 = vmatprep.subr.mxu0 0.0
        %1808 = vmatpush1.msra.mxu0 0.0
        %1809 = vmatprep.subr.mxu0 0.0
        %1810 = vmatpush1.msra.mxu0 0.0
        %1811 = vmatprep.subr.mxu0 0.0
        %1812 = vmatpush1.msra.mxu0 0.0
        %1813 = vmatprep.subr.mxu0 0.0
        %1814 = vmatpush1.msra.mxu0 0.0
        %1815 = vmatprep.subr.mxu0 0.0
        %1816 = vmatpush1.msra.mxu0 0.0
        %1817 = vmatprep.subr.mxu0 0.0
        %1818 = vmatpush1.msra.mxu0 0.0
        %1819 = vmatprep.subr.mxu0 0.0
        %1820 = vmatpush1.msra.mxu0 0.0
        %1821 = vmatprep.subr.mxu0 0.0
        %1822 = vmatpush1.msra.mxu0 0.0
        %1823 = vmatprep.subr.mxu0 0.0
        %1824 = vmatpush1.msra.mxu0 0.0
        %1825 = vmatprep.subr.mxu0 0.0
        %1826 = vmatpush1.msra.mxu0 0.0
        %1827 = vmatprep.subr.mxu0 0.0
        %1828 = vmatpush1.msra.mxu0 0.0
        %1829 = vmatprep.subr.mxu0 0.0
        %1830 = vmatpush1.msra.mxu0 0.0
        %1831 = vmatprep.mubr.f32.mxu0 0.0
        %1832 = vmatmul.mubr.f32.gmra.mrb[0].mxu0 %v1644
        %v1833 = vpop.f32.mrb[0].mxu0
        %v1834 = vadd.f32 0.0, %v1833
        %v1835 = vpop.f32.mrb[0].mxu0
        %1836 = vdwg.mxu0
        %1838 = vset.pattern.permute.xlu0 0
        %1839 = vperm.xlu0 %1838, %v1766
        %v1840 = vpop.permute.xlu0 %1839
        %v1842 = vmul.f32 %v1840, %v1834
        %v1844 = vsel %vm1452, %v1764, 0
        %1846 = vmatprep.subr.mxu0 0.0
        %1847 = vmatpush1.msra.mxu0 %v1747
        %1848 = vmatprep.subr.mxu0 0.0
        %1849 = vmatpush1.msra.mxu0 0.0
        %1850 = vmatprep.subr.mxu0 0.0
        %1851 = vmatpush1.msra.mxu0 0.0
        %1852 = vmatprep.subr.mxu0 0.0
        %1853 = vmatpush1.msra.mxu0 0.0
        %1854 = vmatprep.subr.mxu0 0.0
        %1855 = vmatpush1.msra.mxu0 0.0
        %1856 = vmatprep.subr.mxu0 0.0
        %1857 = vmatpush1.msra.mxu0 0.0
        %1858 = vmatprep.subr.mxu0 0.0
        %1859 = vmatpush1.msra.mxu0 0.0
        %1860 = vmatprep.subr.mxu0 0.0
        %1861 = vmatpush1.msra.mxu0 0.0
        %1862 = vmatprep.subr.mxu0 0.0
        %1863 = vmatpush1.msra.mxu0 0.0
        %1864 = vmatprep.subr.mxu0 0.0
        %1865 = vmatpush1.msra.mxu0 0.0
        %1866 = vmatprep.subr.mxu0 0.0
        %1867 = vmatpush1.msra.mxu0 0.0
        %1868 = vmatprep.subr.mxu0 0.0
        %1869 = vmatpush1.msra.mxu0 0.0
        %1870 = vmatprep.subr.mxu0 0.0
        %1871 = vmatpush1.msra.mxu0 0.0
        %1872 = vmatprep.subr.mxu0 0.0
        %1873 = vmatpush1.msra.mxu0 0.0
        %1874 = vmatprep.subr.mxu0 0.0
        %1875 = vmatpush1.msra.mxu0 0.0
        %1876 = vmatprep.subr.mxu0 0.0
        %1877 = vmatpush1.msra.mxu0 0.0
        %1878 = vmatprep.subr.mxu0 0.0
        %1879 = vmatpush1.msra.mxu0 0.0
        %1880 = vmatprep.subr.mxu0 0.0
        %1881 = vmatpush1.msra.mxu0 0.0
        %1882 = vmatprep.subr.mxu0 0.0
        %1883 = vmatpush1.msra.mxu0 0.0
        %1884 = vmatprep.subr.mxu0 0.0
        %1885 = vmatpush1.msra.mxu0 0.0
        %1886 = vmatprep.subr.mxu0 0.0
        %1887 = vmatpush1.msra.mxu0 0.0
        %1888 = vmatprep.subr.mxu0 0.0
        %1889 = vmatpush1.msra.mxu0 0.0
        %1890 = vmatprep.subr.mxu0 0.0
        %1891 = vmatpush1.msra.mxu0 0.0
        %1892 = vmatprep.subr.mxu0 0.0
        %1893 = vmatpush1.msra.mxu0 0.0
        %1894 = vmatprep.subr.mxu0 0.0
        %1895 = vmatpush1.msra.mxu0 0.0
        %1896 = vmatprep.subr.mxu0 0.0
        %1897 = vmatpush1.msra.mxu0 0.0
        %1898 = vmatprep.subr.mxu0 0.0
        %1899 = vmatpush1.msra.mxu0 0.0
        %1900 = vmatprep.subr.mxu0 0.0
        %1901 = vmatpush1.msra.mxu0 0.0
        %1902 = vmatprep.subr.mxu0 0.0
        %1903 = vmatpush1.msra.mxu0 0.0
        %1904 = vmatprep.subr.mxu0 0.0
        %1905 = vmatpush1.msra.mxu0 0.0
        %1906 = vmatprep.subr.mxu0 0.0
        %1907 = vmatpush1.msra.mxu0 0.0
        %1908 = vmatprep.subr.mxu0 0.0
        %1909 = vmatpush1.msra.mxu0 0.0
        %1910 = vmatprep.mubr.f32.mxu0 0.0
        %1911 = vmatmul.mubr.f32.gmra.mrb[0].mxu0 %v1844
        %v1912 = vpop.f32.mrb[0].mxu0
        %v1913 = vadd.f32 %v1842, %v1912
        %v1914 = vpop.f32.mrb[0].mxu0
        %1915 = vdwg.mxu0
        %v1917 = vlaneseq
        %v1918 = vshrl.u32 %v1917, 7
        %v1919 = vsub.s32 0, %v1918
        %v1920 = vrot.slane %v1722, %v1919
        %1921 = vset.pattern.permute.xlu0 0
        %1922 = vperm.xlu0 %1921, %v1920
        %v1923 = vpop.permute.xlu0 %1922
        %v1925 = vmul.f32 %v1923, %v1419
        %v1926 = vmul.f32 %v1923, %v1423
        %v1929 = vrot.slane %v1925, 5
        %v1930 = vrot.slane %v1926, 5
        %v1931 = vsel %vm1641, %v1929, %v1930
        %v1933 = vadd.f32 %v1913, %v1931
        %vm1934 = vcmask 523264
        %1935 = vst.msk [vmem:[#allocation4] sm:$0xff] %vm1934, %v1933
        %v1936 = vsub.f32 %v1638, %v1523
        %v1937 = vmul.f32 %v1936, 1.442695
        %v1938 = vpow.pop %v1937
        %1940 = vset.pattern.permute.xlu0 0
        %1941 = vperm.xlu0 %1940, %v1938
        %v1942 = vpop.permute.xlu0 %1941
        %v1944 = vmul.f32 %v1942, %v1650
        %v1945 = vmul.f32 %v1638, 1.442695
        %v1946 = vpow.pop %v1945
        %1948 = vset.pattern.permute.xlu0 0
        %1949 = vperm.xlu0 %1948, %v1946
        %v1950 = vpop.permute.xlu0 %1949
        %v1952 = vmul.f32 %v1950, %v1748
        %v1953 = vmul.f32 %v1950, %v1749
        %v1954 = vmul.f32 %v1950, %v1750
        %v1955 = vmul.f32 %v1950, %v1751
        %v1956 = vmul.f32 %v1950, %v1752
        %v1957 = vmul.f32 %v1950, %v1753
        %v1958 = vmul.f32 %v1950, %v1754
        %v1959 = vmul.f32 %v1950, %v1755
        %v1960 = vmul.f32 %v1950, %v1756
        %v1961 = vmul.f32 %v1950, %v1757
        %v1962 = vmul.f32 %v1950, %v1758
        %v1963 = vmul.f32 %v1950, %v1759
        %v1964 = vmul.f32 %v1950, %v1760
        %v1965 = vmul.f32 %v1950, %v1761
        %v1966 = vmul.f32 %v1950, %v1762
        %v1967 = vmul.f32 %v1950, %v1763
        %1968 = vxpose.xlu0.b32.start [1/16] %v1944, 128
        %1969 = vxpose.xlu0.b32.cont [2/16] 0.0, 128
        %1970 = vxpose.xlu0.b32.cont [3/16] 0.0, 128
        %1971 = vxpose.xlu0.b32.cont [4/16] 0.0, 128
        %1972 = vxpose.xlu0.b32.cont [5/16] 0.0, 128
        %1973 = vxpose.xlu0.b32.cont [6/16] 0.0, 128
        %1974 = vxpose.xlu0.b32.cont [7/16] 0.0, 128
        %1975 = vxpose.xlu0.b32.cont [8/16] 0.0, 128
        %1976 = vxpose.xlu0.b32.cont [9/16] 0.0, 128
        %1977 = vxpose.xlu0.b32.cont [10/16] 0.0, 128
        %1978 = vxpose.xlu0.b32.cont [11/16] 0.0, 128
        %1979 = vxpose.xlu0.b32.cont [12/16] 0.0, 128
        %1980 = vxpose.xlu0.b32.cont [13/16] 0.0, 128
        %1981 = vxpose.xlu0.b32.cont [14/16] 0.0, 128
        %1982 = vxpose.xlu0.b32.cont [15/16] 0.0, 128
        %1983 = vxpose.xlu0.b32.end [16/16] 0.0, 128
        %v1984 = vpop.trf.xlu0
        %v1985 = vpop.trf.xlu0
        %v1986 = vpop.trf.xlu0
        %v1987 = vpop.trf.xlu0
        %v1988 = vpop.trf.xlu0
        %v1989 = vpop.trf.xlu0
        %v1990 = vpop.trf.xlu0
        %v1991 = vpop.trf.xlu0
        %v1992 = vpop.trf.xlu0
        %v1993 = vpop.trf.xlu0
        %v1994 = vpop.trf.xlu0
        %v1995 = vpop.trf.xlu0
        %v1996 = vpop.trf.xlu0
        %v1997 = vpop.trf.xlu0
        %v1998 = vpop.trf.xlu0
        %v1999 = vpop.trf.xlu0
        %v2001 = vsel %vm1452, %v1984, 0
        %v2004 = vsel %vm1452, %v1985, 0
        %v2007 = vsel %vm1452, %v1986, 0
        %v2010 = vsel %vm1452, %v1987, 0
        %v2013 = vsel %vm1452, %v1988, 0
        %v2016 = vsel %vm1452, %v1989, 0
        %v2019 = vsel %vm1452, %v1990, 0
        %v2022 = vsel %vm1452, %v1991, 0
        %v2025 = vsel %vm1452, %v1992, 0
        %v2028 = vsel %vm1452, %v1993, 0
        %v2031 = vsel %vm1452, %v1994, 0
        %v2034 = vsel %vm1452, %v1995, 0
        %v2037 = vsel %vm1452, %v1996, 0
        %v2040 = vsel %vm1452, %v1997, 0
        %v2043 = vsel %vm1452, %v1998, 0
        %v2046 = vsel %vm1452, %v1999, 0
        %2048 = vmatprep.subr.mxu0 0.0
        %2049 = vmatpush1.msra.mxu0 %v1747
        %2050 = vmatprep.subr.mxu0 0.0
        %2051 = vmatpush1.msra.mxu0 0.0
        %2052 = vmatprep.subr.mxu0 0.0
        %2053 = vmatpush1.msra.mxu0 0.0
        %2054 = vmatprep.subr.mxu0 0.0
        %2055 = vmatpush1.msra.mxu0 0.0
        %2056 = vmatprep.subr.mxu0 0.0
        %2057 = vmatpush1.msra.mxu0 0.0
        %2058 = vmatprep.subr.mxu0 0.0
        %2059 = vmatpush1.msra.mxu0 0.0
        %2060 = vmatprep.subr.mxu0 0.0
        %2061 = vmatpush1.msra.mxu0 0.0
        %2062 = vmatprep.subr.mxu0 0.0
        %2063 = vmatpush1.msra.mxu0 0.0
        %2064 = vmatprep.subr.mxu0 0.0
        %2065 = vmatpush1.msra.mxu0 0.0
        %2066 = vmatprep.subr.mxu0 0.0
        %2067 = vmatpush1.msra.mxu0 0.0
        %2068 = vmatprep.subr.mxu0 0.0
        %2069 = vmatpush1.msra.mxu0 0.0
        %2070 = vmatprep.subr.mxu0 0.0
        %2071 = vmatpush1.msra.mxu0 0.0
        %2072 = vmatprep.subr.mxu0 0.0
        %2073 = vmatpush1.msra.mxu0 0.0
        %2074 = vmatprep.subr.mxu0 0.0
        %2075 = vmatpush1.msra.mxu0 0.0
        %2076 = vmatprep.subr.mxu0 0.0
        %2077 = vmatpush1.msra.mxu0 0.0
        %2078 = vmatprep.subr.mxu0 0.0
        %2079 = vmatpush1.msra.mxu0 0.0
        %2080 = vmatprep.subr.mxu0 0.0
        %2081 = vmatpush1.msra.mxu0 0.0
        %2082 = vmatprep.subr.mxu0 0.0
        %2083 = vmatpush1.msra.mxu0 0.0
        %2084 = vmatprep.subr.mxu0 0.0
        %2085 = vmatpush1.msra.mxu0 0.0
        %2086 = vmatprep.subr.mxu0 0.0
        %2087 = vmatpush1.msra.mxu0 0.0
        %2088 = vmatprep.subr.mxu0 0.0
        %2089 = vmatpush1.msra.mxu0 0.0
        %2090 = vmatprep.subr.mxu0 0.0
        %2091 = vmatpush1.msra.mxu0 0.0
        %2092 = vmatprep.subr.mxu0 0.0
        %2093 = vmatpush1.msra.mxu0 0.0
        %2094 = vmatprep.subr.mxu0 0.0
        %2095 = vmatpush1.msra.mxu0 0.0
        %2096 = vmatprep.subr.mxu0 0.0
        %2097 = vmatpush1.msra.mxu0 0.0
        %2098 = vmatprep.subr.mxu0 0.0
        %2099 = vmatpush1.msra.mxu0 0.0
        %2100 = vmatprep.subr.mxu0 0.0
        %2101 = vmatpush1.msra.mxu0 0.0
        %2102 = vmatprep.subr.mxu0 0.0
        %2103 = vmatpush1.msra.mxu0 0.0
        %2104 = vmatprep.subr.mxu0 0.0
        %2105 = vmatpush1.msra.mxu0 0.0
        %2106 = vmatprep.subr.mxu0 0.0
        %2107 = vmatpush1.msra.mxu0 0.0
        %2108 = vmatprep.subr.mxu0 0.0
        %2109 = vmatpush1.msra.mxu0 0.0
        %2110 = vmatprep.subr.mxu0 0.0
        %2111 = vmatpush1.msra.mxu0 0.0
        %2112 = vmatprep.mubr.f32.mxu0 0.0
        %2113 = vmatmul.mubr.f32.gmra.mrb[0].mxu0 %v2001
        %v2114 = vpop.f32.mrb[0].mxu0
        %v2115 = vadd.f32 0.0, %v2114
        %v2116 = vpop.f32.mrb[0].mxu0
        %2117 = vmatprep.mubr.f32.mxu0 0.0
        %2118 = vmatmul.mubr.f32.gmra.mrb[0].mxu0 %v2004
        %v2119 = vpop.f32.mrb[0].mxu0
        %v2120 = vadd.f32 0.0, %v2119
        %v2121 = vpop.f32.mrb[0].mxu0
        %2122 = vmatprep.mubr.f32.mxu0 0.0
        %2123 = vmatmul.mubr.f32.gmra.mrb[0].mxu0 %v2007
        %v2124 = vpop.f32.mrb[0].mxu0
        %v2125 = vadd.f32 0.0, %v2124
        %v2126 = vpop.f32.mrb[0].mxu0
        %2127 = vmatprep.mubr.f32.mxu0 0.0
        %2128 = vmatmul.mubr.f32.gmra.mrb[0].mxu0 %v2010
        %v2129 = vpop.f32.mrb[0].mxu0
        %v2130 = vadd.f32 0.0, %v2129
        %v2131 = vpop.f32.mrb[0].mxu0
        %2132 = vmatprep.mubr.f32.mxu0 0.0
        %2133 = vmatmul.mubr.f32.gmra.mrb[0].mxu0 %v2013
        %v2134 = vpop.f32.mrb[0].mxu0
        %v2135 = vadd.f32 0.0, %v2134
        %v2136 = vpop.f32.mrb[0].mxu0
        %2137 = vmatprep.mubr.f32.mxu0 0.0
        %2138 = vmatmul.mubr.f32.gmra.mrb[0].mxu0 %v2016
        %v2139 = vpop.f32.mrb[0].mxu0
        %v2140 = vadd.f32 0.0, %v2139
        %v2141 = vpop.f32.mrb[0].mxu0
        %2142 = vmatprep.mubr.f32.mxu0 0.0
        %2143 = vmatmul.mubr.f32.gmra.mrb[0].mxu0 %v2019
        %v2144 = vpop.f32.mrb[0].mxu0
        %v2145 = vadd.f32 0.0, %v2144
        %v2146 = vpop.f32.mrb[0].mxu0
        %2147 = vmatprep.mubr.f32.mxu0 0.0
        %2148 = vmatmul.mubr.f32.gmra.mrb[0].mxu0 %v2022
        %v2149 = vpop.f32.mrb[0].mxu0
        %v2150 = vadd.f32 0.0, %v2149
        %v2151 = vpop.f32.mrb[0].mxu0
        %2152 = vmatprep.mubr.f32.mxu0 0.0
        %2153 = vmatmul.mubr.f32.gmra.mrb[0].mxu0 %v2025
        %v2154 = vpop.f32.mrb[0].mxu0
        %v2155 = vadd.f32 0.0, %v2154
        %v2156 = vpop.f32.mrb[0].mxu0
        %2157 = vmatprep.mubr.f32.mxu0 0.0
        %2158 = vmatmul.mubr.f32.gmra.mrb[0].mxu0 %v2028
        %v2159 = vpop.f32.mrb[0].mxu0
        %v2160 = vadd.f32 0.0, %v2159
        %v2161 = vpop.f32.mrb[0].mxu0
        %2162 = vmatprep.mubr.f32.mxu0 0.0
        %2163 = vmatmul.mubr.f32.gmra.mrb[0].mxu0 %v2031
        %v2164 = vpop.f32.mrb[0].mxu0
        %v2165 = vadd.f32 0.0, %v2164
        %v2166 = vpop.f32.mrb[0].mxu0
        %2167 = vmatprep.mubr.f32.mxu0 0.0
        %2168 = vmatmul.mubr.f32.gmra.mrb[0].mxu0 %v2034
        %v2169 = vpop.f32.mrb[0].mxu0
        %v2170 = vadd.f32 0.0, %v2169
        %v2171 = vpop.f32.mrb[0].mxu0
        %2172 = vmatprep.mubr.f32.mxu0 0.0
        %2173 = vmatmul.mubr.f32.gmra.mrb[0].mxu0 %v2037
        %v2174 = vpop.f32.mrb[0].mxu0
        %v2175 = vadd.f32 0.0, %v2174
        %v2176 = vpop.f32.mrb[0].mxu0
        %2177 = vmatprep.mubr.f32.mxu0 0.0
        %2178 = vmatmul.mubr.f32.gmra.mrb[0].mxu0 %v2040
        %v2179 = vpop.f32.mrb[0].mxu0
        %v2180 = vadd.f32 0.0, %v2179
        %v2181 = vpop.f32.mrb[0].mxu0
        %2182 = vmatprep.mubr.f32.mxu0 0.0
        %2183 = vmatmul.mubr.f32.gmra.mrb[0].mxu0 %v2043
        %v2184 = vpop.f32.mrb[0].mxu0
        %v2185 = vadd.f32 0.0, %v2184
        %v2186 = vpop.f32.mrb[0].mxu0
        %2187 = vmatprep.mubr.f32.mxu0 0.0
        %2188 = vmatmul.mubr.f32.gmra.mrb[0].mxu0 %v2046
        %v2189 = vpop.f32.mrb[0].mxu0
        %v2190 = vadd.f32 0.0, %v2189
        %v2191 = vpop.f32.mrb[0].mxu0
        %2192 = vdwg.mxu0
        %v2193 = vadd.f32 %v1952, %v2115
        %v2194 = vadd.f32 %v1953, %v2120
        %v2195 = vadd.f32 %v1954, %v2125
        %v2196 = vadd.f32 %v1955, %v2130
        %v2197 = vadd.f32 %v1956, %v2135
        %v2198 = vadd.f32 %v1957, %v2140
        %v2199 = vadd.f32 %v1958, %v2145
        %v2200 = vadd.f32 %v1959, %v2150
        %v2201 = vadd.f32 %v1960, %v2155
        %v2202 = vadd.f32 %v1961, %v2160
        %v2203 = vadd.f32 %v1962, %v2165
        %v2204 = vadd.f32 %v1963, %v2170
        %v2205 = vadd.f32 %v1964, %v2175
        %v2206 = vadd.f32 %v1965, %v2180
        %v2207 = vadd.f32 %v1966, %v2185
        %v2208 = vadd.f32 %v1967, %v2190
        %2209 = vst.msk [vmem:[#allocation3] sm:$0xff] %vm1934, %v2193
        %2210 = vst.msk [vmem:[#allocation3 + $0x8] sm:$0xff] %vm1934, %v2194
        %2211 = vst.msk [vmem:[#allocation3 + $0x10] sm:$0xff] %vm1934, %v2195
        %2212 = vst.msk [vmem:[#allocation3 + $0x18] sm:$0xff] %vm1934, %v2196
        %2213 = vst.msk [vmem:[#allocation3 + $0x20] sm:$0xff] %vm1934, %v2197
        %2214 = vst.msk [vmem:[#allocation3 + $0x28] sm:$0xff] %vm1934, %v2198
        %2215 = vst.msk [vmem:[#allocation3 + $0x30] sm:$0xff] %vm1934, %v2199
        %2216 = vst.msk [vmem:[#allocation3 + $0x38] sm:$0xff] %vm1934, %v2200
        %2217 = vst.msk [vmem:[#allocation3 + $0x40] sm:$0xff] %vm1934, %v2201
        %2218 = vst.msk [vmem:[#allocation3 + $0x48] sm:$0xff] %vm1934, %v2202
        %2219 = vst.msk [vmem:[#allocation3 + $0x50] sm:$0xff] %vm1934, %v2203
        %2220 = vst.msk [vmem:[#allocation3 + $0x58] sm:$0xff] %vm1934, %v2204
        %2221 = vst.msk [vmem:[#allocation3 + $0x60] sm:$0xff] %vm1934, %v2205
        %2222 = vst.msk [vmem:[#allocation3 + $0x68] sm:$0xff] %vm1934, %v2206
        %2223 = vst.msk [vmem:[#allocation3 + $0x70] sm:$0xff] %vm1934, %v2207
        %2224 = vst.msk [vmem:[#allocation3 + $0x78] sm:$0xff] %vm1934, %v2208
        %2225 = vset.pattern.permute.xlu0 1
        %2226 = vperm.xlu0 %2225, %v1523
        %v2227 = vpop.permute.xlu0 %2226
        %v2229 = vlaneseq
        %v2230 = vshrl.u32 %v2229, 7
        %v2231 = vsub.s32 1, %v2230
        %v2232 = vrot.slane %v1628, %v2231
        %v2233 = vsub.f32 %v2227, %v2232
        %v2234 = vsel %vm1446, %v2233, -1e+30
        %v2235 = vmul.f32 %v2234, 1.442695
        %v2236 = vpow.pop %v2235
        %2237 = vset.pattern.permute.xlu0 1
        %2238 = vperm.xlu0 %2237, %v1095
        %v2239 = vpop.permute.xlu0 %2238
        %2241 = vrot.lane.b32.xlu0 %v1745, 64
        %v2242 = vpop.permute.xlu0 %2241
        %v2244 = vmul.f32 %v2239, %v2242
        %s2245 = scalar_lea.vmem [#allocation3], 128
        %v2246 = vld [vmem:[%s2245] sm:$0xff]
        %v2247 = vld [vmem:[%s2245 + $0x8] sm:$0xff]
        %v2248 = vld [vmem:[%s2245 + $0x10] sm:$0xff]
        %v2249 = vld [vmem:[%s2245 + $0x18] sm:$0xff]
        %v2250 = vld [vmem:[%s2245 + $0x20] sm:$0xff]
        %v2251 = vld [vmem:[%s2245 + $0x28] sm:$0xff]
        %v2252 = vld [vmem:[%s2245 + $0x30] sm:$0xff]
        %v2253 = vld [vmem:[%s2245 + $0x38] sm:$0xff]
        %v2254 = vld [vmem:[%s2245 + $0x40] sm:$0xff]
        %v2255 = vld [vmem:[%s2245 + $0x48] sm:$0xff]
        %v2256 = vld [vmem:[%s2245 + $0x50] sm:$0xff]
        %v2257 = vld [vmem:[%s2245 + $0x58] sm:$0xff]
        %v2258 = vld [vmem:[%s2245 + $0x60] sm:$0xff]
        %v2259 = vld [vmem:[%s2245 + $0x68] sm:$0xff]
        %v2260 = vld [vmem:[%s2245 + $0x70] sm:$0xff]
        %v2261 = vld [vmem:[%s2245 + $0x78] sm:$0xff]
        %v2262 = vmul.f32 %v1719, %v2236
        %2263 = vmatprep.subr.mxu0 0.0
        %2264 = vmatpush1.msra.mxu0 %v2246
        %2265 = vmatprep.subr.mxu0 0.0
        %2266 = vmatpush1.msra.mxu0 %v2247
        %2267 = vmatprep.subr.mxu0 0.0
        %2268 = vmatpush1.msra.mxu0 %v2248
        %2269 = vmatprep.subr.mxu0 0.0
        %2270 = vmatpush1.msra.mxu0 %v2249
        %2271 = vmatprep.subr.mxu0 0.0
        %2272 = vmatpush1.msra.mxu0 %v2250
        %2273 = vmatprep.subr.mxu0 0.0
        %2274 = vmatpush1.msra.mxu0 %v2251
        %2275 = vmatprep.subr.mxu0 0.0
        %2276 = vmatpush1.msra.mxu0 %v2252
        %2277 = vmatprep.subr.mxu0 0.0
        %2278 = vmatpush1.msra.mxu0 %v2253
        %2279 = vmatprep.subr.mxu0 0.0
        %2280 = vmatpush1.msra.mxu0 %v2254
        %2281 = vmatprep.subr.mxu0 0.0
        %2282 = vmatpush1.msra.mxu0 %v2255
        %2283 = vmatprep.subr.mxu0 0.0
        %2284 = vmatpush1.msra.mxu0 %v2256
        %2285 = vmatprep.subr.mxu0 0.0
        %2286 = vmatpush1.msra.mxu0 %v2257
        %2287 = vmatprep.subr.mxu0 0.0
        %2288 = vmatpush1.msra.mxu0 %v2258
        %2289 = vmatprep.subr.mxu0 0.0
        %2290 = vmatpush1.msra.mxu0 %v2259
        %2291 = vmatprep.subr.mxu0 0.0
        %2292 = vmatpush1.msra.mxu0 %v2260
        %2293 = vmatprep.subr.mxu0 0.0
        %2294 = vmatpush1.msra.mxu0 %v2261
        %2295 = vmatprep.subr.mxu0 0.0
        %2296 = vmatpush1.msra.mxu0 0.0
        %2297 = vmatprep.subr.mxu0 0.0
        %2298 = vmatpush1.msra.mxu0 0.0
        %2299 = vmatprep.subr.mxu0 0.0
        %2300 = vmatpush1.msra.mxu0 0.0
        %2301 = vmatprep.subr.mxu0 0.0
        %2302 = vmatpush1.msra.mxu0 0.0
        %2303 = vmatprep.subr.mxu0 0.0
        %2304 = vmatpush1.msra.mxu0 0.0
        %2305 = vmatprep.subr.mxu0 0.0
        %2306 = vmatpush1.msra.mxu0 0.0
        %2307 = vmatprep.subr.mxu0 0.0
        %2308 = vmatpush1.msra.mxu0 0.0
        %2309 = vmatprep.subr.mxu0 0.0
        %2310 = vmatpush1.msra.mxu0 0.0
        %2311 = vmatprep.subr.mxu0 0.0
        %2312 = vmatpush1.msra.mxu0 0.0
        %2313 = vmatprep.subr.mxu0 0.0
        %2314 = vmatpush1.msra.mxu0 0.0
        %2315 = vmatprep.subr.mxu0 0.0
        %2316 = vmatpush1.msra.mxu0 0.0
        %2317 = vmatprep.subr.mxu0 0.0
        %2318 = vmatpush1.msra.mxu0 0.0
        %2319 = vmatprep.subr.mxu0 0.0
        %2320 = vmatpush1.msra.mxu0 0.0
        %2321 = vmatprep.subr.mxu0 0.0
        %2322 = vmatpush1.msra.mxu0 0.0
        %2323 = vmatprep.subr.mxu0 0.0
        %2324 = vmatpush1.msra.mxu0 0.0
        %2325 = vmatprep.subr.mxu0 0.0
        %2326 = vmatpush1.msra.mxu0 0.0
        %2327 = vmatprep.mubr.f32.mxu0 0.0
        %2328 = vmatmul.mubr.f32.gmra.mrb[0].mxu0 %v1644
        %v2329 = vpop.f32.mrb[0].mxu0
        %v2330 = vadd.f32 0.0, %v2329
        %v2331 = vpop.f32.mrb[0].mxu0
        %2332 = vdwg.mxu0
        %2333 = vset.pattern.permute.xlu0 1
        %2334 = vperm.xlu0 %2333, %v1766
        %v2335 = vpop.permute.xlu0 %2334
        %v2337 = vmul.f32 %v2335, %v2330
        %v2339 = vsel %vm1452, %v2262, 0
        %2341 = vmatprep.subr.mxu0 0.0
        %2342 = vmatpush1.msra.mxu0 %v2244
        %2343 = vmatprep.subr.mxu0 0.0
        %2344 = vmatpush1.msra.mxu0 0.0
        %2345 = vmatprep.subr.mxu0 0.0
        %2346 = vmatpush1.msra.mxu0 0.0
        %2347 = vmatprep.subr.mxu0 0.0
        %2348 = vmatpush1.msra.mxu0 0.0
        %2349 = vmatprep.subr.mxu0 0.0
        %2350 = vmatpush1.msra.mxu0 0.0
        %2351 = vmatprep.subr.mxu0 0.0
        %2352 = vmatpush1.msra.mxu0 0.0
        %2353 = vmatprep.subr.mxu0 0.0
        %2354 = vmatpush1.msra.mxu0 0.0
        %2355 = vmatprep.subr.mxu0 0.0
        %2356 = vmatpush1.msra.mxu0 0.0
        %2357 = vmatprep.subr.mxu0 0.0
        %2358 = vmatpush1.msra.mxu0 0.0
        %2359 = vmatprep.subr.mxu0 0.0
        %2360 = vmatpush1.msra.mxu0 0.0
        %2361 = vmatprep.subr.mxu0 0.0
        %2362 = vmatpush1.msra.mxu0 0.0
        %2363 = vmatprep.subr.mxu0 0.0
        %2364 = vmatpush1.msra.mxu0 0.0
        %2365 = vmatprep.subr.mxu0 0.0
        %2366 = vmatpush1.msra.mxu0 0.0
        %2367 = vmatprep.subr.mxu0 0.0
        %2368 = vmatpush1.msra.mxu0 0.0
        %2369 = vmatprep.subr.mxu0 0.0
        %2370 = vmatpush1.msra.mxu0 0.0
        %2371 = vmatprep.subr.mxu0 0.0
        %2372 = vmatpush1.msra.mxu0 0.0
        %2373 = vmatprep.subr.mxu0 0.0
        %2374 = vmatpush1.msra.mxu0 0.0
        %2375 = vmatprep.subr.mxu0 0.0
        %2376 = vmatpush1.msra.mxu0 0.0
        %2377 = vmatprep.subr.mxu0 0.0
        %2378 = vmatpush1.msra.mxu0 0.0
        %2379 = vmatprep.subr.mxu0 0.0
        %2380 = vmatpush1.msra.mxu0 0.0
        %2381 = vmatprep.subr.mxu0 0.0
        %2382 = vmatpush1.msra.mxu0 0.0
        %2383 = vmatprep.subr.mxu0 0.0
        %2384 = vmatpush1.msra.mxu0 0.0
        %2385 = vmatprep.subr.mxu0 0.0
        %2386 = vmatpush1.msra.mxu0 0.0
        %2387 = vmatprep.subr.mxu0 0.0
        %2388 = vmatpush1.msra.mxu0 0.0
        %2389 = vmatprep.subr.mxu0 0.0
        %2390 = vmatpush1.msra.mxu0 0.0
        %2391 = vmatprep.subr.mxu0 0.0
        %2392 = vmatpush1.msra.mxu0 0.0
        %2393 = vmatprep.subr.mxu0 0.0
        %2394 = vmatpush1.msra.mxu0 0.0
        %2395 = vmatprep.subr.mxu0 0.0
        %2396 = vmatpush1.msra.mxu0 0.0
        %2397 = vmatprep.subr.mxu0 0.0
        %2398 = vmatpush1.msra.mxu0 0.0
        %2399 = vmatprep.subr.mxu0 0.0
        %2400 = vmatpush1.msra.mxu0 0.0
        %2401 = vmatprep.subr.mxu0 0.0
        %2402 = vmatpush1.msra.mxu0 0.0
        %2403 = vmatprep.subr.mxu0 0.0
        %2404 = vmatpush1.msra.mxu0 0.0
        %2405 = vmatprep.mubr.f32.mxu0 0.0
        %2406 = vmatmul.mubr.f32.gmra.mrb[0].mxu0 %v2339
        %v2407 = vpop.f32.mrb[0].mxu0
        %v2408 = vadd.f32 %v2337, %v2407
        %v2409 = vpop.f32.mrb[0].mxu0
        %2410 = vdwg.mxu0
        %2411 = vset.pattern.permute.xlu0 1
        %2412 = vperm.xlu0 %2411, %v1920
        %v2413 = vpop.permute.xlu0 %2412
        %v2415 = vmul.f32 %v2413, %v1419
        %v2416 = vmul.f32 %v2413, %v1423
        %v2419 = vrot.slane %v2415, 5
        %v2420 = vrot.slane %v2416, 5
        %v2421 = vsel %vm1641, %v2419, %v2420
        %2422 = vrot.lane.b32.xlu0 %v2421, 64
        %v2423 = vpop.permute.xlu0 %2422
        %v2425 = vadd.f32 %v2408, %v2423
        %2427 = vrot.lane.b32.xlu0 %v2425, 64
        %v2428 = vpop.permute.xlu0 %2427
        %vm2430 = vcmask 1048064
        %2431 = vst.msk [vmem:[#allocation4] sm:$0xff] %vm2430, %v2428
        %2432 = vset.pattern.permute.xlu0 1
        %2433 = vperm.xlu0 %2432, %v1938
        %v2434 = vpop.permute.xlu0 %2433
        %v2436 = vmul.f32 %v2434, %v1650
        %2437 = vset.pattern.permute.xlu0 1
        %2438 = vperm.xlu0 %2437, %v1946
        %v2439 = vpop.permute.xlu0 %2438
        %v2441 = vmul.f32 %v2439, %v2246
        %v2442 = vmul.f32 %v2439, %v2247
        %v2443 = vmul.f32 %v2439, %v2248
        %v2444 = vmul.f32 %v2439, %v2249
        %v2445 = vmul.f32 %v2439, %v2250
        %v2446 = vmul.f32 %v2439, %v2251
        %v2447 = vmul.f32 %v2439, %v2252
        %v2448 = vmul.f32 %v2439, %v2253
        %v2449 = vmul.f32 %v2439, %v2254
        %v2450 = vmul.f32 %v2439, %v2255
        %v2451 = vmul.f32 %v2439, %v2256
        %v2452 = vmul.f32 %v2439, %v2257
        %v2453 = vmul.f32 %v2439, %v2258
        %v2454 = vmul.f32 %v2439, %v2259
        %v2455 = vmul.f32 %v2439, %v2260
        %v2456 = vmul.f32 %v2439, %v2261
        %2457 = vxpose.xlu0.b32.start [1/16] %v2436, 128
        %2458 = vxpose.xlu0.b32.cont [2/16] 0.0, 128
        %2459 = vxpose.xlu0.b32.cont [3/16] 0.0, 128
        %2460 = vxpose.xlu0.b32.cont [4/16] 0.0, 128
        %2461 = vxpose.xlu0.b32.cont [5/16] 0.0, 128
        %2462 = vxpose.xlu0.b32.cont [6/16] 0.0, 128
        %2463 = vxpose.xlu0.b32.cont [7/16] 0.0, 128
        %2464 = vxpose.xlu0.b32.cont [8/16] 0.0, 128
        %2465 = vxpose.xlu0.b32.cont [9/16] 0.0, 128
        %2466 = vxpose.xlu0.b32.cont [10/16] 0.0, 128
        %2467 = vxpose.xlu0.b32.cont [11/16] 0.0, 128
        %2468 = vxpose.xlu0.b32.cont [12/16] 0.0, 128
        %2469 = vxpose.xlu0.b32.cont [13/16] 0.0, 128
        %2470 = vxpose.xlu0.b32.cont [14/16] 0.0, 128
        %2471 = vxpose.xlu0.b32.cont [15/16] 0.0, 128
        %2472 = vxpose.xlu0.b32.end [16/16] 0.0, 128
        %v2473 = vpop.trf.xlu0
        %v2474 = vpop.trf.xlu0
        %v2475 = vpop.trf.xlu0
        %v2476 = vpop.trf.xlu0
        %v2477 = vpop.trf.xlu0
        %v2478 = vpop.trf.xlu0
        %v2479 = vpop.trf.xlu0
        %v2480 = vpop.trf.xlu0
        %v2481 = vpop.trf.xlu0
        %v2482 = vpop.trf.xlu0
        %v2483 = vpop.trf.xlu0
        %v2484 = vpop.trf.xlu0
        %v2485 = vpop.trf.xlu0
        %v2486 = vpop.trf.xlu0
        %v2487 = vpop.trf.xlu0
        %v2488 = vpop.trf.xlu0
        %v2490 = vsel %vm1452, %v2473, 0
        %v2493 = vsel %vm1452, %v2474, 0
        %v2496 = vsel %vm1452, %v2475, 0
        %v2499 = vsel %vm1452, %v2476, 0
        %v2502 = vsel %vm1452, %v2477, 0
        %v2505 = vsel %vm1452, %v2478, 0
        %v2508 = vsel %vm1452, %v2479, 0
        %v2511 = vsel %vm1452, %v2480, 0
        %v2514 = vsel %vm1452, %v2481, 0
        %v2517 = vsel %vm1452, %v2482, 0
        %v2520 = vsel %vm1452, %v2483, 0
        %v2523 = vsel %vm1452, %v2484, 0
        %v2526 = vsel %vm1452, %v2485, 0
        %v2529 = vsel %vm1452, %v2486, 0
        %v2532 = vsel %vm1452, %v2487, 0
        %v2535 = vsel %vm1452, %v2488, 0
        %2537 = vmatprep.subr.mxu0 0.0
        %2538 = vmatpush1.msra.mxu0 %v2244
        %2539 = vmatprep.subr.mxu0 0.0
        %2540 = vmatpush1.msra.mxu0 0.0
        %2541 = vmatprep.subr.mxu0 0.0
        %2542 = vmatpush1.msra.mxu0 0.0
        %2543 = vmatprep.subr.mxu0 0.0
        %2544 = vmatpush1.msra.mxu0 0.0
        %2545 = vmatprep.subr.mxu0 0.0
        %2546 = vmatpush1.msra.mxu0 0.0
        %2547 = vmatprep.subr.mxu0 0.0
        %2548 = vmatpush1.msra.mxu0 0.0
        %2549 = vmatprep.subr.mxu0 0.0
        %2550 = vmatpush1.msra.mxu0 0.0
        %2551 = vmatprep.subr.mxu0 0.0
        %2552 = vmatpush1.msra.mxu0 0.0
        %2553 = vmatprep.subr.mxu0 0.0
        %2554 = vmatpush1.msra.mxu0 0.0
        %2555 = vmatprep.subr.mxu0 0.0
        %2556 = vmatpush1.msra.mxu0 0.0
        %2557 = vmatprep.subr.mxu0 0.0
        %2558 = vmatpush1.msra.mxu0 0.0
        %2559 = vmatprep.subr.mxu0 0.0
        %2560 = vmatpush1.msra.mxu0 0.0
        %2561 = vmatprep.subr.mxu0 0.0
        %2562 = vmatpush1.msra.mxu0 0.0
        %2563 = vmatprep.subr.mxu0 0.0
        %2564 = vmatpush1.msra.mxu0 0.0
        %2565 = vmatprep.subr.mxu0 0.0
        %2566 = vmatpush1.msra.mxu0 0.0
        %2567 = vmatprep.subr.mxu0 0.0
        %2568 = vmatpush1.msra.mxu0 0.0
        %2569 = vmatprep.subr.mxu0 0.0
        %2570 = vmatpush1.msra.mxu0 0.0
        %2571 = vmatprep.subr.mxu0 0.0
        %2572 = vmatpush1.msra.mxu0 0.0
        %2573 = vmatprep.subr.mxu0 0.0
        %2574 = vmatpush1.msra.mxu0 0.0
        %2575 = vmatprep.subr.mxu0 0.0
        %2576 = vmatpush1.msra.mxu0 0.0
        %2577 = vmatprep.subr.mxu0 0.0
        %2578 = vmatpush1.msra.mxu0 0.0
        %2579 = vmatprep.subr.mxu0 0.0
        %2580 = vmatpush1.msra.mxu0 0.0
        %2581 = vmatprep.subr.mxu0 0.0
        %2582 = vmatpush1.msra.mxu0 0.0
        %2583 = vmatprep.subr.mxu0 0.0
        %2584 = vmatpush1.msra.mxu0 0.0
        %2585 = vmatprep.subr.mxu0 0.0
        %2586 = vmatpush1.msra.mxu0 0.0
        %2587 = vmatprep.subr.mxu0 0.0
        %2588 = vmatpush1.msra.mxu0 0.0
        %2589 = vmatprep.subr.mxu0 0.0
        %2590 = vmatpush1.msra.mxu0 0.0
        %2591 = vmatprep.subr.mxu0 0.0
        %2592 = vmatpush1.msra.mxu0 0.0
        %2593 = vmatprep.subr.mxu0 0.0
        %2594 = vmatpush1.msra.mxu0 0.0
        %2595 = vmatprep.subr.mxu0 0.0
        %2596 = vmatpush1.msra.mxu0 0.0
        %2597 = vmatprep.subr.mxu0 0.0
        %2598 = vmatpush1.msra.mxu0 0.0
        %2599 = vmatprep.subr.mxu0 0.0
        %2600 = vmatpush1.msra.mxu0 0.0
        %2601 = vmatprep.mubr.f32.mxu0 0.0
        %2602 = vmatmul.mubr.f32.gmra.mrb[0].mxu0 %v2490
        %v2603 = vpop.f32.mrb[0].mxu0
        %v2604 = vadd.f32 0.0, %v2603
        %v2605 = vpop.f32.mrb[0].mxu0
        %2606 = vmatprep.mubr.f32.mxu0 0.0
        %2607 = vmatmul.mubr.f32.gmra.mrb[0].mxu0 %v2493
        %v2608 = vpop.f32.mrb[0].mxu0
        %v2609 = vadd.f32 0.0, %v2608
        %v2610 = vpop.f32.mrb[0].mxu0
        %2611 = vmatprep.mubr.f32.mxu0 0.0
        %2612 = vmatmul.mubr.f32.gmra.mrb[0].mxu0 %v2496
        %v2613 = vpop.f32.mrb[0].mxu0
        %v2614 = vadd.f32 0.0, %v2613
        %v2615 = vpop.f32.mrb[0].mxu0
        %2616 = vmatprep.mubr.f32.mxu0 0.0
        %2617 = vmatmul.mubr.f32.gmra.mrb[0].mxu0 %v2499
        %v2618 = vpop.f32.mrb[0].mxu0
        %v2619 = vadd.f32 0.0, %v2618
        %v2620 = vpop.f32.mrb[0].mxu0
        %2621 = vmatprep.mubr.f32.mxu0 0.0
        %2622 = vmatmul.mubr.f32.gmra.mrb[0].mxu0 %v2502
        %v2623 = vpop.f32.mrb[0].mxu0
        %v2624 = vadd.f32 0.0, %v2623
        %v2625 = vpop.f32.mrb[0].mxu0
        %2626 = vmatprep.mubr.f32.mxu0 0.0
        %2627 = vmatmul.mubr.f32.gmra.mrb[0].mxu0 %v2505
        %v2628 = vpop.f32.mrb[0].mxu0
        %v2629 = vadd.f32 0.0, %v2628
        %v2630 = vpop.f32.mrb[0].mxu0
        %2631 = vmatprep.mubr.f32.mxu0 0.0
        %2632 = vmatmul.mubr.f32.gmra.mrb[0].mxu0 %v2508
        %v2633 = vpop.f32.mrb[0].mxu0
        %v2634 = vadd.f32 0.0, %v2633
        %v2635 = vpop.f32.mrb[0].mxu0
        %2636 = vmatprep.mubr.f32.mxu0 0.0
        %2637 = vmatmul.mubr.f32.gmra.mrb[0].mxu0 %v2511
        %v2638 = vpop.f32.mrb[0].mxu0
        %v2639 = vadd.f32 0.0, %v2638
        %v2640 = vpop.f32.mrb[0].mxu0
        %2641 = vmatprep.mubr.f32.mxu0 0.0
        %2642 = vmatmul.mubr.f32.gmra.mrb[0].mxu0 %v2514
        %v2643 = vpop.f32.mrb[0].mxu0
        %v2644 = vadd.f32 0.0, %v2643
        %v2645 = vpop.f32.mrb[0].mxu0
        %2646 = vmatprep.mubr.f32.mxu0 0.0
        %2647 = vmatmul.mubr.f32.gmra.mrb[0].mxu0 %v2517
        %v2648 = vpop.f32.mrb[0].mxu0
        %v2649 = vadd.f32 0.0, %v2648
        %v2650 = vpop.f32.mrb[0].mxu0
        %2651 = vmatprep.mubr.f32.mxu0 0.0
        %2652 = vmatmul.mubr.f32.gmra.mrb[0].mxu0 %v2520
        %v2653 = vpop.f32.mrb[0].mxu0
        %v2654 = vadd.f32 0.0, %v2653
        %v2655 = vpop.f32.mrb[0].mxu0
        %2656 = vmatprep.mubr.f32.mxu0 0.0
        %2657 = vmatmul.mubr.f32.gmra.mrb[0].mxu0 %v2523
        %v2658 = vpop.f32.mrb[0].mxu0
        %v2659 = vadd.f32 0.0, %v2658
        %v2660 = vpop.f32.mrb[0].mxu0
        %2661 = vmatprep.mubr.f32.mxu0 0.0
        %2662 = vmatmul.mubr.f32.gmra.mrb[0].mxu0 %v2526
        %v2663 = vpop.f32.mrb[0].mxu0
        %v2664 = vadd.f32 0.0, %v2663
        %v2665 = vpop.f32.mrb[0].mxu0
        %2666 = vmatprep.mubr.f32.mxu0 0.0
        %2667 = vmatmul.mubr.f32.gmra.mrb[0].mxu0 %v2529
        %v2668 = vpop.f32.mrb[0].mxu0
        %v2669 = vadd.f32 0.0, %v2668
        %v2670 = vpop.f32.mrb[0].mxu0
        %2671 = vmatprep.mubr.f32.mxu0 0.0
        %2672 = vmatmul.mubr.f32.gmra.mrb[0].mxu0 %v2532
        %v2673 = vpop.f32.mrb[0].mxu0
        %v2674 = vadd.f32 0.0, %v2673
        %v2675 = vpop.f32.mrb[0].mxu0
        %2676 = vmatprep.mubr.f32.mxu0 0.0
        %2677 = vmatmul.mubr.f32.gmra.mrb[0].mxu0 %v2535
        %v2678 = vpop.f32.mrb[0].mxu0
        %v2679 = vadd.f32 0.0, %v2678
        %v2680 = vpop.f32.mrb[0].mxu0
        %2681 = vdwg.mxu0
        %v2682 = vadd.f32 %v2441, %v2604
        %v2683 = vadd.f32 %v2442, %v2609
        %v2684 = vadd.f32 %v2443, %v2614
        %v2685 = vadd.f32 %v2444, %v2619
        %v2686 = vadd.f32 %v2445, %v2624
        %v2687 = vadd.f32 %v2446, %v2629
        %v2688 = vadd.f32 %v2447, %v2634
        %v2689 = vadd.f32 %v2448, %v2639
        %v2690 = vadd.f32 %v2449, %v2644
        %v2691 = vadd.f32 %v2450, %v2649
        %v2692 = vadd.f32 %v2451, %v2654
        %v2693 = vadd.f32 %v2452, %v2659
        %v2694 = vadd.f32 %v2453, %v2664
        %v2695 = vadd.f32 %v2454, %v2669
        %v2696 = vadd.f32 %v2455, %v2674
        %v2697 = vadd.f32 %v2456, %v2679
        %2698 = vst.msk [vmem:[%s2245] sm:$0xff] %vm1934, %v2682
        %2699 = vst.msk [vmem:[%s2245 + $0x8] sm:$0xff] %vm1934, %v2683
        %2700 = vst.msk [vmem:[%s2245 + $0x10] sm:$0xff] %vm1934, %v2684
        %2701 = vst.msk [vmem:[%s2245 + $0x18] sm:$0xff] %vm1934, %v2685
        %2702 = vst.msk [vmem:[%s2245 + $0x20] sm:$0xff] %vm1934, %v2686
        %2703 = vst.msk [vmem:[%s2245 + $0x28] sm:$0xff] %vm1934, %v2687
        %2704 = vst.msk [vmem:[%s2245 + $0x30] sm:$0xff] %vm1934, %v2688
        %2705 = vst.msk [vmem:[%s2245 + $0x38] sm:$0xff] %vm1934, %v2689
        %2706 = vst.msk [vmem:[%s2245 + $0x40] sm:$0xff] %vm1934, %v2690
        %2707 = vst.msk [vmem:[%s2245 + $0x48] sm:$0xff] %vm1934, %v2691
        %2708 = vst.msk [vmem:[%s2245 + $0x50] sm:$0xff] %vm1934, %v2692
        %2709 = vst.msk [vmem:[%s2245 + $0x58] sm:$0xff] %vm1934, %v2693
        %2710 = vst.msk [vmem:[%s2245 + $0x60] sm:$0xff] %vm1934, %v2694
        %2711 = vst.msk [vmem:[%s2245 + $0x68] sm:$0xff] %vm1934, %v2695
        %2712 = vst.msk [vmem:[%s2245 + $0x70] sm:$0xff] %vm1934, %v2696
        %2713 = vst.msk [vmem:[%s2245 + $0x78] sm:$0xff] %vm1934, %v2697
        %2714 = vset.pattern.permute.xlu0 2
        %2715 = vperm.xlu0 %2714, %v1523
        %v2716 = vpop.permute.xlu0 %2715
        %v2718 = vlaneseq
        %v2719 = vshrl.u32 %v2718, 7
        %v2720 = vsub.s32 2, %v2719
        %v2721 = vrot.slane %v1628, %v2720
        %v2722 = vsub.f32 %v2716, %v2721
        %v2723 = vsel %vm1446, %v2722, -1e+30
        %v2724 = vmul.f32 %v2723, 1.442695
        %v2725 = vpow.pop %v2724
        %2726 = vset.pattern.permute.xlu0 2
        %2727 = vperm.xlu0 %2726, %v1095
        %v2728 = vpop.permute.xlu0 %2727
        %v2732 = vrot.slane %v1420, 5
        %v2733 = vrot.slane %v1424, 5
        %v2734 = vsel %vm1641, %v2732, %v2733
        %v2736 = vmul.f32 %v2728, %v2734
        %s2737 = scalar_lea.vmem [#allocation3], 256
        %v2738 = vld [vmem:[%s2737] sm:$0xff]
        %v2739 = vld [vmem:[%s2737 + $0x8] sm:$0xff]
        %v2740 = vld [vmem:[%s2737 + $0x10] sm:$0xff]
        %v2741 = vld [vmem:[%s2737 + $0x18] sm:$0xff]
        %v2742 = vld [vmem:[%s2737 + $0x20] sm:$0xff]
        %v2743 = vld [vmem:[%s2737 + $0x28] sm:$0xff]
        %v2744 = vld [vmem:[%s2737 + $0x30] sm:$0xff]
        %v2745 = vld [vmem:[%s2737 + $0x38] sm:$0xff]
        %v2746 = vld [vmem:[%s2737 + $0x40] sm:$0xff]
        %v2747 = vld [vmem:[%s2737 + $0x48] sm:$0xff]
        %v2748 = vld [vmem:[%s2737 + $0x50] sm:$0xff]
        %v2749 = vld [vmem:[%s2737 + $0x58] sm:$0xff]
        %v2750 = vld [vmem:[%s2737 + $0x60] sm:$0xff]
        %v2751 = vld [vmem:[%s2737 + $0x68] sm:$0xff]
        %v2752 = vld [vmem:[%s2737 + $0x70] sm:$0xff]
        %v2753 = vld [vmem:[%s2737 + $0x78] sm:$0xff]
        %v2754 = vmul.f32 %v1719, %v2725
        %2755 = vmatprep.subr.mxu0 0.0
        %2756 = vmatpush1.msra.mxu0 %v2738
        %2757 = vmatprep.subr.mxu0 0.0
        %2758 = vmatpush1.msra.mxu0 %v2739
        %2759 = vmatprep.subr.mxu0 0.0
        %2760 = vmatpush1.msra.mxu0 %v2740
        %2761 = vmatprep.subr.mxu0 0.0
        %2762 = vmatpush1.msra.mxu0 %v2741
        %2763 = vmatprep.subr.mxu0 0.0
        %2764 = vmatpush1.msra.mxu0 %v2742
        %2765 = vmatprep.subr.mxu0 0.0
        %2766 = vmatpush1.msra.mxu0 %v2743
        %2767 = vmatprep.subr.mxu0 0.0
        %2768 = vmatpush1.msra.mxu0 %v2744
        %2769 = vmatprep.subr.mxu0 0.0
        %2770 = vmatpush1.msra.mxu0 %v2745
        %2771 = vmatprep.subr.mxu0 0.0
        %2772 = vmatpush1.msra.mxu0 %v2746
        %2773 = vmatprep.subr.mxu0 0.0
        %2774 = vmatpush1.msra.mxu0 %v2747
        %2775 = vmatprep.subr.mxu0 0.0
        %2776 = vmatpush1.msra.mxu0 %v2748
        %2777 = vmatprep.subr.mxu0 0.0
        %2778 = vmatpush1.msra.mxu0 %v2749
        %2779 = vmatprep.subr.mxu0 0.0
        %2780 = vmatpush1.msra.mxu0 %v2750
        %2781 = vmatprep.subr.mxu0 0.0
        %2782 = vmatpush1.msra.mxu0 %v2751
        %2783 = vmatprep.subr.mxu0 0.0
        %2784 = vmatpush1.msra.mxu0 %v2752
        %2785 = vmatprep.subr.mxu0 0.0
        %2786 = vmatpush1.msra.mxu0 %v2753
        %2787 = vmatprep.subr.mxu0 0.0
        %2788 = vmatpush1.msra.mxu0 0.0
        %2789 = vmatprep.subr.mxu0 0.0
        %2790 = vmatpush1.msra.mxu0 0.0
        %2791 = vmatprep.subr.mxu0 0.0
        %2792 = vmatpush1.msra.mxu0 0.0
        %2793 = vmatprep.subr.mxu0 0.0
        %2794 = vmatpush1.msra.mxu0 0.0
        %2795 = vmatprep.subr.mxu0 0.0
        %2796 = vmatpush1.msra.mxu0 0.0
        %2797 = vmatprep.subr.mxu0 0.0
        %2798 = vmatpush1.msra.mxu0 0.0
        %2799 = vmatprep.subr.mxu0 0.0
        %2800 = vmatpush1.msra.mxu0 0.0
        %2801 = vmatprep.subr.mxu0 0.0
        %2802 = vmatpush1.msra.mxu0 0.0
        %2803 = vmatprep.subr.mxu0 0.0
        %2804 = vmatpush1.msra.mxu0 0.0
        %2805 = vmatprep.subr.mxu0 0.0
        %2806 = vmatpush1.msra.mxu0 0.0
        %2807 = vmatprep.subr.mxu0 0.0
        %2808 = vmatpush1.msra.mxu0 0.0
        %2809 = vmatprep.subr.mxu0 0.0
        %2810 = vmatpush1.msra.mxu0 0.0
        %2811 = vmatprep.subr.mxu0 0.0
        %2812 = vmatpush1.msra.mxu0 0.0
        %2813 = vmatprep.subr.mxu0 0.0
        %2814 = vmatpush1.msra.mxu0 0.0
        %2815 = vmatprep.subr.mxu0 0.0
        %2816 = vmatpush1.msra.mxu0 0.0
        %2817 = vmatprep.subr.mxu0 0.0
        %2818 = vmatpush1.msra.mxu0 0.0
        %2819 = vmatprep.mubr.f32.mxu0 0.0
        %2820 = vmatmul.mubr.f32.gmra.mrb[0].mxu0 %v1644
        %v2821 = vpop.f32.mrb[0].mxu0
        %v2822 = vadd.f32 0.0, %v2821
        %v2823 = vpop.f32.mrb[0].mxu0
        %2824 = vdwg.mxu0
        %2825 = vset.pattern.permute.xlu0 2
        %2826 = vperm.xlu0 %2825, %v1766
        %v2827 = vpop.permute.xlu0 %2826
        %v2829 = vmul.f32 %v2827, %v2822
        %v2831 = vsel %vm1452, %v2754, 0
        %2833 = vmatprep.subr.mxu0 0.0
        %2834 = vmatpush1.msra.mxu0 %v2736
        %2835 = vmatprep.subr.mxu0 0.0
        %2836 = vmatpush1.msra.mxu0 0.0
        %2837 = vmatprep.subr.mxu0 0.0
        %2838 = vmatpush1.msra.mxu0 0.0
        %2839 = vmatprep.subr.mxu0 0.0
        %2840 = vmatpush1.msra.mxu0 0.0
        %2841 = vmatprep.subr.mxu0 0.0
        %2842 = vmatpush1.msra.mxu0 0.0
        %2843 = vmatprep.subr.mxu0 0.0
        %2844 = vmatpush1.msra.mxu0 0.0
        %2845 = vmatprep.subr.mxu0 0.0
        %2846 = vmatpush1.msra.mxu0 0.0
        %2847 = vmatprep.subr.mxu0 0.0
        %2848 = vmatpush1.msra.mxu0 0.0
        %2849 = vmatprep.subr.mxu0 0.0
        %2850 = vmatpush1.msra.mxu0 0.0
        %2851 = vmatprep.subr.mxu0 0.0
        %2852 = vmatpush1.msra.mxu0 0.0
        %2853 = vmatprep.subr.mxu0 0.0
        %2854 = vmatpush1.msra.mxu0 0.0
        %2855 = vmatprep.subr.mxu0 0.0
        %2856 = vmatpush1.msra.mxu0 0.0
        %2857 = vmatprep.subr.mxu0 0.0
        %2858 = vmatpush1.msra.mxu0 0.0
        %2859 = vmatprep.subr.mxu0 0.0
        %2860 = vmatpush1.msra.mxu0 0.0
        %2861 = vmatprep.subr.mxu0 0.0
        %2862 = vmatpush1.msra.mxu0 0.0
        %2863 = vmatprep.subr.mxu0 0.0
        %2864 = vmatpush1.msra.mxu0 0.0
        %2865 = vmatprep.subr.mxu0 0.0
        %2866 = vmatpush1.msra.mxu0 0.0
        %2867 = vmatprep.subr.mxu0 0.0
        %2868 = vmatpush1.msra.mxu0 0.0
        %2869 = vmatprep.subr.mxu0 0.0
        %2870 = vmatpush1.msra.mxu0 0.0
        %2871 = vmatprep.subr.mxu0 0.0
        %2872 = vmatpush1.msra.mxu0 0.0
        %2873 = vmatprep.subr.mxu0 0.0
        %2874 = vmatpush1.msra.mxu0 0.0
        %2875 = vmatprep.subr.mxu0 0.0
        %2876 = vmatpush1.msra.mxu0 0.0
        %2877 = vmatprep.subr.mxu0 0.0
        %2878 = vmatpush1.msra.mxu0 0.0
        %2879 = vmatprep.subr.mxu0 0.0
        %2880 = vmatpush1.msra.mxu0 0.0
        %2881 = vmatprep.subr.mxu0 0.0
        %2882 = vmatpush1.msra.mxu0 0.0
        %2883 = vmatprep.subr.mxu0 0.0
        %2884 = vmatpush1.msra.mxu0 0.0
        %2885 = vmatprep.subr.mxu0 0.0
        %2886 = vmatpush1.msra.mxu0 0.0
        %2887 = vmatprep.subr.mxu0 0.0
        %2888 = vmatpush1.msra.mxu0 0.0
        %2889 = vmatprep.subr.mxu0 0.0
        %2890 = vmatpush1.msra.mxu0 0.0
        %2891 = vmatprep.subr.mxu0 0.0
        %2892 = vmatpush1.msra.mxu0 0.0
        %2893 = vmatprep.subr.mxu0 0.0
        %2894 = vmatpush1.msra.mxu0 0.0
        %2895 = vmatprep.subr.mxu0 0.0
        %2896 = vmatpush1.msra.mxu0 0.0
        %2897 = vmatprep.mubr.f32.mxu0 0.0
        %2898 = vmatmul.mubr.f32.gmra.mrb[0].mxu0 %v2831
        %v2899 = vpop.f32.mrb[0].mxu0
        %v2900 = vadd.f32 %v2829, %v2899
        %v2901 = vpop.f32.mrb[0].mxu0
        %2902 = vdwg.mxu0
        %2903 = vset.pattern.permute.xlu0 2
        %2904 = vperm.xlu0 %2903, %v1920
        %v2905 = vpop.permute.xlu0 %2904
        %v2907 = vmul.f32 %v2905, %v1420
        %v2908 = vmul.f32 %v2905, %v1424
        %v2911 = vrot.slane %v2907, 5
        %v2912 = vrot.slane %v2908, 5
        %v2913 = vsel %vm1641, %v2911, %v2912
        %v2915 = vadd.f32 %v2900, %v2913
        %2916 = vst.msk [vmem:[#allocation4 + $0x8] sm:$0xff] %vm1934, %v2915
        %2917 = vset.pattern.permute.xlu0 2
        %2918 = vperm.xlu0 %2917, %v1938
        %v2919 = vpop.permute.xlu0 %2918
        %v2921 = vmul.f32 %v2919, %v1650
        %2922 = vset.pattern.permute.xlu0 2
        %2923 = vperm.xlu0 %2922, %v1946
        %v2924 = vpop.permute.xlu0 %2923
        %v2926 = vmul.f32 %v2924, %v2738
        %v2927 = vmul.f32 %v2924, %v2739
        %v2928 = vmul.f32 %v2924, %v2740
        %v2929 = vmul.f32 %v2924, %v2741
        %v2930 = vmul.f32 %v2924, %v2742
        %v2931 = vmul.f32 %v2924, %v2743
        %v2932 = vmul.f32 %v2924, %v2744
        %v2933 = vmul.f32 %v2924, %v2745
        %v2934 = vmul.f32 %v2924, %v2746
        %v2935 = vmul.f32 %v2924, %v2747
        %v2936 = vmul.f32 %v2924, %v2748
        %v2937 = vmul.f32 %v2924, %v2749
        %v2938 = vmul.f32 %v2924, %v2750
        %v2939 = vmul.f32 %v2924, %v2751
        %v2940 = vmul.f32 %v2924, %v2752
        %v2941 = vmul.f32 %v2924, %v2753
        %2942 = vxpose.xlu0.b32.start [1/16] %v2921, 128
        %2943 = vxpose.xlu0.b32.cont [2/16] 0.0, 128
        %2944 = vxpose.xlu0.b32.cont [3/16] 0.0, 128
        %2945 = vxpose.xlu0.b32.cont [4/16] 0.0, 128
        %2946 = vxpose.xlu0.b32.cont [5/16] 0.0, 128
        %2947 = vxpose.xlu0.b32.cont [6/16] 0.0, 128
        %2948 = vxpose.xlu0.b32.cont [7/16] 0.0, 128
        %2949 = vxpose.xlu0.b32.cont [8/16] 0.0, 128
        %2950 = vxpose.xlu0.b32.cont [9/16] 0.0, 128
        %2951 = vxpose.xlu0.b32.cont [10/16] 0.0, 128
        %2952 = vxpose.xlu0.b32.cont [11/16] 0.0, 128
        %2953 = vxpose.xlu0.b32.cont [12/16] 0.0, 128
        %2954 = vxpose.xlu0.b32.cont [13/16] 0.0, 128
        %2955 = vxpose.xlu0.b32.cont [14/16] 0.0, 128
        %2956 = vxpose.xlu0.b32.cont [15/16] 0.0, 128
        %2957 = vxpose.xlu0.b32.end [16/16] 0.0, 128
        %v2958 = vpop.trf.xlu0
        %v2959 = vpop.trf.xlu0
        %v2960 = vpop.trf.xlu0
        %v2961 = vpop.trf.xlu0
        %v2962 = vpop.trf.xlu0
        %v2963 = vpop.trf.xlu0
        %v2964 = vpop.trf.xlu0
        %v2965 = vpop.trf.xlu0
        %v2966 = vpop.trf.xlu0
        %v2967 = vpop.trf.xlu0
        %v2968 = vpop.trf.xlu0
        %v2969 = vpop.trf.xlu0
        %v2970 = vpop.trf.xlu0
        %v2971 = vpop.trf.xlu0
        %v2972 = vpop.trf.xlu0
        %v2973 = vpop.trf.xlu0
        %v2975 = vsel %vm1452, %v2958, 0
        %v2978 = vsel %vm1452, %v2959, 0
        %v2981 = vsel %vm1452, %v2960, 0
        %v2984 = vsel %vm1452, %v2961, 0
        %v2987 = vsel %vm1452, %v2962, 0
        %v2990 = vsel %vm1452, %v2963, 0
        %v2993 = vsel %vm1452, %v2964, 0
        %v2996 = vsel %vm1452, %v2965, 0
        %v2999 = vsel %vm1452, %v2966, 0
        %v3002 = vsel %vm1452, %v2967, 0
        %v3005 = vsel %vm1452, %v2968, 0
        %v3008 = vsel %vm1452, %v2969, 0
        %v3011 = vsel %vm1452, %v2970, 0
        %v3014 = vsel %vm1452, %v2971, 0
        %v3017 = vsel %vm1452, %v2972, 0
        %v3020 = vsel %vm1452, %v2973, 0
        %3022 = vmatprep.subr.mxu0 0.0
        %3023 = vmatpush1.msra.mxu0 %v2736
        %3024 = vmatprep.subr.mxu0 0.0
        %3025 = vmatpush1.msra.mxu0 0.0
        %3026 = vmatprep.subr.mxu0 0.0
        %3027 = vmatpush1.msra.mxu0 0.0
        %3028 = vmatprep.subr.mxu0 0.0
        %3029 = vmatpush1.msra.mxu0 0.0
        %3030 = vmatprep.subr.mxu0 0.0
        %3031 = vmatpush1.msra.mxu0 0.0
        %3032 = vmatprep.subr.mxu0 0.0
        %3033 = vmatpush1.msra.mxu0 0.0
        %3034 = vmatprep.subr.mxu0 0.0
        %3035 = vmatpush1.msra.mxu0 0.0
        %3036 = vmatprep.subr.mxu0 0.0
        %3037 = vmatpush1.msra.mxu0 0.0
        %3038 = vmatprep.subr.mxu0 0.0
        %3039 = vmatpush1.msra.mxu0 0.0
        %3040 = vmatprep.subr.mxu0 0.0
        %3041 = vmatpush1.msra.mxu0 0.0
        %3042 = vmatprep.subr.mxu0 0.0
        %3043 = vmatpush1.msra.mxu0 0.0
        %3044 = vmatprep.subr.mxu0 0.0
        %3045 = vmatpush1.msra.mxu0 0.0
        %3046 = vmatprep.subr.mxu0 0.0
        %3047 = vmatpush1.msra.mxu0 0.0
        %3048 = vmatprep.subr.mxu0 0.0
        %3049 = vmatpush1.msra.mxu0 0.0
        %3050 = vmatprep.subr.mxu0 0.0
        %3051 = vmatpush1.msra.mxu0 0.0
        %3052 = vmatprep.subr.mxu0 0.0
        %3053 = vmatpush1.msra.mxu0 0.0
        %3054 = vmatprep.subr.mxu0 0.0
        %3055 = vmatpush1.msra.mxu0 0.0
        %3056 = vmatprep.subr.mxu0 0.0
        %3057 = vmatpush1.msra.mxu0 0.0
        %3058 = vmatprep.subr.mxu0 0.0
        %3059 = vmatpush1.msra.mxu0 0.0
        %3060 = vmatprep.subr.mxu0 0.0
        %3061 = vmatpush1.msra.mxu0 0.0
        %3062 = vmatprep.subr.mxu0 0.0
        %3063 = vmatpush1.msra.mxu0 0.0
        %3064 = vmatprep.subr.mxu0 0.0
        %3065 = vmatpush1.msra.mxu0 0.0
        %3066 = vmatprep.subr.mxu0 0.0
        %3067 = vmatpush1.msra.mxu0 0.0
        %3068 = vmatprep.subr.mxu0 0.0
        %3069 = vmatpush1.msra.mxu0 0.0
        %3070 = vmatprep.subr.mxu0 0.0
        %3071 = vmatpush1.msra.mxu0 0.0
        %3072 = vmatprep.subr.mxu0 0.0
        %3073 = vmatpush1.msra.mxu0 0.0
        %3074 = vmatprep.subr.mxu0 0.0
        %3075 = vmatpush1.msra.mxu0 0.0
        %3076 = vmatprep.subr.mxu0 0.0
        %3077 = vmatpush1.msra.mxu0 0.0
        %3078 = vmatprep.subr.mxu0 0.0
        %3079 = vmatpush1.msra.mxu0 0.0
        %3080 = vmatprep.subr.mxu0 0.0
        %3081 = vmatpush1.msra.mxu0 0.0
        %3082 = vmatprep.subr.mxu0 0.0
        %3083 = vmatpush1.msra.mxu0 0.0
        %3084 = vmatprep.subr.mxu0 0.0
        %3085 = vmatpush1.msra.mxu0 0.0
        %3086 = vmatprep.mubr.f32.mxu0 0.0
        %3087 = vmatmul.mubr.f32.gmra.mrb[0].mxu0 %v2975
        %v3088 = vpop.f32.mrb[0].mxu0
        %v3089 = vadd.f32 0.0, %v3088
        %v3090 = vpop.f32.mrb[0].mxu0
        %3091 = vmatprep.mubr.f32.mxu0 0.0
        %3092 = vmatmul.mubr.f32.gmra.mrb[0].mxu0 %v2978
        %v3093 = vpop.f32.mrb[0].mxu0
        %v3094 = vadd.f32 0.0, %v3093
        %v3095 = vpop.f32.mrb[0].mxu0
        %3096 = vmatprep.mubr.f32.mxu0 0.0
        %3097 = vmatmul.mubr.f32.gmra.mrb[0].mxu0 %v2981
        %v3098 = vpop.f32.mrb[0].mxu0
        %v3099 = vadd.f32 0.0, %v3098
        %v3100 = vpop.f32.mrb[0].mxu0
        %3101 = vmatprep.mubr.f32.mxu0 0.0
        %3102 = vmatmul.mubr.f32.gmra.mrb[0].mxu0 %v2984
        %v3103 = vpop.f32.mrb[0].mxu0
        %v3104 = vadd.f32 0.0, %v3103
        %v3105 = vpop.f32.mrb[0].mxu0
        %3106 = vmatprep.mubr.f32.mxu0 0.0
        %3107 = vmatmul.mubr.f32.gmra.mrb[0].mxu0 %v2987
        %v3108 = vpop.f32.mrb[0].mxu0
        %v3109 = vadd.f32 0.0, %v3108
        %v3110 = vpop.f32.mrb[0].mxu0
        %3111 = vmatprep.mubr.f32.mxu0 0.0
        %3112 = vmatmul.mubr.f32.gmra.mrb[0].mxu0 %v2990
        %v3113 = vpop.f32.mrb[0].mxu0
        %v3114 = vadd.f32 0.0, %v3113
        %v3115 = vpop.f32.mrb[0].mxu0
        %3116 = vmatprep.mubr.f32.mxu0 0.0
        %3117 = vmatmul.mubr.f32.gmra.mrb[0].mxu0 %v2993
        %v3118 = vpop.f32.mrb[0].mxu0
        %v3119 = vadd.f32 0.0, %v3118
        %v3120 = vpop.f32.mrb[0].mxu0
        %3121 = vmatprep.mubr.f32.mxu0 0.0
        %3122 = vmatmul.mubr.f32.gmra.mrb[0].mxu0 %v2996
        %v3123 = vpop.f32.mrb[0].mxu0
        %v3124 = vadd.f32 0.0, %v3123
        %v3125 = vpop.f32.mrb[0].mxu0
        %3126 = vmatprep.mubr.f32.mxu0 0.0
        %3127 = vmatmul.mubr.f32.gmra.mrb[0].mxu0 %v2999
        %v3128 = vpop.f32.mrb[0].mxu0
        %v3129 = vadd.f32 0.0, %v3128
        %v3130 = vpop.f32.mrb[0].mxu0
        %3131 = vmatprep.mubr.f32.mxu0 0.0
        %3132 = vmatmul.mubr.f32.gmra.mrb[0].mxu0 %v3002
        %v3133 = vpop.f32.mrb[0].mxu0
        %v3134 = vadd.f32 0.0, %v3133
        %v3135 = vpop.f32.mrb[0].mxu0
        %3136 = vmatprep.mubr.f32.mxu0 0.0
        %3137 = vmatmul.mubr.f32.gmra.mrb[0].mxu0 %v3005
        %v3138 = vpop.f32.mrb[0].mxu0
        %v3139 = vadd.f32 0.0, %v3138
        %v3140 = vpop.f32.mrb[0].mxu0
        %3141 = vmatprep.mubr.f32.mxu0 0.0
        %3142 = vmatmul.mubr.f32.gmra.mrb[0].mxu0 %v3008
        %v3143 = vpop.f32.mrb[0].mxu0
        %v3144 = vadd.f32 0.0, %v3143
        %v3145 = vpop.f32.mrb[0].mxu0
        %3146 = vmatprep.mubr.f32.mxu0 0.0
        %3147 = vmatmul.mubr.f32.gmra.mrb[0].mxu0 %v3011
        %v3148 = vpop.f32.mrb[0].mxu0
        %v3149 = vadd.f32 0.0, %v3148
        %v3150 = vpop.f32.mrb[0].mxu0
        %3151 = vmatprep.mubr.f32.mxu0 0.0
        %3152 = vmatmul.mubr.f32.gmra.mrb[0].mxu0 %v3014
        %v3153 = vpop.f32.mrb[0].mxu0
        %v3154 = vadd.f32 0.0, %v3153
        %v3155 = vpop.f32.mrb[0].mxu0
        %3156 = vmatprep.mubr.f32.mxu0 0.0
        %3157 = vmatmul.mubr.f32.gmra.mrb[0].mxu0 %v3017
        %v3158 = vpop.f32.mrb[0].mxu0
        %v3159 = vadd.f32 0.0, %v3158
        %v3160 = vpop.f32.mrb[0].mxu0
        %3161 = vmatprep.mubr.f32.mxu0 0.0
        %3162 = vmatmul.mubr.f32.gmra.mrb[0].mxu0 %v3020
        %v3163 = vpop.f32.mrb[0].mxu0
        %v3164 = vadd.f32 0.0, %v3163
        %v3165 = vpop.f32.mrb[0].mxu0
        %3166 = vdwg.mxu0
        %v3167 = vadd.f32 %v2926, %v3089
        %v3168 = vadd.f32 %v2927, %v3094
        %v3169 = vadd.f32 %v2928, %v3099
        %v3170 = vadd.f32 %v2929, %v3104
        %v3171 = vadd.f32 %v2930, %v3109
        %v3172 = vadd.f32 %v2931, %v3114
        %v3173 = vadd.f32 %v2932, %v3119
        %v3174 = vadd.f32 %v2933, %v3124
        %v3175 = vadd.f32 %v2934, %v3129
        %v3176 = vadd.f32 %v2935, %v3134
        %v3177 = vadd.f32 %v2936, %v3139
        %v3178 = vadd.f32 %v2937, %v3144
        %v3179 = vadd.f32 %v2938, %v3149
        %v3180 = vadd.f32 %v2939, %v3154
        %v3181 = vadd.f32 %v2940, %v3159
        %v3182 = vadd.f32 %v2941, %v3164
        %3183 = vst.msk [vmem:[%s2737] sm:$0xff] %vm1934, %v3167
        %3184 = vst.msk [vmem:[%s2737 + $0x8] sm:$0xff] %vm1934, %v3168
        %3185 = vst.msk [vmem:[%s2737 + $0x10] sm:$0xff] %vm1934, %v3169
        %3186 = vst.msk [vmem:[%s2737 + $0x18] sm:$0xff] %vm1934, %v3170
        %3187 = vst.msk [vmem:[%s2737 + $0x20] sm:$0xff] %vm1934, %v3171
        %3188 = vst.msk [vmem:[%s2737 + $0x28] sm:$0xff] %vm1934, %v3172
        %3189 = vst.msk [vmem:[%s2737 + $0x30] sm:$0xff] %vm1934, %v3173
        %3190 = vst.msk [vmem:[%s2737 + $0x38] sm:$0xff] %vm1934, %v3174
        %3191 = vst.msk [vmem:[%s2737 + $0x40] sm:$0xff] %vm1934, %v3175
        %3192 = vst.msk [vmem:[%s2737 + $0x48] sm:$0xff] %vm1934, %v3176
        %3193 = vst.msk [vmem:[%s2737 + $0x50] sm:$0xff] %vm1934, %v3177
        %3194 = vst.msk [vmem:[%s2737 + $0x58] sm:$0xff] %vm1934, %v3178
        %3195 = vst.msk [vmem:[%s2737 + $0x60] sm:$0xff] %vm1934, %v3179
        %3196 = vst.msk [vmem:[%s2737 + $0x68] sm:$0xff] %vm1934, %v3180
        %3197 = vst.msk [vmem:[%s2737 + $0x70] sm:$0xff] %vm1934, %v3181
        %3198 = vst.msk [vmem:[%s2737 + $0x78] sm:$0xff] %vm1934, %v3182
        %3199 = vset.pattern.permute.xlu0 3
        %3200 = vperm.xlu0 %3199, %v1523
        %v3201 = vpop.permute.xlu0 %3200
        %v3203 = vlaneseq
        %v3204 = vshrl.u32 %v3203, 7
        %v3205 = vsub.s32 3, %v3204
        %v3206 = vrot.slane %v1628, %v3205
        %v3207 = vsub.f32 %v3201, %v3206
        %v3208 = vsel %vm1446, %v3207, -1e+30
        %v3209 = vmul.f32 %v3208, 1.442695
        %v3210 = vpow.pop %v3209
        %3211 = vset.pattern.permute.xlu0 3
        %3212 = vperm.xlu0 %3211, %v1095
        %v3213 = vpop.permute.xlu0 %3212
        %3215 = vrot.lane.b32.xlu0 %v2734, 64
        %v3216 = vpop.permute.xlu0 %3215
        %v3218 = vmul.f32 %v3213, %v3216
        %s3219 = scalar_lea.vmem [#allocation3], 384
        %v3220 = vld [vmem:[%s3219] sm:$0xff]
        %v3221 = vld [vmem:[%s3219 + $0x8] sm:$0xff]
        %v3222 = vld [vmem:[%s3219 + $0x10] sm:$0xff]
        %v3223 = vld [vmem:[%s3219 + $0x18] sm:$0xff]
        %v3224 = vld [vmem:[%s3219 + $0x20] sm:$0xff]
        %v3225 = vld [vmem:[%s3219 + $0x28] sm:$0xff]
        %v3226 = vld [vmem:[%s3219 + $0x30] sm:$0xff]
        %v3227 = vld [vmem:[%s3219 + $0x38] sm:$0xff]
        %v3228 = vld [vmem:[%s3219 + $0x40] sm:$0xff]
        %v3229 = vld [vmem:[%s3219 + $0x48] sm:$0xff]
        %v3230 = vld [vmem:[%s3219 + $0x50] sm:$0xff]
        %v3231 = vld [vmem:[%s3219 + $0x58] sm:$0xff]
        %v3232 = vld [vmem:[%s3219 + $0x60] sm:$0xff]
        %v3233 = vld [vmem:[%s3219 + $0x68] sm:$0xff]
        %v3234 = vld [vmem:[%s3219 + $0x70] sm:$0xff]
        %v3235 = vld [vmem:[%s3219 + $0x78] sm:$0xff]
        %v3236 = vmul.f32 %v1719, %v3210
        %3237 = vmatprep.subr.mxu0 0.0
        %3238 = vmatpush1.msra.mxu0 %v3220
        %3239 = vmatprep.subr.mxu0 0.0
        %3240 = vmatpush1.msra.mxu0 %v3221
        %3241 = vmatprep.subr.mxu0 0.0
        %3242 = vmatpush1.msra.mxu0 %v3222
        %3243 = vmatprep.subr.mxu0 0.0
        %3244 = vmatpush1.msra.mxu0 %v3223
        %3245 = vmatprep.subr.mxu0 0.0
        %3246 = vmatpush1.msra.mxu0 %v3224
        %3247 = vmatprep.subr.mxu0 0.0
        %3248 = vmatpush1.msra.mxu0 %v3225
        %3249 = vmatprep.subr.mxu0 0.0
        %3250 = vmatpush1.msra.mxu0 %v3226
        %3251 = vmatprep.subr.mxu0 0.0
        %3252 = vmatpush1.msra.mxu0 %v3227
        %3253 = vmatprep.subr.mxu0 0.0
        %3254 = vmatpush1.msra.mxu0 %v3228
        %3255 = vmatprep.subr.mxu0 0.0
        %3256 = vmatpush1.msra.mxu0 %v3229
        %3257 = vmatprep.subr.mxu0 0.0
        %3258 = vmatpush1.msra.mxu0 %v3230
        %3259 = vmatprep.subr.mxu0 0.0
        %3260 = vmatpush1.msra.mxu0 %v3231
        %3261 = vmatprep.subr.mxu0 0.0
        %3262 = vmatpush1.msra.mxu0 %v3232
        %3263 = vmatprep.subr.mxu0 0.0
        %3264 = vmatpush1.msra.mxu0 %v3233
        %3265 = vmatprep.subr.mxu0 0.0
        %3266 = vmatpush1.msra.mxu0 %v3234
        %3267 = vmatprep.subr.mxu0 0.0
        %3268 = vmatpush1.msra.mxu0 %v3235
        %3269 = vmatprep.subr.mxu0 0.0
        %3270 = vmatpush1.msra.mxu0 0.0
        %3271 = vmatprep.subr.mxu0 0.0
        %3272 = vmatpush1.msra.mxu0 0.0
        %3273 = vmatprep.subr.mxu0 0.0
        %3274 = vmatpush1.msra.mxu0 0.0
        %3275 = vmatprep.subr.mxu0 0.0
        %3276 = vmatpush1.msra.mxu0 0.0
        %3277 = vmatprep.subr.mxu0 0.0
        %3278 = vmatpush1.msra.mxu0 0.0
        %3279 = vmatprep.subr.mxu0 0.0
        %3280 = vmatpush1.msra.mxu0 0.0
        %3281 = vmatprep.subr.mxu0 0.0
        %3282 = vmatpush1.msra.mxu0 0.0
        %3283 = vmatprep.subr.mxu0 0.0
        %3284 = vmatpush1.msra.mxu0 0.0
        %3285 = vmatprep.subr.mxu0 0.0
        %3286 = vmatpush1.msra.mxu0 0.0
        %3287 = vmatprep.subr.mxu0 0.0
        %3288 = vmatpush1.msra.mxu0 0.0
        %3289 = vmatprep.subr.mxu0 0.0
        %3290 = vmatpush1.msra.mxu0 0.0
        %3291 = vmatprep.subr.mxu0 0.0
        %3292 = vmatpush1.msra.mxu0 0.0
        %3293 = vmatprep.subr.mxu0 0.0
        %3294 = vmatpush1.msra.mxu0 0.0
        %3295 = vmatprep.subr.mxu0 0.0
        %3296 = vmatpush1.msra.mxu0 0.0
        %3297 = vmatprep.subr.mxu0 0.0
        %3298 = vmatpush1.msra.mxu0 0.0
        %3299 = vmatprep.subr.mxu0 0.0
        %3300 = vmatpush1.msra.mxu0 0.0
        %3301 = vmatprep.mubr.f32.mxu0 0.0
        %3302 = vmatmul.mubr.f32.gmra.mrb[0].mxu0 %v1644
        %v3303 = vpop.f32.mrb[0].mxu0
        %v3304 = vadd.f32 0.0, %v3303
        %v3305 = vpop.f32.mrb[0].mxu0
        %3306 = vdwg.mxu0
        %3307 = vset.pattern.permute.xlu0 3
        %3308 = vperm.xlu0 %3307, %v1766
        %v3309 = vpop.permute.xlu0 %3308
        %v3311 = vmul.f32 %v3309, %v3304
        %v3313 = vsel %vm1452, %v3236, 0
        %3315 = vmatprep.subr.mxu0 0.0
        %3316 = vmatpush1.msra.mxu0 %v3218
        %3317 = vmatprep.subr.mxu0 0.0
        %3318 = vmatpush1.msra.mxu0 0.0
        %3319 = vmatprep.subr.mxu0 0.0
        %3320 = vmatpush1.msra.mxu0 0.0
        %3321 = vmatprep.subr.mxu0 0.0
        %3322 = vmatpush1.msra.mxu0 0.0
        %3323 = vmatprep.subr.mxu0 0.0
        %3324 = vmatpush1.msra.mxu0 0.0
        %3325 = vmatprep.subr.mxu0 0.0
        %3326 = vmatpush1.msra.mxu0 0.0
        %3327 = vmatprep.subr.mxu0 0.0
        %3328 = vmatpush1.msra.mxu0 0.0
        %3329 = vmatprep.subr.mxu0 0.0
        %3330 = vmatpush1.msra.mxu0 0.0
        %3331 = vmatprep.subr.mxu0 0.0
        %3332 = vmatpush1.msra.mxu0 0.0
        %3333 = vmatprep.subr.mxu0 0.0
        %3334 = vmatpush1.msra.mxu0 0.0
        %3335 = vmatprep.subr.mxu0 0.0
        %3336 = vmatpush1.msra.mxu0 0.0
        %3337 = vmatprep.subr.mxu0 0.0
        %3338 = vmatpush1.msra.mxu0 0.0
        %3339 = vmatprep.subr.mxu0 0.0
        %3340 = vmatpush1.msra.mxu0 0.0
        %3341 = vmatprep.subr.mxu0 0.0
        %3342 = vmatpush1.msra.mxu0 0.0
        %3343 = vmatprep.subr.mxu0 0.0
        %3344 = vmatpush1.msra.mxu0 0.0
        %3345 = vmatprep.subr.mxu0 0.0
        %3346 = vmatpush1.msra.mxu0 0.0
        %3347 = vmatprep.subr.mxu0 0.0
        %3348 = vmatpush1.msra.mxu0 0.0
        %3349 = vmatprep.subr.mxu0 0.0
        %3350 = vmatpush1.msra.mxu0 0.0
        %3351 = vmatprep.subr.mxu0 0.0
        %3352 = vmatpush1.msra.mxu0 0.0
        %3353 = vmatprep.subr.mxu0 0.0
        %3354 = vmatpush1.msra.mxu0 0.0
        %3355 = vmatprep.subr.mxu0 0.0
        %3356 = vmatpush1.msra.mxu0 0.0
        %3357 = vmatprep.subr.mxu0 0.0
        %3358 = vmatpush1.msra.mxu0 0.0
        %3359 = vmatprep.subr.mxu0 0.0
        %3360 = vmatpush1.msra.mxu0 0.0
        %3361 = vmatprep.subr.mxu0 0.0
        %3362 = vmatpush1.msra.mxu0 0.0
        %3363 = vmatprep.subr.mxu0 0.0
        %3364 = vmatpush1.msra.mxu0 0.0
        %3365 = vmatprep.subr.mxu0 0.0
        %3366 = vmatpush1.msra.mxu0 0.0
        %3367 = vmatprep.subr.mxu0 0.0
        %3368 = vmatpush1.msra.mxu0 0.0
        %3369 = vmatprep.subr.mxu0 0.0
        %3370 = vmatpush1.msra.mxu0 0.0
        %3371 = vmatprep.subr.mxu0 0.0
        %3372 = vmatpush1.msra.mxu0 0.0
        %3373 = vmatprep.subr.mxu0 0.0
        %3374 = vmatpush1.msra.mxu0 0.0
        %3375 = vmatprep.subr.mxu0 0.0
        %3376 = vmatpush1.msra.mxu0 0.0
        %3377 = vmatprep.subr.mxu0 0.0
        %3378 = vmatpush1.msra.mxu0 0.0
        %3379 = vmatprep.mubr.f32.mxu0 0.0
        %3380 = vmatmul.mubr.f32.gmra.mrb[0].mxu0 %v3313
        %v3381 = vpop.f32.mrb[0].mxu0
        %v3382 = vadd.f32 %v3311, %v3381
        %v3383 = vpop.f32.mrb[0].mxu0
        %3384 = vdwg.mxu0
        %3385 = vset.pattern.permute.xlu0 3
        %3386 = vperm.xlu0 %3385, %v1920
        %v3387 = vpop.permute.xlu0 %3386
        %v3389 = vmul.f32 %v3387, %v1420
        %v3390 = vmul.f32 %v3387, %v1424
        %v3393 = vrot.slane %v3389, 5
        %v3394 = vrot.slane %v3390, 5
        %v3395 = vsel %vm1641, %v3393, %v3394
        %3396 = vrot.lane.b32.xlu0 %v3395, 64
        %v3397 = vpop.permute.xlu0 %3396
        %v3399 = vadd.f32 %v3382, %v3397
        %3401 = vrot.lane.b32.xlu0 %v3399, 64
        %v3402 = vpop.permute.xlu0 %3401
        %3404 = vst.msk [vmem:[#allocation4 + $0x8] sm:$0xff] %vm2430, %v3402
        %3405 = vset.pattern.permute.xlu0 3
        %3406 = vperm.xlu0 %3405, %v1938
        %v3407 = vpop.permute.xlu0 %3406
        %v3409 = vmul.f32 %v3407, %v1650
        %3410 = vset.pattern.permute.xlu0 3
        %3411 = vperm.xlu0 %3410, %v1946
        %v3412 = vpop.permute.xlu0 %3411
        %v3414 = vmul.f32 %v3412, %v3220
        %v3415 = vmul.f32 %v3412, %v3221
        %v3416 = vmul.f32 %v3412, %v3222
        %v3417 = vmul.f32 %v3412, %v3223
        %v3418 = vmul.f32 %v3412, %v3224
        %v3419 = vmul.f32 %v3412, %v3225
        %v3420 = vmul.f32 %v3412, %v3226
        %v3421 = vmul.f32 %v3412, %v3227
        %v3422 = vmul.f32 %v3412, %v3228
        %v3423 = vmul.f32 %v3412, %v3229
        %v3424 = vmul.f32 %v3412, %v3230
        %v3425 = vmul.f32 %v3412, %v3231
        %v3426 = vmul.f32 %v3412, %v3232
        %v3427 = vmul.f32 %v3412, %v3233
        %v3428 = vmul.f32 %v3412, %v3234
        %v3429 = vmul.f32 %v3412, %v3235
        %3430 = vxpose.xlu0.b32.start [1/16] %v3409, 128
        %3431 = vxpose.xlu0.b32.cont [2/16] 0.0, 128
        %3432 = vxpose.xlu0.b32.cont [3/16] 0.0, 128
        %3433 = vxpose.xlu0.b32.cont [4/16] 0.0, 128
        %3434 = vxpose.xlu0.b32.cont [5/16] 0.0, 128
        %3435 = vxpose.xlu0.b32.cont [6/16] 0.0, 128
        %3436 = vxpose.xlu0.b32.cont [7/16] 0.0, 128
        %3437 = vxpose.xlu0.b32.cont [8/16] 0.0, 128
        %3438 = vxpose.xlu0.b32.cont [9/16] 0.0, 128
        %3439 = vxpose.xlu0.b32.cont [10/16] 0.0, 128
        %3440 = vxpose.xlu0.b32.cont [11/16] 0.0, 128
        %3441 = vxpose.xlu0.b32.cont [12/16] 0.0, 128
        %3442 = vxpose.xlu0.b32.cont [13/16] 0.0, 128
        %3443 = vxpose.xlu0.b32.cont [14/16] 0.0, 128
        %3444 = vxpose.xlu0.b32.cont [15/16] 0.0, 128
        %3445 = vxpose.xlu0.b32.end [16/16] 0.0, 128
        %v3446 = vpop.trf.xlu0
        %v3447 = vpop.trf.xlu0
        %v3448 = vpop.trf.xlu0
        %v3449 = vpop.trf.xlu0
        %v3450 = vpop.trf.xlu0
        %v3451 = vpop.trf.xlu0
        %v3452 = vpop.trf.xlu0
        %v3453 = vpop.trf.xlu0
        %v3454 = vpop.trf.xlu0
        %v3455 = vpop.trf.xlu0
        %v3456 = vpop.trf.xlu0
        %v3457 = vpop.trf.xlu0
        %v3458 = vpop.trf.xlu0
        %v3459 = vpop.trf.xlu0
        %v3460 = vpop.trf.xlu0
        %v3461 = vpop.trf.xlu0
        %v3463 = vsel %vm1452, %v3446, 0
        %v3466 = vsel %vm1452, %v3447, 0
        %v3469 = vsel %vm1452, %v3448, 0
        %v3472 = vsel %vm1452, %v3449, 0
        %v3475 = vsel %vm1452, %v3450, 0
        %v3478 = vsel %vm1452, %v3451, 0
        %v3481 = vsel %vm1452, %v3452, 0
        %v3484 = vsel %vm1452, %v3453, 0
        %v3487 = vsel %vm1452, %v3454, 0
        %v3490 = vsel %vm1452, %v3455, 0
        %v3493 = vsel %vm1452, %v3456, 0
        %v3496 = vsel %vm1452, %v3457, 0
        %v3499 = vsel %vm1452, %v3458, 0
        %v3502 = vsel %vm1452, %v3459, 0
        %v3505 = vsel %vm1452, %v3460, 0
        %v3508 = vsel %vm1452, %v3461, 0
        %3510 = vmatprep.subr.mxu0 0.0
        %3511 = vmatpush1.msra.mxu0 %v3218
        %3512 = vmatprep.subr.mxu0 0.0
        %3513 = vmatpush1.msra.mxu0 0.0
        %3514 = vmatprep.subr.mxu0 0.0
        %3515 = vmatpush1.msra.mxu0 0.0
        %3516 = vmatprep.subr.mxu0 0.0
        %3517 = vmatpush1.msra.mxu0 0.0
        %3518 = vmatprep.subr.mxu0 0.0
        %3519 = vmatpush1.msra.mxu0 0.0
        %3520 = vmatprep.subr.mxu0 0.0
        %3521 = vmatpush1.msra.mxu0 0.0
        %3522 = vmatprep.subr.mxu0 0.0
        %3523 = vmatpush1.msra.mxu0 0.0
        %3524 = vmatprep.subr.mxu0 0.0
        %3525 = vmatpush1.msra.mxu0 0.0
        %3526 = vmatprep.subr.mxu0 0.0
        %3527 = vmatpush1.msra.mxu0 0.0
        %3528 = vmatprep.subr.mxu0 0.0
        %3529 = vmatpush1.msra.mxu0 0.0
        %3530 = vmatprep.subr.mxu0 0.0
        %3531 = vmatpush1.msra.mxu0 0.0
        %3532 = vmatprep.subr.mxu0 0.0
        %3533 = vmatpush1.msra.mxu0 0.0
        %3534 = vmatprep.subr.mxu0 0.0
        %3535 = vmatpush1.msra.mxu0 0.0
        %3536 = vmatprep.subr.mxu0 0.0
        %3537 = vmatpush1.msra.mxu0 0.0
        %3538 = vmatprep.subr.mxu0 0.0
        %3539 = vmatpush1.msra.mxu0 0.0
        %3540 = vmatprep.subr.mxu0 0.0
        %3541 = vmatpush1.msra.mxu0 0.0
        %3542 = vmatprep.subr.mxu0 0.0
        %3543 = vmatpush1.msra.mxu0 0.0
        %3544 = vmatprep.subr.mxu0 0.0
        %3545 = vmatpush1.msra.mxu0 0.0
        %3546 = vmatprep.subr.mxu0 0.0
        %3547 = vmatpush1.msra.mxu0 0.0
        %3548 = vmatprep.subr.mxu0 0.0
        %3549 = vmatpush1.msra.mxu0 0.0
        %3550 = vmatprep.subr.mxu0 0.0
        %3551 = vmatpush1.msra.mxu0 0.0
        %3552 = vmatprep.subr.mxu0 0.0
        %3553 = vmatpush1.msra.mxu0 0.0
        %3554 = vmatprep.subr.mxu0 0.0
        %3555 = vmatpush1.msra.mxu0 0.0
        %3556 = vmatprep.subr.mxu0 0.0
        %3557 = vmatpush1.msra.mxu0 0.0
        %3558 = vmatprep.subr.mxu0 0.0
        %3559 = vmatpush1.msra.mxu0 0.0
        %3560 = vmatprep.subr.mxu0 0.0
        %3561 = vmatpush1.msra.mxu0 0.0
        %3562 = vmatprep.subr.mxu0 0.0
        %3563 = vmatpush1.msra.mxu0 0.0
        %3564 = vmatprep.subr.mxu0 0.0
        %3565 = vmatpush1.msra.mxu0 0.0
        %3566 = vmatprep.subr.mxu0 0.0
        %3567 = vmatpush1.msra.mxu0 0.0
        %3568 = vmatprep.subr.mxu0 0.0
        %3569 = vmatpush1.msra.mxu0 0.0
        %3570 = vmatprep.subr.mxu0 0.0
        %3571 = vmatpush1.msra.mxu0 0.0
        %3572 = vmatprep.subr.mxu0 0.0
        %3573 = vmatpush1.msra.mxu0 0.0
        %3574 = vmatprep.mubr.f32.mxu0 0.0
        %3575 = vmatmul.mubr.f32.gmra.mrb[0].mxu0 %v3463
        %v3576 = vpop.f32.mrb[0].mxu0
        %v3577 = vadd.f32 0.0, %v3576
        %v3578 = vpop.f32.mrb[0].mxu0
        %3579 = vmatprep.mubr.f32.mxu0 0.0
        %3580 = vmatmul.mubr.f32.gmra.mrb[0].mxu0 %v3466
        %v3581 = vpop.f32.mrb[0].mxu0
        %v3582 = vadd.f32 0.0, %v3581
        %v3583 = vpop.f32.mrb[0].mxu0
        %3584 = vmatprep.mubr.f32.mxu0 0.0
        %3585 = vmatmul.mubr.f32.gmra.mrb[0].mxu0 %v3469
        %v3586 = vpop.f32.mrb[0].mxu0
        %v3587 = vadd.f32 0.0, %v3586
        %v3588 = vpop.f32.mrb[0].mxu0
        %3589 = vmatprep.mubr.f32.mxu0 0.0
        %3590 = vmatmul.mubr.f32.gmra.mrb[0].mxu0 %v3472
        %v3591 = vpop.f32.mrb[0].mxu0
        %v3592 = vadd.f32 0.0, %v3591
        %v3593 = vpop.f32.mrb[0].mxu0
        %3594 = vmatprep.mubr.f32.mxu0 0.0
        %3595 = vmatmul.mubr.f32.gmra.mrb[0].mxu0 %v3475
        %v3596 = vpop.f32.mrb[0].mxu0
        %v3597 = vadd.f32 0.0, %v3596
        %v3598 = vpop.f32.mrb[0].mxu0
        %3599 = vmatprep.mubr.f32.mxu0 0.0
        %3600 = vmatmul.mubr.f32.gmra.mrb[0].mxu0 %v3478
        %v3601 = vpop.f32.mrb[0].mxu0
        %v3602 = vadd.f32 0.0, %v3601
        %v3603 = vpop.f32.mrb[0].mxu0
        %3604 = vmatprep.mubr.f32.mxu0 0.0
        %3605 = vmatmul.mubr.f32.gmra.mrb[0].mxu0 %v3481
        %v3606 = vpop.f32.mrb[0].mxu0
        %v3607 = vadd.f32 0.0, %v3606
        %v3608 = vpop.f32.mrb[0].mxu0
        %3609 = vmatprep.mubr.f32.mxu0 0.0
        %3610 = vmatmul.mubr.f32.gmra.mrb[0].mxu0 %v3484
        %v3611 = vpop.f32.mrb[0].mxu0
        %v3612 = vadd.f32 0.0, %v3611
        %v3613 = vpop.f32.mrb[0].mxu0
        %3614 = vmatprep.mubr.f32.mxu0 0.0
        %3615 = vmatmul.mubr.f32.gmra.mrb[0].mxu0 %v3487
        %v3616 = vpop.f32.mrb[0].mxu0
        %v3617 = vadd.f32 0.0, %v3616
        %v3618 = vpop.f32.mrb[0].mxu0
        %3619 = vmatprep.mubr.f32.mxu0 0.0
        %3620 = vmatmul.mubr.f32.gmra.mrb[0].mxu0 %v3490
        %v3621 = vpop.f32.mrb[0].mxu0
        %v3622 = vadd.f32 0.0, %v3621
        %v3623 = vpop.f32.mrb[0].mxu0
        %3624 = vmatprep.mubr.f32.mxu0 0.0
        %3625 = vmatmul.mubr.f32.gmra.mrb[0].mxu0 %v3493
        %v3626 = vpop.f32.mrb[0].mxu0
        %v3627 = vadd.f32 0.0, %v3626
        %v3628 = vpop.f32.mrb[0].mxu0
        %3629 = vmatprep.mubr.f32.mxu0 0.0
        %3630 = vmatmul.mubr.f32.gmra.mrb[0].mxu0 %v3496
        %v3631 = vpop.f32.mrb[0].mxu0
        %v3632 = vadd.f32 0.0, %v3631
        %v3633 = vpop.f32.mrb[0].mxu0
        %3634 = vmatprep.mubr.f32.mxu0 0.0
        %3635 = vmatmul.mubr.f32.gmra.mrb[0].mxu0 %v3499
        %v3636 = vpop.f32.mrb[0].mxu0
        %v3637 = vadd.f32 0.0, %v3636
        %v3638 = vpop.f32.mrb[0].mxu0
        %3639 = vmatprep.mubr.f32.mxu0 0.0
        %3640 = vmatmul.mubr.f32.gmra.mrb[0].mxu0 %v3502
        %v3641 = vpop.f32.mrb[0].mxu0
        %v3642 = vadd.f32 0.0, %v3641
        %v3643 = vpop.f32.mrb[0].mxu0
        %3644 = vmatprep.mubr.f32.mxu0 0.0
        %3645 = vmatmul.mubr.f32.gmra.mrb[0].mxu0 %v3505
        %v3646 = vpop.f32.mrb[0].mxu0
        %v3647 = vadd.f32 0.0, %v3646
        %v3648 = vpop.f32.mrb[0].mxu0
        %3649 = vmatprep.mubr.f32.mxu0 0.0
        %3650 = vmatmul.mubr.f32.gmra.mrb[0].mxu0 %v3508
        %v3651 = vpop.f32.mrb[0].mxu0
        %v3652 = vadd.f32 0.0, %v3651
        %v3653 = vpop.f32.mrb[0].mxu0
        %3654 = vdwg.mxu0
        %v3655 = vadd.f32 %v3414, %v3577
        %v3656 = vadd.f32 %v3415, %v3582
        %v3657 = vadd.f32 %v3416, %v3587
        %v3658 = vadd.f32 %v3417, %v3592
        %v3659 = vadd.f32 %v3418, %v3597
        %v3660 = vadd.f32 %v3419, %v3602
        %v3661 = vadd.f32 %v3420, %v3607
        %v3662 = vadd.f32 %v3421, %v3612
        %v3663 = vadd.f32 %v3422, %v3617
        %v3664 = vadd.f32 %v3423, %v3622
        %v3665 = vadd.f32 %v3424, %v3627
        %v3666 = vadd.f32 %v3425, %v3632
        %v3667 = vadd.f32 %v3426, %v3637
        %v3668 = vadd.f32 %v3427, %v3642
        %v3669 = vadd.f32 %v3428, %v3647
        %v3670 = vadd.f32 %v3429, %v3652
        %3671 = vst.msk [vmem:[%s3219] sm:$0xff] %vm1934, %v3655
        %3672 = vst.msk [vmem:[%s3219 + $0x8] sm:$0xff] %vm1934, %v3656
        %3673 = vst.msk [vmem:[%s3219 + $0x10] sm:$0xff] %vm1934, %v3657
        %3674 = vst.msk [vmem:[%s3219 + $0x18] sm:$0xff] %vm1934, %v3658
        %3675 = vst.msk [vmem:[%s3219 + $0x20] sm:$0xff] %vm1934, %v3659
        %3676 = vst.msk [vmem:[%s3219 + $0x28] sm:$0xff] %vm1934, %v3660
        %3677 = vst.msk [vmem:[%s3219 + $0x30] sm:$0xff] %vm1934, %v3661
        %3678 = vst.msk [vmem:[%s3219 + $0x38] sm:$0xff] %vm1934, %v3662
        %3679 = vst.msk [vmem:[%s3219 + $0x40] sm:$0xff] %vm1934, %v3663
        %3680 = vst.msk [vmem:[%s3219 + $0x48] sm:$0xff] %vm1934, %v3664
        %3681 = vst.msk [vmem:[%s3219 + $0x50] sm:$0xff] %vm1934, %v3665
        %3682 = vst.msk [vmem:[%s3219 + $0x58] sm:$0xff] %vm1934, %v3666
        %3683 = vst.msk [vmem:[%s3219 + $0x60] sm:$0xff] %vm1934, %v3667
        %3684 = vst.msk [vmem:[%s3219 + $0x68] sm:$0xff] %vm1934, %v3668
        %3685 = vst.msk [vmem:[%s3219 + $0x70] sm:$0xff] %vm1934, %v3669
        %3686 = vst.msk [vmem:[%s3219 + $0x78] sm:$0xff] %vm1934, %v3670
        %v3687 = vld [vmem:[#allocation4] sm:$0xff]
        %v3688 = vld [vmem:[#allocation4 + $0x8] sm:$0xff]
        %v3689 = vxor.u32 %v901, 2147483648
        %v3690 = vxor.u32 %v903, 2147483648
        %v3691 = vmul.f32 %v3689, 1.442695
        %v3692 = vpow.pop %v3691
        %v3693 = vmul.f32 %v3690, 1.442695
        %v3694 = vpow.pop %v3693
        %v3695 = vadd.f32 %v3692, 1.0
        %v3696 = vadd.f32 %v3694, 1.0
        %v3697 = vrcp.pop %v3695
        %v3698 = vmul.f32 1.0, %v3697
        %v3699 = vrcp.pop %v3696
        %v3700 = vmul.f32 1.0, %v3699
        %v3701 = vmul.f32 %v901, %v3698
        %v3702 = vmul.f32 %v903, %v3700
        %v3703 = vmul.f32 %v3687, %v3701
        %v3704 = vmul.f32 %v3688, %v3702
        %v3705 = vmul.f32 %v3703, %v3703
        %v3706 = vmul.f32 %v3704, %v3704
        %v3707 = vadd.f32 %v3705, %v3706
        %3708 = vadd.xlane.f32.xlu0 %v3707
        %v3709 = vpop.xlane.xlu0 %3708
        %v3710 = vrcp.pop 256.0
        %v3711 = vmul.f32 %v3709, %v3710
        %v3712 = vadd.f32 %v3711, 1e-05
        %v3713 = vrsqrt.pop %v3712
        %v3714 = vmul.f32 %v3703, %v3713
        %v3715 = vmul.f32 %v3704, %v3713
        %v3716 = vld [vmem:[%s8] sm:$0x3]
        %v3718 = vlaneseq
        %v3719 = vshrl.u32 %v3718, 7
        %v3720 = vsub.s32 0, %v3719
        %v3721 = vrot.slane %v3716, %v3720
        %v3722 = vlaneseq
        %v3723 = vshrl.u32 %v3722, 7
        %v3724 = vsub.s32 1, %v3723
        %v3725 = vrot.slane %v3716, %v3724
        %v3728 = vmul.f32 %v3714, %v3721
        %v3729 = vmul.f32 %v3715, %v3725
        %v3730 = vpack.c.bf16 %v3728, %v3728
        %v3731 = vpack.c.bf16 %v3729, %v3729
        %v3732 = vld [vmem:[%s9] sm:$0xf]
        %v3733 = vld [vmem:[%s9 + $0x4] sm:$0xf]
        %v3734 = vld [vmem:[%s9 + $0x8] sm:$0xf]
        %v3735 = vld [vmem:[%s9 + $0xc] sm:$0xf]
        %v3736 = vld [vmem:[%s9 + $0x10] sm:$0xf]
        %v3737 = vld [vmem:[%s9 + $0x14] sm:$0xf]
        %v3738 = vld [vmem:[%s9 + $0x18] sm:$0xf]
        %v3739 = vld [vmem:[%s9 + $0x1c] sm:$0xf]
        %v3740 = vld [vmem:[%s9 + $0x20] sm:$0xf]
        %v3741 = vld [vmem:[%s9 + $0x24] sm:$0xf]
        %v3742 = vld [vmem:[%s9 + $0x28] sm:$0xf]
        %v3743 = vld [vmem:[%s9 + $0x2c] sm:$0xf]
        %v3744 = vld [vmem:[%s9 + $0x30] sm:$0xf]
        %v3745 = vld [vmem:[%s9 + $0x34] sm:$0xf]
        %v3746 = vld [vmem:[%s9 + $0x38] sm:$0xf]
        %v3747 = vld [vmem:[%s9 + $0x3c] sm:$0xf]
        %v3748 = vld [vmem:[%s9 + $0x40] sm:$0xf]
        %v3749 = vld [vmem:[%s9 + $0x44] sm:$0xf]
        %v3750 = vld [vmem:[%s9 + $0x48] sm:$0xf]
        %v3751 = vld [vmem:[%s9 + $0x4c] sm:$0xf]
        %v3752 = vld [vmem:[%s9 + $0x50] sm:$0xf]
        %v3753 = vld [vmem:[%s9 + $0x54] sm:$0xf]
        %v3754 = vld [vmem:[%s9 + $0x58] sm:$0xf]
        %v3755 = vld [vmem:[%s9 + $0x5c] sm:$0xf]
        %v3756 = vld [vmem:[%s9 + $0x60] sm:$0xf]
        %v3757 = vld [vmem:[%s9 + $0x64] sm:$0xf]
        %v3758 = vld [vmem:[%s9 + $0x68] sm:$0xf]
        %v3759 = vld [vmem:[%s9 + $0x6c] sm:$0xf]
        %v3760 = vld [vmem:[%s9 + $0x70] sm:$0xf]
        %v3761 = vld [vmem:[%s9 + $0x74] sm:$0xf]
        %v3762 = vld [vmem:[%s9 + $0x78] sm:$0xf]
        %v3763 = vld [vmem:[%s9 + $0x7c] sm:$0xf]
        %v3796 = vunpack.c.l.b16 %v3732
        %v3797 = vunpack.c.l.b16 %v3733
        %v3798 = vunpack.c.l.b16 %v3734
        %v3799 = vunpack.c.l.b16 %v3735
        %v3800 = vunpack.c.l.b16 %v3736
        %v3801 = vunpack.c.l.b16 %v3737
        %v3802 = vunpack.c.l.b16 %v3738
        %v3803 = vunpack.c.l.b16 %v3739
        %v3804 = vunpack.c.l.b16 %v3740
        %v3805 = vunpack.c.l.b16 %v3741
        %v3806 = vunpack.c.l.b16 %v3742
        %v3807 = vunpack.c.l.b16 %v3743
        %v3808 = vunpack.c.l.b16 %v3744
        %v3809 = vunpack.c.l.b16 %v3745
        %v3810 = vunpack.c.l.b16 %v3746
        %v3811 = vunpack.c.l.b16 %v3747
        %v3812 = vunpack.c.l.b16 %v3748
        %v3813 = vunpack.c.l.b16 %v3749
        %v3814 = vunpack.c.l.b16 %v3750
        %v3815 = vunpack.c.l.b16 %v3751
        %v3816 = vunpack.c.l.b16 %v3752
        %v3817 = vunpack.c.l.b16 %v3753
        %v3818 = vunpack.c.l.b16 %v3754
        %v3819 = vunpack.c.l.b16 %v3755
        %v3820 = vunpack.c.l.b16 %v3756
        %v3821 = vunpack.c.l.b16 %v3757
        %v3822 = vunpack.c.l.b16 %v3758
        %v3823 = vunpack.c.l.b16 %v3759
        %v3824 = vunpack.c.l.b16 %v3760
        %v3825 = vunpack.c.l.b16 %v3761
        %v3826 = vunpack.c.l.b16 %v3762
        %v3827 = vunpack.c.l.b16 %v3763
        %v3828 = vpack.c.b16 %v3797, %v3796
        %v3829 = vpack.c.b16 %v3799, %v3798
        %v3830 = vpack.c.b16 %v3801, %v3800
        %v3831 = vpack.c.b16 %v3803, %v3802
        %v3832 = vpack.c.b16 %v3805, %v3804
        %v3833 = vpack.c.b16 %v3807, %v3806
        %v3834 = vpack.c.b16 %v3809, %v3808
        %v3835 = vpack.c.b16 %v3811, %v3810
        %v3836 = vpack.c.b16 %v3813, %v3812
        %v3837 = vpack.c.b16 %v3815, %v3814
        %v3838 = vpack.c.b16 %v3817, %v3816
        %v3839 = vpack.c.b16 %v3819, %v3818
        %v3840 = vpack.c.b16 %v3821, %v3820
        %v3841 = vpack.c.b16 %v3823, %v3822
        %v3842 = vpack.c.b16 %v3825, %v3824
        %v3843 = vpack.c.b16 %v3827, %v3826
        %3860 = vmatprep.subr.bf16.mxu0 0
        %3861 = vmatpush1.bf16.msra.mxu0 %v3828
        %3862 = vmatprep.subr.bf16.mxu0 0
        %3863 = vmatpush1.bf16.msra.mxu0 %v3829
        %3864 = vmatprep.subr.bf16.mxu0 0
        %3865 = vmatpush1.bf16.msra.mxu0 %v3830
        %3866 = vmatprep.subr.bf16.mxu0 0
        %3867 = vmatpush1.bf16.msra.mxu0 %v3831
        %3868 = vmatprep.subr.bf16.mxu0 0
        %3869 = vmatpush1.bf16.msra.mxu0 %v3832
        %3870 = vmatprep.subr.bf16.mxu0 0
        %3871 = vmatpush1.bf16.msra.mxu0 %v3833
        %3872 = vmatprep.subr.bf16.mxu0 0
        %3873 = vmatpush1.bf16.msra.mxu0 %v3834
        %3874 = vmatprep.subr.bf16.mxu0 0
        %3875 = vmatpush1.bf16.msra.mxu0 %v3835
        %3876 = vmatprep.subr.bf16.mxu0 0
        %3877 = vmatpush1.bf16.msra.mxu0 %v3836
        %3878 = vmatprep.subr.bf16.mxu0 0
        %3879 = vmatpush1.bf16.msra.mxu0 %v3837
        %3880 = vmatprep.subr.bf16.mxu0 0
        %3881 = vmatpush1.bf16.msra.mxu0 %v3838
        %3882 = vmatprep.subr.bf16.mxu0 0
        %3883 = vmatpush1.bf16.msra.mxu0 %v3839
        %3884 = vmatprep.subr.bf16.mxu0 0
        %3885 = vmatpush1.bf16.msra.mxu0 %v3840
        %3886 = vmatprep.subr.bf16.mxu0 0
        %3887 = vmatpush1.bf16.msra.mxu0 %v3841
        %3888 = vmatprep.subr.bf16.mxu0 0
        %3889 = vmatpush1.bf16.msra.mxu0 %v3842
        %3890 = vmatprep.subr.bf16.mxu0 0
        %3891 = vmatpush1.bf16.msra.mxu0 %v3843
        %3892 = vmatprep.mubr.bf16.mxu0 %v3731
        %3893 = vmatmul.mubr.bf16.gmra.mrb[0].mxu0 %v3730
        %v3894 = vpop.f32.mrb[0].mxu0
        %v3895 = vadd.f32 %v503, %v3894
        %v3896 = vpop.f32.mrb[0].mxu0
        %v3897 = vpop.f32.mrb[0].mxu0
        %v3898 = vpop.f32.mrb[0].mxu0
        %3899 = vdwg.mxu0
        %3900 = vadd.xlane.f32.xlu0 %v3895
        %v3901 = vpop.xlane.xlu0 %3900
        %v3902 = vrcp.pop 128.0
        %v3903 = vmul.f32 %v3901, %v3902
        %v3904 = vsub.f32 %v3895, %v3903
        %v3905 = vmul.f32 %v3904, %v3904
        %3906 = vadd.xlane.f32.xlu0 %v3905
        %v3907 = vpop.xlane.xlu0 %3906
        %v3908 = vmul.f32 %v3907, %v3902
        %v3909 = vadd.f32 %v3908, 1e-05
        %v3910 = vrsqrt.pop %v3909
        %v3911 = vmul.f32 %v3904, %v3910
        %v3912 = vld [vmem:[%s10] sm:$0x1]
        %v3914 = vlaneseq
        %v3915 = vshrl.u32 %v3914, 7
        %v3916 = vsub.s32 0, %v3915
        %v3917 = vrot.slane %v3912, %v3916
        %v3919 = vmul.f32 %v3911, %v3917
        %v3920 = vld [vmem:[%s11] sm:$0x1]
        %v3922 = vlaneseq
        %v3923 = vshrl.u32 %v3922, 7
        %v3924 = vsub.s32 0, %v3923
        %v3925 = vrot.slane %v3920, %v3924
        %v3927 = vadd.f32 %v3919, %v3925
        %3928 = vst [vmem:[%s493] sm:$0xff] %v3927
        %s3929 = sand.u32 %s310, 1
        %s3930 = scalar_lea.sflag [#allocation7], %s3929
        %s3931 = sand.u32 %s310, 1
        %s3932 = smul.addr %s3931, 8
        %s3933 = scalar_lea.vmem [#allocation14], %s3932
        // Predicated region
        $region93: #{tpu_custom_call.1} parent=67 // pred_check
          %p3934 = pneg %p320
        $region94: #{tpu_custom_call.1} parent=67 // pred_check_branch
          %3936 = sbr.rel (%p3934) target = $region96
        $region95: #{tpu_custom_call.1} parent=67 // pred_region
          %s3938 = ssub.s32 128, 128
          %3939 = vsyncadd %s3930, %s3938
          %s3940 = smul.addr %s33, 2
          %s3941 = sadd.s32 %s34, %s3940
          %s3942 = smul.addr %s3941, 128
          %s3943 = scalar_lea.hbm %s12, %s3942
          %s3945 = sshll.u32 %s3933, 4
          %s3946 = int_to_ptr.vmem [resolvable:$true] %s3945
          %3948 = dma.vmem_to_hbm [thread:$0]  %s3946, 128, %s3943, %s3930
        $region96: #{tpu_custom_call.1} parent=67 // pred_fallthru
          _
      $region68: #{tpu_custom_call.1} parent=5 // pred_fallthru
        _
      %p3949 = scmp.le.s32.totalorder 2, %s24
      // Predicated region
      $region97: #{tpu_custom_call.1} parent=5 // pred_check
        %p3950 = pneg %p3949
      $region98: #{tpu_custom_call.1} parent=5 // pred_check_branch
        %3952 = sbr.rel (%p3950) target = $region100
      $region99: #{tpu_custom_call.1} parent=5 // pred_region
        %s3953 = ssub.s32 %s24, 2
        // Predicated region
        $region101: #{tpu_custom_call.1} parent=99 // pred_check
          %p3954 = pneg %p326
        $region102: #{tpu_custom_call.1} parent=99 // pred_check_branch
          %3956 = sbr.rel (%p3954) target = $region104
        $region103: #{tpu_custom_call.1} parent=99 // pred_region
          %s3957 = sand.u32 %s311, 1
          %s3958 = scalar_lea.sflag [#allocation7], %s3957
          %s3959 = sand.u32 %s311, 1
          %s3960 = smul.addr %s3959, 8
          %s3961 = scalar_lea.vmem [#allocation14], %s3960
          %3962 = dma.done %s3958, 128
        $region104: #{tpu_custom_call.1} parent=99 // pred_fallthru
          _
      $region100: #{tpu_custom_call.1} parent=5 // pred_fallthru
        _
    $region6: #{tpu_custom_call.1} parent=1 // loop_footer
      %s28 = sadd.s32 1, %s24
    $region7: #{tpu_custom_call.1} parent=1 // loop_footer_branch
      %23 = sbr.rel target = $region3
    $region8: #{tpu_custom_call.1} parent=1 // loop_exit
      _
    %3963 = vsyncpa [#allocation6], 1
    %s3964 = scalar_lea.sflag [#allocation6], 1
    %3965 = vsyncpa %s3964, 1
    %3966 = vsyncpa [#allocation9], 1
    %3967 = vsyncpa [#allocation12], 1
    %3968 = vsyncpa [#allocation7], 1
    %s3969 = scalar_lea.sflag [#allocation7], 1
    %3970 = vsyncpa %s3969, 1

</llo_original>
